<compile_context>
chip_gen: v6e
topology: v6e:2x2x1
jax: 0.10.0
libtpu: 0.0.40
codegen_flags: <defaults>
</compile_context>

<pallas_src>
import functools

import jax
import jax.numpy as jnp
from jax import lax
from jax.experimental import pallas as pl
from jax.experimental.pallas import tpu as pltpu

LANE = 128          # TPU lane width: channel dims are padded to a multiple of this.
BF16_SUBLANES = 16  # bf16 sublane packing: keep flattened-row strides a multiple of this.


def _round_up(x, m):
  return (x + m - 1) // m * m


def _fused_double_conv_kernel(
    xim_ref,   # (1, H_pad+2, W_pad, 9*Cin) bf16: stage-1 im2col of the whole image;
               #   row p <-> image row p-1, col m <-> image col m-1 (zeros outside).
               #   Block index is constant over t, so it stays resident per image.
    w1_ref,    # (9*Cin, C1)  bf16  stage-1 weights (out channels zero-padded to C1)
    s1_ref,    # (1, C1)      f32   folded BN scale, stage 1
    t1_ref,    # (1, C1)      f32   folded BN shift (incl. conv bias), stage 1
    w2_ref,    # (9, C1, C1)  bf16  stage-2 weights, one (C1, C1) matrix per 3x3 tap
    s2_ref,    # (1, C1)      f32
    t2_ref,    # (1, C1)      f32
    out_ref,   # (1, TH, W, C1) bf16  lane-dense output tile
    y1p_ref,   # ((TH+2)*W_pad + 16, C1) bf16  flattened, zero-padded stage-1 tile (VMEM)
    *, H, W, TH, W_pad, C1):
  t = pl.program_id(1)
  E = TH + 2                 # stage-1 rows: TH output rows + 1-row halo on each side
  ME = E * W_pad             # flattened stage-1 rows
  M2 = TH * W_pad            # flattened stage-2 rows
  K1 = w1_ref.shape[0]

  # ---------------- stage 1: one MXU matmul over the (TH+2)-row slab -------------------
  lhs1 = xim_ref[0, pl.ds(t * TH, E), :, :].reshape(ME, K1)          # contiguous view
  acc1 = jnp.dot(lhs1, w1_ref[...], preferred_element_type=jnp.float32)   # (ME, C1)

  # Folded-BN + ReLU epilogue (f32), then zero every position that is outside the real
  # image or inside the column padding: stage-2's padding=1 must see exact zeros there.
  y1 = jnp.maximum(acc1 * s1_ref[...] + t1_ref[...], 0.0).reshape(E, W_pad, C1)
  prow = lax.broadcasted_iota(jnp.int32, (E, W_pad, 1), 0) + t * TH  # padded row index
  pcol = lax.broadcasted_iota(jnp.int32, (E, W_pad, 1), 1)           # padded col index
  valid = (prow >= 1) & (prow <= H) & (pcol >= 1) & (pcol <= W)
  y1 = jnp.where(valid, y1, 0.0).astype(jnp.bfloat16)

  # Single aligned store of the whole slab; the stage-1 result never touches HBM.
  y1p_ref[pl.ds(0, ME), :] = y1.reshape(ME, C1)
  # Tail rows are touched by the dy=2, dx>0 shifted views (they only feed discarded
  # output columns) -- keep them finite/zero.
  y1p_ref[pl.ds(ME, 16), :] = jnp.zeros((16, C1), jnp.bfloat16)

  # ---------------- stage 2: 9 accumulated matmuls on row-shifted views ----------------
  #   out(r, c) = sum_{dy,dx} y1p_flat[(r+dy)*W_pad + (c+dx)] @ W2[dy*3+dx]
  acc2 = None
  for k in range(9):
    dy, dx = divmod(k, 3)
    lhs = y1p_ref[pl.ds(dy * W_pad + dx, M2), :]                     # shifted view load
    part = jnp.dot(lhs, w2_ref[k], preferred_element_type=jnp.float32)
    acc2 = part if acc2 is None else acc2 + part

  y2 = jnp.maximum(acc2 * s2_ref[...] + t2_ref[...], 0.0).astype(jnp.bfloat16)
  out_ref[0] = y2.reshape(TH, W_pad, C1)[:, :W, :]


def _vmem_limit_bytes(h_pad, w, w_pad, k1, c1, th):
  e = th + 2
  est = (2 * (h_pad + 2) * w_pad * k1 * 2        # resident im2col image (x2 pipeline bufs)
         + 2 * (k1 * c1 + 9 * c1 * c1) * 2       # weights (x2)
         + 2 * 4 * c1 * 4                        # scale/shift vectors (x2)
         + (e * w_pad + 16) * c1 * 2             # y1p scratch
         + 2 * th * w * c1 * 2                   # output tile (x2)
         + 3 * e * w_pad * c1 * 4)               # in-body f32/bf16 temporaries
  # Cap below v7x's 64 MiB physical VMEM (headroom for Mosaic internals); floor at the
  # 32 MiB default so small problems are unaffected.
  return int(min(56 * 1024 * 1024, max(32 * 1024 * 1024, est * 3 // 2)))


def double_conv_fused(xim, w1, s1, t1, w2, s2, t2, *, H, W, TH, C1):
  """xim: (B, H_pad+2, W_pad, 9*Cin) bf16. Returns (B, H_pad, W, C1) bf16 NHWC."""
  B, Hp2, W_pad, K1 = xim.shape
  H_pad = Hp2 - 2
  nT = H_pad // TH
  E = TH + 2

  kernel = functools.partial(_fused_double_conv_kernel,
                             H=H, W=W, TH=TH, W_pad=W_pad, C1=C1)
  return pl.pallas_call(
      kernel,
      out_shape=jax.ShapeDtypeStruct((B, H_pad, W, C1), jnp.bfloat16),
      grid_spec=pltpu.PrefetchScalarGridSpec(
          num_scalar_prefetch=0,
          grid=(B, nT),
          in_specs=[
              # Whole im2col image of batch element b; block index constant over t so it
              # stays resident in VMEM while that image's row tiles are processed.
              # TODO(synk): for very large resolutions switch this to a pl.ANY ref +
              # manual halo DMA so input VMEM is O(TH*W*Cin) instead of O(H*W*9*Cin).
              pl.BlockSpec((1, Hp2, W_pad, K1), lambda b, t: (b, 0, 0, 0)),
              pl.BlockSpec((K1, C1), lambda b, t: (0, 0)),
              pl.BlockSpec((1, C1), lambda b, t: (0, 0)),
              pl.BlockSpec((1, C1), lambda b, t: (0, 0)),
              pl.BlockSpec((9, C1, C1), lambda b, t: (0, 0, 0)),
              pl.BlockSpec((1, C1), lambda b, t: (0, 0)),
              pl.BlockSpec((1, C1), lambda b, t: (0, 0)),
          ],
          out_specs=pl.BlockSpec((1, TH, W, C1), lambda b, t: (b, t, 0, 0)),
          scratch_shapes=[pltpu.VMEM((E * W_pad + 16, C1), jnp.bfloat16)],
      ),
      compiler_params=pltpu.CompilerParams(
          # Batch axis sharded across v7x's two TensorCores; row-tile axis kept
          # sequential per core so the resident image is fetched once per image per core.
          dimension_semantics=("parallel", "arbitrary"),
          vmem_limit_bytes=_vmem_limit_bytes(H_pad, W, W_pad, K1, C1, TH)),
  )(xim, w1, s1, t1, w2, s2, t2)


# ------------------------------ host-side preparation --------------------------------

def fold_bn(bias, gamma, beta, running_mean, running_var, eps=1e-5):
  """Fold conv bias + eval-mode BatchNorm into per-channel scale/shift (f32)."""
  scale = gamma / jnp.sqrt(running_var + eps)
  shift = beta + (bias - running_mean) * scale
  return scale, shift


def _pad_lanes(v, c1):
  # Zero-padding of BOTH scale and shift keeps the padded output lanes exactly zero
  # (relu(0*acc + 0) == 0); do not change one without the other.
  return jnp.pad(v, (0, c1 - v.shape[0])).reshape(1, c1).astype(jnp.float32)


def _prep_weights(w1, w2, c1):
  out_ch, in_ch = w1.shape[0], w1.shape[1]
  # stage 1: torch (Cout, Cin, 3, 3) -> (9*Cin, C1); row = (ky*3 + kx)*Cin + ci
  w1m = jnp.transpose(w1, (2, 3, 1, 0)).reshape(9 * in_ch, out_ch)
  w1m = jnp.pad(w1m, ((0, 0), (0, c1 - out_ch))).astype(jnp.bfloat16)
  # stage 2: torch (Cout, Cmid, 3, 3) -> (9, C1, C1); tap index k = ky*3 + kx
  mid_ch = w2.shape[1]
  w2m = jnp.transpose(w2, (2, 3, 1, 0))
  w2m = jnp.pad(w2m, ((0, 0), (0, 0), (0, c1 - mid_ch), (0, c1 - out_ch)))
  return w1m, w2m.reshape(9, c1, c1).astype(jnp.bfloat16)


def _build_im2col(x_nhwc_bf16, h_pad, w_pad):
  """(B,H,W,Cin) -> (B, H_pad+2, W_pad, 9*Cin) stage-1 im2col with zero padding baked in.
  Cheap on the XLA side (9x blowup of a 3-4 channel image); gives the kernel a
  contiguous, lane-dense stage-1 LHS."""
  B, H, W, Cin = x_nhwc_bf16.shape
  xb = jnp.pad(x_nhwc_bf16, ((0, 0), (2, h_pad + 2 - H), (2, w_pad - W), (0, 0)))
  taps = [xb[:, ky:ky + h_pad + 2, kx:kx + w_pad, :]
          for ky in range(3) for kx in range(3)]
  return jnp.concatenate(taps, axis=-1)


def inconv_forward_nhwc(x_nhwc, params, *, tile_h=16):
  """Fused double_conv.  Returns (B, H, W, C1) bf16 NHWC with out channels zero-padded to
  C1 = round_up(out_ch, 128) -- the preferred form for a fused downstream consumer."""
  B, H, W, _ = x_nhwc.shape
  out_ch = params["w1"].shape[0]
  C1 = _round_up(out_ch, LANE)
  TH = max(1, min(tile_h, H))
  H_pad = _round_up(H, TH)                    # ragged H handled by padding + masking
  W_pad = _round_up(W + 2, BF16_SUBLANES)     # >= W+2; keeps flat-row strides aligned

  w1m, w2m = _prep_weights(params["w1"], params["w2"], C1)
  s1, t1 = fold_bn(params["b1"], *params["bn1"])
  s2, t2 = fold_bn(params["b2"], *params["bn2"])
  s1, t1, s2, t2 = (_pad_lanes(v, C1) for v in (s1, t1, s2, t2))

  xim = _build_im2col(x_nhwc.astype(jnp.bfloat16), H_pad, W_pad)
  y = double_conv_fused(xim, w1m, s1, t1, w2m, s2, t2, H=H, W=W, TH=TH, C1=C1)
  return y[:, :H]


def inconv_forward(x_nchw, params, *, tile_h=16):
  """PyTorch-interface wrapper: NCHW f32 in, NCHW f32 out.  The channel slice, layout
  transpose and f32 cast are XLA-side convenience passes; use `inconv_forward_nhwc`
  directly to avoid them when fusing with the next layer."""
  out_ch = params["w1"].shape[0]
  x = jnp.transpose(x_nchw, (0, 2, 3, 1))
  y = inconv_forward_nhwc(x, params, tile_h=tile_h)
  return jnp.transpose(y[..., :out_ch].astype(jnp.float32), (0, 3, 1, 2))


# ------------------------------------ self test ---------------------------------------

def make_inconv_params(key, in_ch, out_ch):
  """Deterministic synthetic parameters with PyTorch-like shapes (non-trivial BN)."""
  ks = jax.random.split(key, 12)
  w1 = jax.random.normal(ks[0], (out_ch, in_ch, 3, 3), jnp.float32) * 0.1
  b1 = jax.random.normal(ks[1], (out_ch,), jnp.float32) * 0.1
  w2 = jax.random.normal(ks[2], (out_ch, out_ch, 3, 3), jnp.float32) * 0.1
  b2 = jax.random.normal(ks[3], (out_ch,), jnp.float32) * 0.1

  def bn(k1, k2, k3, k4):
    return (1.0 + 0.1 * jax.random.normal(k1, (out_ch,), jnp.float32),   # gamma
            0.1 * jax.random.normal(k2, (out_ch,), jnp.float32),         # beta
            0.1 * jax.random.normal(k3, (out_ch,), jnp.float32),         # running_mean
            jax.random.uniform(k4, (out_ch,), jnp.float32, minval=0.5,   # running_var
                               maxval=1.5))

  return dict(w1=w1, b1=b1, bn1=bn(*ks[4:8]), w2=w2, b2=b2, bn2=bn(*ks[8:12]))


def _reference_forward(x_nchw, params):
  """Pure-JAX reference (lax.conv, f32) for the correctness check."""
  def stage(x, w, b, bn):
    y = lax.conv_general_dilated(x, w, window_strides=(1, 1), padding="SAME",
                                 dimension_numbers=("NCHW", "OIHW", "NCHW"))
    gamma, beta, mean, var = bn
    y = y + b[None, :, None, None]
    y = gamma[None, :, None, None] * (y - mean[None, :, None, None]) / \
        jnp.sqrt(var[None, :, None, None] + 1e-5) + beta[None, :, None, None]
    return jnp.maximum(y, 0.0)

  y = stage(x_nchw, params["w1"], params["b1"], params["bn1"])
  return stage(y, params["w2"], params["b2"], params["bn2"])


if __name__ == "__main__":
  key = jax.random.PRNGKey(0)
  cases = [
      dict(B=2, in_ch=4, out_ch=8, H=16, W=16, tile_h=8),   # 2 row tiles, exact fit
      dict(B=1, in_ch=3, out_ch=8, H=20, W=12, tile_h=8),   # ragged H (padded to 24)
  ]
  for cfg in cases:
    key, kx, kp = jax.random.split(key, 3)
    x = jax.random.normal(kx, (cfg["B"], cfg["in_ch"], cfg["H"], cfg["W"]), jnp.float32)
    params = make_inconv_params(kp, cfg["in_ch"], cfg["out_ch"])

    fwd = jax.jit(functools.partial(inconv_forward, tile_h=cfg["tile_h"]))
    out = jax.block_until_ready(fwd(x, params))
    assert out.shape == (cfg["B"], cfg["out_ch"], cfg["H"], cfg["W"])

    # Reference on bf16-quantized operands (the kernel uses bf16 matmul operands with
    # f32 accumulation, a bf16 stage-1 intermediate and a bf16 output).
    xq = x.astype(jnp.bfloat16).astype(jnp.float32)
    pq = dict(params)
    pq["w1"] = params["w1"].astype(jnp.bfloat16).astype(jnp.float32)
    pq["w2"] = params["w2"].astype(jnp.bfloat16).astype(jnp.float32)
    ref = _reference_forward(xq, pq)
    assert jnp.allclose(out, ref, atol=4e-2, rtol=4e-2), (
        f"mismatch vs reference (max abs err {float(jnp.max(jnp.abs(out - ref)))})")

  print("KERNEL_OK")
</pallas_src>

<mosaic_0001>
module attributes {stable_mosaic.version = 11 : i64} {
  func.func @_fused_double_conv_kernel(%arg0: i32, %arg1: i32, %arg2: memref<1x18x32x36xbf16, #tpu.memory_space<vmem>>, %arg3: memref<36x128xbf16, #tpu.memory_space<vmem>>, %arg4: memref<1x128xf32, #tpu.memory_space<vmem>>, %arg5: memref<1x128xf32, #tpu.memory_space<vmem>>, %arg6: memref<9x128x128xbf16, #tpu.memory_space<vmem>>, %arg7: memref<1x128xf32, #tpu.memory_space<vmem>>, %arg8: memref<1x128xf32, #tpu.memory_space<vmem>>, %arg9: memref<1x8x16x128xbf16, #tpu.memory_space<vmem>>, %arg10: memref<336x128xbf16, #tpu.memory_space<vmem>>) attributes {dimension_semantics = [#tpu.dimension_semantics<parallel>, #tpu.dimension_semantics<arbitrary>], iteration_bounds = array<i64: 2, 2>, scalar_prefetch = 0 : i64, scratch_operands = 1 : i64, tpu.core_type = #tpu.core_type<tc>, window_params = [{transform_indices = @transform_0, window_bounds = array<i64: 1, 18, 32, 36>}, {pipeline_mode = #tpu.pipeline_mode<synchronous>, transform_indices = @transform_1, window_bounds = array<i64: 36, 128>}, {pipeline_mode = #tpu.pipeline_mode<synchronous>, transform_indices = @transform_2, window_bounds = array<i64: 1, 128>}, {pipeline_mode = #tpu.pipeline_mode<synchronous>, transform_indices = @transform_3, window_bounds = array<i64: 1, 128>}, {pipeline_mode = #tpu.pipeline_mode<synchronous>, transform_indices = @transform_4, window_bounds = array<i64: 9, 128, 128>}, {pipeline_mode = #tpu.pipeline_mode<synchronous>, transform_indices = @transform_5, window_bounds = array<i64: 1, 128>}, {pipeline_mode = #tpu.pipeline_mode<synchronous>, transform_indices = @transform_6, window_bounds = array<i64: 1, 128>}, {transform_indices = @transform_7, window_bounds = array<i64: 1, 8, 16, 128>}]} {
    %c8_i32 = arith.constant 8 : i32
    %0 = arith.muli %arg1, %c8_i32 : i32
    %c0 = arith.constant 0 : index
    %1 = arith.index_cast %0 : i32 to index
    %c0_0 = arith.constant 0 : index
    %c0_1 = arith.constant 0 : index
    %2 = vector.load %arg2[%c0, %1, %c0_0, %c0_1] : memref<1x18x32x36xbf16, #tpu.memory_space<vmem>>, vector<1x10x32x36xbf16>
    %3 = vector.shape_cast %2 : vector<1x10x32x36xbf16> to vector<10x32x36xbf16>
    %4 = vector.shape_cast %3 : vector<10x32x36xbf16> to vector<320x36xbf16>
    %c0_2 = arith.constant 0 : index
    %c0_3 = arith.constant 0 : index
    %5 = vector.load %arg3[%c0_2, %c0_3] : memref<36x128xbf16, #tpu.memory_space<vmem>>, vector<36x128xbf16>
    %cst = arith.constant dense<0.000000e+00> : vector<320x128xf32>
    %6 = tpu.matmul %4, %5, %cst {dimension_numbers = #tpu.dot_dimension_numbers<[1], [0], [0], [1], [0, 0, 1, 1], [], []>} : vector<320x36xbf16>, vector<36x128xbf16>, vector<320x128xf32> -> vector<320x128xf32>
    %c0_4 = arith.constant 0 : index
    %c0_5 = arith.constant 0 : index
    %7 = vector.load %arg4[%c0_4, %c0_5] : memref<1x128xf32, #tpu.memory_space<vmem>>, vector<1x128xf32>
    %8 = vector.broadcast %7 : vector<1x128xf32> to vector<320x128xf32>
    %9 = arith.mulf %6, %8 : vector<320x128xf32>
    %c0_6 = arith.constant 0 : index
    %c0_7 = arith.constant 0 : index
    %10 = vector.load %arg5[%c0_6, %c0_7] : memref<1x128xf32, #tpu.memory_space<vmem>>, vector<1x128xf32>
    %11 = vector.broadcast %10 : vector<1x128xf32> to vector<320x128xf32>
    %12 = arith.addf %9, %11 : vector<320x128xf32>
    %cst_8 = arith.constant 0.000000e+00 : f32
    %13 = vector.broadcast %cst_8 : f32 to vector<320x128xf32>
    %14 = arith.maximumf %12, %13 : vector<320x128xf32>
    %15 = vector.shape_cast %14 : vector<320x128xf32> to vector<10x32x128xf32>
    %16 = tpu.iota {dimensions = array<i32: 0>} : vector<10x32x1xi32>
    %c8_i32_9 = arith.constant 8 : i32
    %17 = arith.muli %arg1, %c8_i32_9 : i32
    %18 = vector.broadcast %17 : i32 to vector<10x32x1xi32>
    %19 = arith.addi %16, %18 : vector<10x32x1xi32>
    %20 = tpu.iota {dimensions = array<i32: 1>} : vector<10x32x1xi32>
    %c1_i32 = arith.constant 1 : i32
    %21 = vector.broadcast %c1_i32 : i32 to vector<10x32x1xi32>
    %22 = arith.cmpi sge, %19, %21 : vector<10x32x1xi32>
    %c16_i32 = arith.constant 16 : i32
    %23 = vector.broadcast %c16_i32 : i32 to vector<10x32x1xi32>
    %24 = arith.cmpi sle, %19, %23 : vector<10x32x1xi32>
    %25 = arith.andi %22, %24 : vector<10x32x1xi1>
    %c1_i32_10 = arith.constant 1 : i32
    %26 = vector.broadcast %c1_i32_10 : i32 to vector<10x32x1xi32>
    %27 = arith.cmpi sge, %20, %26 : vector<10x32x1xi32>
    %28 = arith.andi %25, %27 : vector<10x32x1xi1>
    %c16_i32_11 = arith.constant 16 : i32
    %29 = vector.broadcast %c16_i32_11 : i32 to vector<10x32x1xi32>
    %30 = arith.cmpi sle, %20, %29 : vector<10x32x1xi32>
    %31 = arith.andi %28, %30 : vector<10x32x1xi1>
    %cst_12 = arith.constant 0.000000e+00 : f32
    %32 = vector.shape_cast %31 : vector<10x32x1xi1> to vector<10x32x1xi1>
    %33 = vector.broadcast %32 : vector<10x32x1xi1> to vector<10x32x128xi1>
    %34 = vector.broadcast %cst_12 : f32 to vector<10x32x128xf32>
    %35 = arith.select %33, %15, %34 : vector<10x32x128xi1>, vector<10x32x128xf32>
    %36 = arith.truncf %35 : vector<10x32x128xf32> to vector<10x32x128xbf16>
    %37 = vector.shape_cast %36 : vector<10x32x128xbf16> to vector<320x128xbf16>
    %c0_13 = arith.constant 0 : index
    %c0_14 = arith.constant 0 : index
    %38 = vector.load %arg10[%c0_13, %c0_14] : memref<336x128xbf16, #tpu.memory_space<vmem>>, vector<320x128xbf16>
    tpu.vector_store %arg10[%c0_13, %c0_14], %37 {strides = array<i32>} : memref<336x128xbf16, #tpu.memory_space<vmem>>, vector<320x128xbf16>,
    %cst_15 = arith.constant 0.000000e+00 : bf16
    %39 = vector.broadcast %cst_15 : bf16 to vector<16x128xbf16>
    %c320 = arith.constant 320 : index
    %c0_16 = arith.constant 0 : index
    %40 = vector.load %arg10[%c320, %c0_16] : memref<336x128xbf16, #tpu.memory_space<vmem>>, vector<16x128xbf16>
    tpu.vector_store %arg10[%c320, %c0_16], %39 {strides = array<i32>} : memref<336x128xbf16, #tpu.memory_space<vmem>>, vector<16x128xbf16>,
    %c0_17 = arith.constant 0 : index
    %c0_18 = arith.constant 0 : index
    %41 = vector.load %arg10[%c0_17, %c0_18] : memref<336x128xbf16, #tpu.memory_space<vmem>>, vector<256x128xbf16>
    %c0_19 = arith.constant 0 : index
    %c0_20 = arith.constant 0 : index
    %c0_21 = arith.constant 0 : index
    %42 = vector.load %arg6[%c0_19, %c0_20, %c0_21] : memref<9x128x128xbf16, #tpu.memory_space<vmem>>, vector<1x128x128xbf16>
    %43 = vector.shape_cast %42 : vector<1x128x128xbf16> to vector<128x128xbf16>
    %cst_22 = arith.constant dense<0.000000e+00> : vector<256x128xf32>
    %44 = tpu.matmul %41, %43, %cst_22 {dimension_numbers = #tpu.dot_dimension_numbers<[1], [0], [0], [1], [0, 0, 1, 1], [], []>} : vector<256x128xbf16>, vector<128x128xbf16>, vector<256x128xf32> -> vector<256x128xf32>
    %c1 = arith.constant 1 : index
    %c0_23 = arith.constant 0 : index
    %45 = vector.load %arg10[%c1, %c0_23] : memref<336x128xbf16, #tpu.memory_space<vmem>>, vector<256x128xbf16>
    %c1_24 = arith.constant 1 : index
    %c0_25 = arith.constant 0 : index
    %c0_26 = arith.constant 0 : index
    %46 = vector.load %arg6[%c1_24, %c0_25, %c0_26] : memref<9x128x128xbf16, #tpu.memory_space<vmem>>, vector<1x128x128xbf16>
    %47 = vector.shape_cast %46 : vector<1x128x128xbf16> to vector<128x128xbf16>
    %cst_27 = arith.constant dense<0.000000e+00> : vector<256x128xf32>
    %48 = tpu.matmul %45, %47, %cst_27 {dimension_numbers = #tpu.dot_dimension_numbers<[1], [0], [0], [1], [0, 0, 1, 1], [], []>} : vector<256x128xbf16>, vector<128x128xbf16>, vector<256x128xf32> -> vector<256x128xf32>
    %49 = arith.addf %44, %48 : vector<256x128xf32>
    %c2 = arith.constant 2 : index
    %c0_28 = arith.constant 0 : index
    %50 = vector.load %arg10[%c2, %c0_28] : memref<336x128xbf16, #tpu.memory_space<vmem>>, vector<256x128xbf16>
    %c2_29 = arith.constant 2 : index
    %c0_30 = arith.constant 0 : index
    %c0_31 = arith.constant 0 : index
    %51 = vector.load %arg6[%c2_29, %c0_30, %c0_31] : memref<9x128x128xbf16, #tpu.memory_space<vmem>>, vector<1x128x128xbf16>
    %52 = vector.shape_cast %51 : vector<1x128x128xbf16> to vector<128x128xbf16>
    %cst_32 = arith.constant dense<0.000000e+00> : vector<256x128xf32>
    %53 = tpu.matmul %50, %52, %cst_32 {dimension_numbers = #tpu.dot_dimension_numbers<[1], [0], [0], [1], [0, 0, 1, 1], [], []>} : vector<256x128xbf16>, vector<128x128xbf16>, vector<256x128xf32> -> vector<256x128xf32>
    %54 = arith.addf %49, %53 : vector<256x128xf32>
    %c32 = arith.constant 32 : index
    %c0_33 = arith.constant 0 : index
    %55 = vector.load %arg10[%c32, %c0_33] : memref<336x128xbf16, #tpu.memory_space<vmem>>, vector<256x128xbf16>
    %c3 = arith.constant 3 : index
    %c0_34 = arith.constant 0 : index
    %c0_35 = arith.constant 0 : index
    %56 = vector.load %arg6[%c3, %c0_34, %c0_35] : memref<9x128x128xbf16, #tpu.memory_space<vmem>>, vector<1x128x128xbf16>
    %57 = vector.shape_cast %56 : vector<1x128x128xbf16> to vector<128x128xbf16>
    %cst_36 = arith.constant dense<0.000000e+00> : vector<256x128xf32>
    %58 = tpu.matmul %55, %57, %cst_36 {dimension_numbers = #tpu.dot_dimension_numbers<[1], [0], [0], [1], [0, 0, 1, 1], [], []>} : vector<256x128xbf16>, vector<128x128xbf16>, vector<256x128xf32> -> vector<256x128xf32>
    %59 = arith.addf %54, %58 : vector<256x128xf32>
    %c33 = arith.constant 33 : index
    %c0_37 = arith.constant 0 : index
    %60 = vector.load %arg10[%c33, %c0_37] : memref<336x128xbf16, #tpu.memory_space<vmem>>, vector<256x128xbf16>
    %c4 = arith.constant 4 : index
    %c0_38 = arith.constant 0 : index
    %c0_39 = arith.constant 0 : index
    %61 = vector.load %arg6[%c4, %c0_38, %c0_39] : memref<9x128x128xbf16, #tpu.memory_space<vmem>>, vector<1x128x128xbf16>
    %62 = vector.shape_cast %61 : vector<1x128x128xbf16> to vector<128x128xbf16>
    %cst_40 = arith.constant dense<0.000000e+00> : vector<256x128xf32>
    %63 = tpu.matmul %60, %62, %cst_40 {dimension_numbers = #tpu.dot_dimension_numbers<[1], [0], [0], [1], [0, 0, 1, 1], [], []>} : vector<256x128xbf16>, vector<128x128xbf16>, vector<256x128xf32> -> vector<256x128xf32>
    %64 = arith.addf %59, %63 : vector<256x128xf32>
    %c34 = arith.constant 34 : index
    %c0_41 = arith.constant 0 : index
    %65 = vector.load %arg10[%c34, %c0_41] : memref<336x128xbf16, #tpu.memory_space<vmem>>, vector<256x128xbf16>
    %c5 = arith.constant 5 : index
    %c0_42 = arith.constant 0 : index
    %c0_43 = arith.constant 0 : index
    %66 = vector.load %arg6[%c5, %c0_42, %c0_43] : memref<9x128x128xbf16, #tpu.memory_space<vmem>>, vector<1x128x128xbf16>
    %67 = vector.shape_cast %66 : vector<1x128x128xbf16> to vector<128x128xbf16>
    %cst_44 = arith.constant dense<0.000000e+00> : vector<256x128xf32>
    %68 = tpu.matmul %65, %67, %cst_44 {dimension_numbers = #tpu.dot_dimension_numbers<[1], [0], [0], [1], [0, 0, 1, 1], [], []>} : vector<256x128xbf16>, vector<128x128xbf16>, vector<256x128xf32> -> vector<256x128xf32>
    %69 = arith.addf %64, %68 : vector<256x128xf32>
    %c64 = arith.constant 64 : index
    %c0_45 = arith.constant 0 : index
    %70 = vector.load %arg10[%c64, %c0_45] : memref<336x128xbf16, #tpu.memory_space<vmem>>, vector<256x128xbf16>
    %c6 = arith.constant 6 : index
    %c0_46 = arith.constant 0 : index
    %c0_47 = arith.constant 0 : index
    %71 = vector.load %arg6[%c6, %c0_46, %c0_47] : memref<9x128x128xbf16, #tpu.memory_space<vmem>>, vector<1x128x128xbf16>
    %72 = vector.shape_cast %71 : vector<1x128x128xbf16> to vector<128x128xbf16>
    %cst_48 = arith.constant dense<0.000000e+00> : vector<256x128xf32>
    %73 = tpu.matmul %70, %72, %cst_48 {dimension_numbers = #tpu.dot_dimension_numbers<[1], [0], [0], [1], [0, 0, 1, 1], [], []>} : vector<256x128xbf16>, vector<128x128xbf16>, vector<256x128xf32> -> vector<256x128xf32>
    %74 = arith.addf %69, %73 : vector<256x128xf32>
    %c65 = arith.constant 65 : index
    %c0_49 = arith.constant 0 : index
    %75 = vector.load %arg10[%c65, %c0_49] : memref<336x128xbf16, #tpu.memory_space<vmem>>, vector<256x128xbf16>
    %c7 = arith.constant 7 : index
    %c0_50 = arith.constant 0 : index
    %c0_51 = arith.constant 0 : index
    %76 = vector.load %arg6[%c7, %c0_50, %c0_51] : memref<9x128x128xbf16, #tpu.memory_space<vmem>>, vector<1x128x128xbf16>
    %77 = vector.shape_cast %76 : vector<1x128x128xbf16> to vector<128x128xbf16>
    %cst_52 = arith.constant dense<0.000000e+00> : vector<256x128xf32>
    %78 = tpu.matmul %75, %77, %cst_52 {dimension_numbers = #tpu.dot_dimension_numbers<[1], [0], [0], [1], [0, 0, 1, 1], [], []>} : vector<256x128xbf16>, vector<128x128xbf16>, vector<256x128xf32> -> vector<256x128xf32>
    %79 = arith.addf %74, %78 : vector<256x128xf32>
    %c66 = arith.constant 66 : index
    %c0_53 = arith.constant 0 : index
    %80 = vector.load %arg10[%c66, %c0_53] : memref<336x128xbf16, #tpu.memory_space<vmem>>, vector<256x128xbf16>
    %c8 = arith.constant 8 : index
    %c0_54 = arith.constant 0 : index
    %c0_55 = arith.constant 0 : index
    %81 = vector.load %arg6[%c8, %c0_54, %c0_55] : memref<9x128x128xbf16, #tpu.memory_space<vmem>>, vector<1x128x128xbf16>
    %82 = vector.shape_cast %81 : vector<1x128x128xbf16> to vector<128x128xbf16>
    %cst_56 = arith.constant dense<0.000000e+00> : vector<256x128xf32>
    %83 = tpu.matmul %80, %82, %cst_56 {dimension_numbers = #tpu.dot_dimension_numbers<[1], [0], [0], [1], [0, 0, 1, 1], [], []>} : vector<256x128xbf16>, vector<128x128xbf16>, vector<256x128xf32> -> vector<256x128xf32>
    %84 = arith.addf %79, %83 : vector<256x128xf32>
    %c0_57 = arith.constant 0 : index
    %c0_58 = arith.constant 0 : index
    %85 = vector.load %arg7[%c0_57, %c0_58] : memref<1x128xf32, #tpu.memory_space<vmem>>, vector<1x128xf32>
    %86 = vector.broadcast %85 : vector<1x128xf32> to vector<256x128xf32>
    %87 = arith.mulf %84, %86 : vector<256x128xf32>
    %c0_59 = arith.constant 0 : index
    %c0_60 = arith.constant 0 : index
    %88 = vector.load %arg8[%c0_59, %c0_60] : memref<1x128xf32, #tpu.memory_space<vmem>>, vector<1x128xf32>
    %89 = vector.broadcast %88 : vector<1x128xf32> to vector<256x128xf32>
    %90 = arith.addf %87, %89 : vector<256x128xf32>
    %cst_61 = arith.constant 0.000000e+00 : f32
    %91 = vector.broadcast %cst_61 : f32 to vector<256x128xf32>
    %92 = arith.maximumf %90, %91 : vector<256x128xf32>
    %93 = arith.truncf %92 : vector<256x128xf32> to vector<256x128xbf16>
    %94 = vector.shape_cast %93 : vector<256x128xbf16> to vector<8x32x128xbf16>
    %95 = vector.extract_strided_slice %94 {offsets = [0, 0, 0], sizes = [8, 16, 128], strides = [1, 1, 1]} : vector<8x32x128xbf16> to vector<8x16x128xbf16>
    %c0_62 = arith.constant 0 : index
    %c0_63 = arith.constant 0 : index
    %c0_64 = arith.constant 0 : index
    %c0_65 = arith.constant 0 : index
    %96 = vector.load %arg9[%c0_62, %c0_63, %c0_64, %c0_65] : memref<1x8x16x128xbf16, #tpu.memory_space<vmem>>, vector<1x8x16x128xbf16>
    %97 = vector.shape_cast %96 : vector<1x8x16x128xbf16> to vector<8x16x128xbf16>
    %98 = vector.shape_cast %95 : vector<8x16x128xbf16> to vector<1x8x16x128xbf16>
    tpu.vector_store %arg9[%c0_62, %c0_63, %c0_64, %c0_65], %98 {strides = array<i32>} : memref<1x8x16x128xbf16, #tpu.memory_space<vmem>>, vector<1x8x16x128xbf16>,
    return
  }
  func.func @transform_0(%arg0: i32, %arg1: i32) -> (i32, i32, i32, i32) {
    %c0_i32 = arith.constant 0 : i32
    %c0_i32_0 = arith.constant 0 : i32
    %c0_i32_1 = arith.constant 0 : i32
    %c0_i32_2 = arith.constant 0 : i32
    return %arg0, %c0_i32, %c0_i32_0, %c0_i32_1 : i32, i32, i32, i32
  }
  func.func @transform_1(%arg0: i32, %arg1: i32) -> (i32, i32) {
    %c0_i32 = arith.constant 0 : i32
    %c0_i32_0 = arith.constant 0 : i32
    %c0_i32_1 = arith.constant 0 : i32
    return %c0_i32, %c0_i32_0 : i32, i32
  }
  func.func @transform_2(%arg0: i32, %arg1: i32) -> (i32, i32) {
    %c0_i32 = arith.constant 0 : i32
    %c0_i32_0 = arith.constant 0 : i32
    %c0_i32_1 = arith.constant 0 : i32
    return %c0_i32, %c0_i32_0 : i32, i32
  }
  func.func @transform_3(%arg0: i32, %arg1: i32) -> (i32, i32) {
    %c0_i32 = arith.constant 0 : i32
    %c0_i32_0 = arith.constant 0 : i32
    %c0_i32_1 = arith.constant 0 : i32
    return %c0_i32, %c0_i32_0 : i32, i32
  }
  func.func @transform_4(%arg0: i32, %arg1: i32) -> (i32, i32, i32) {
    %c0_i32 = arith.constant 0 : i32
    %c0_i32_0 = arith.constant 0 : i32
    %c0_i32_1 = arith.constant 0 : i32
    %c0_i32_2 = arith.constant 0 : i32
    return %c0_i32, %c0_i32_0, %c0_i32_1 : i32, i32, i32
  }
  func.func @transform_5(%arg0: i32, %arg1: i32) -> (i32, i32) {
    %c0_i32 = arith.constant 0 : i32
    %c0_i32_0 = arith.constant 0 : i32
    %c0_i32_1 = arith.constant 0 : i32
    return %c0_i32, %c0_i32_0 : i32, i32
  }
  func.func @transform_6(%arg0: i32, %arg1: i32) -> (i32, i32) {
    %c0_i32 = arith.constant 0 : i32
    %c0_i32_0 = arith.constant 0 : i32
    %c0_i32_1 = arith.constant 0 : i32
    return %c0_i32, %c0_i32_0 : i32, i32
  }
  func.func @transform_7(%arg0: i32, %arg1: i32) -> (i32, i32, i32, i32) {
    %c0_i32 = arith.constant 0 : i32
    %c0_i32_0 = arith.constant 0 : i32
    %c0_i32_1 = arith.constant 0 : i32
    return %arg0, %arg1, %c0_i32, %c0_i32_0 : i32, i32, i32, i32
  }
}

</mosaic_0001>

<llo_original>
// kernel: inconv_forward.1
$region0: #{inconv_forward.1}
  #allocation0 [shape = 'u32[]', space=smem, size = 0x4, offset = 0x4, fixed_abs, tag = 'smem constant byte address 0x4 - core index']
  #allocation1 [shape = 'u32[144,128]{1,0:T(1,128)}', space=vmem, size = 0x12000, scoped, tag = 'internal scratch']
  #allocation2 [shape = 'bf16[336,128]{1,0:T(8,128)(2,1)}', space=vmem, size = 0x15000, scoped, tag = 'scratch operand']
  %s0 = inlined_call_operand.vmem [shape: bf16[2,18,32,36], index: 0, kind: input, shape index: {}]
  %s1 = inlined_call_operand.vmem [shape: bf16[36,128], index: 1, kind: input, shape index: {}]
  %s2 = inlined_call_operand.vmem [shape: f32[1,128], index: 2, kind: input, shape index: {}]
  %s3 = inlined_call_operand.vmem [shape: f32[1,128], index: 3, kind: input, shape index: {}]
  %s4 = inlined_call_operand.vmem [shape: bf16[9,128,128], index: 4, kind: input, shape index: {}]
  %s5 = inlined_call_operand.vmem [shape: f32[1,128], index: 5, kind: input, shape index: {}]
  %s6 = inlined_call_operand.vmem [shape: f32[1,128], index: 6, kind: input, shape index: {}]
  %s7 = inlined_call_operand.vmem [shape: bf16[2,16,16,128], index: 7, kind: output, shape index: {}]
  %s8 = sld [smem:[#allocation0]]
  $region61: #{inconv_forward.1} parent=0
    _
  %s10 = ssub.s32 1, %s8
  %s11 = scalar_select 0, %s10, %s8
  loop: start=0, step=1, limit=6
  $region2: #{inconv_forward.1} parent=0 // loop_pre_header
    _
  $region3: #{inconv_forward.1} parent=0 // loop_header
    %s13 = sphi 0, %s17
    %p14 = scmp.ge.s32.totalorder %s13, 6
    %s20 = sphi 0, %s32
    %s21 = sphi 0, %s28
    %s22 = sphi 0, %s20
    %s23 = sphi 0, %s21
    %s24 = sphi 0, %s22
    %s25 = sphi 0, %s23
    %s35 = sphi 0, %s37
    %s38 = sphi 0, %s35
    %s39 = sphi 0, %s38
    %s55 = sphi 0, %s39
    %s59 = sphi 0, %s59
    %s61 = sphi 0, %s59
    %s62 = sphi 0, %s61
    %s76 = sphi 0, %s62
    %s80 = sphi 0, %s80
    %s82 = sphi 0, %s80
    %s83 = sphi 0, %s82
    %s97 = sphi 0, %s83
    %s101 = sphi 0, %s101
    %s103 = sphi 0, %s101
    %s104 = sphi 0, %s103
    %s118 = sphi 0, %s104
    %s122 = sphi 0, %s122
    %s124 = sphi 0, %s122
    %s125 = sphi 0, %s124
    %s139 = sphi 0, %s125
    %s143 = sphi 0, %s143
    %s145 = sphi 0, %s143
    %s146 = sphi 0, %s145
    %s160 = sphi 0, %s146
    %s164 = sphi 0, %s164
    %s166 = sphi 0, %s164
    %s167 = sphi 0, %s166
    %s181 = sphi 0, %s167
    %s189 = sphi 0, %s191
    %s192 = sphi 0, %s189
    %s193 = sphi 0, %s192
    %s209 = sphi 0, %s193
  $region4: #{inconv_forward.1} parent=0 // loop_header_branch
    %16 = sbr.rel (%p14) target = $region8
  $region5: #{inconv_forward.1} parent=0 // loop_body
    %s18 = ssub.s32 %s13, 1
    %s19 = ssub.s32 %s13, 2
    %s26 = sadd.s32 1, %s21
    %p27 = scmp.ge.s32.totalorder %s26, 2
    %s28 = scalar_select %p27, 0, %s26
    %s29 = sadd.s32 1, %s20
    %s30 = scalar_select %p27, %s29, %s20
    %p31 = scmp.ge.s32.totalorder %s30, 2
    %s32 = scalar_select %p31, 0, %s30
    %s33 = ssub.s32 %s20, %s32
    %p34 = scmp.eq.s32.totalorder %s33, 0
    %s36 = sadd.s32 %s35, 1
    %s37 = scalar_select %p34, %s35, %s36
    %p40 = pneg %p34
    %p41 = scmp.eq.s32.totalorder %s13, 3
    %p42 = por %p40, %p41
    %p43 = scmp.ne.s32.totalorder %s35, %s38
    %p44 = scmp.eq.s32.totalorder %s13, 0
    %p45 = por %p43, %p44
    %p46 = scmp.ne.s32.totalorder %s35, %s38
    %p47 = scmp.eq.s32.totalorder %s18, 3
    %p48 = por %p46, %p47
    %p49 = scmp.ne.s32.totalorder %s38, %s39
    %p50 = scmp.eq.s32.totalorder %s18, 0
    %p51 = por %p49, %p50
    %p52 = scmp.ne.s32.totalorder %s38, %s39
    %p53 = scmp.eq.s32.totalorder %s19, 3
    %p54 = por %p52, %p53
    %p56 = scmp.ne.s32.totalorder %s39, %s55
    %p57 = scmp.eq.s32.totalorder %s19, 0
    %p58 = por %p56, %p57
    %s60 = sadd.s32 %s59, 1
    %p63 = scmp.eq.s32.totalorder %s13, 3
    %p64 = scmp.ne.s32.totalorder %s59, %s61
    %p65 = scmp.eq.s32.totalorder %s13, 0
    %p66 = por %p64, %p65
    %p67 = scmp.ne.s32.totalorder %s59, %s61
    %p68 = scmp.eq.s32.totalorder %s18, 3
    %p69 = por %p67, %p68
    %p70 = scmp.ne.s32.totalorder %s61, %s62
    %p71 = scmp.eq.s32.totalorder %s18, 0
    %p72 = por %p70, %p71
    %p73 = scmp.ne.s32.totalorder %s61, %s62
    %p74 = scmp.eq.s32.totalorder %s19, 3
    %p75 = por %p73, %p74
    %p77 = scmp.ne.s32.totalorder %s62, %s76
    %p78 = scmp.eq.s32.totalorder %s19, 0
    %p79 = por %p77, %p78
    %s81 = sadd.s32 %s80, 1
    %p84 = scmp.eq.s32.totalorder %s13, 3
    %p85 = scmp.ne.s32.totalorder %s80, %s82
    %p86 = scmp.eq.s32.totalorder %s13, 0
    %p87 = por %p85, %p86
    %p88 = scmp.ne.s32.totalorder %s80, %s82
    %p89 = scmp.eq.s32.totalorder %s18, 3
    %p90 = por %p88, %p89
    %p91 = scmp.ne.s32.totalorder %s82, %s83
    %p92 = scmp.eq.s32.totalorder %s18, 0
    %p93 = por %p91, %p92
    %p94 = scmp.ne.s32.totalorder %s82, %s83
    %p95 = scmp.eq.s32.totalorder %s19, 3
    %p96 = por %p94, %p95
    %p98 = scmp.ne.s32.totalorder %s83, %s97
    %p99 = scmp.eq.s32.totalorder %s19, 0
    %p100 = por %p98, %p99
    %s102 = sadd.s32 %s101, 1
    %p105 = scmp.eq.s32.totalorder %s13, 3
    %p106 = scmp.ne.s32.totalorder %s101, %s103
    %p107 = scmp.eq.s32.totalorder %s13, 0
    %p108 = por %p106, %p107
    %p109 = scmp.ne.s32.totalorder %s101, %s103
    %p110 = scmp.eq.s32.totalorder %s18, 3
    %p111 = por %p109, %p110
    %p112 = scmp.ne.s32.totalorder %s103, %s104
    %p113 = scmp.eq.s32.totalorder %s18, 0
    %p114 = por %p112, %p113
    %p115 = scmp.ne.s32.totalorder %s103, %s104
    %p116 = scmp.eq.s32.totalorder %s19, 3
    %p117 = por %p115, %p116
    %p119 = scmp.ne.s32.totalorder %s104, %s118
    %p120 = scmp.eq.s32.totalorder %s19, 0
    %p121 = por %p119, %p120
    %s123 = sadd.s32 %s122, 1
    %p126 = scmp.eq.s32.totalorder %s13, 3
    %p127 = scmp.ne.s32.totalorder %s122, %s124
    %p128 = scmp.eq.s32.totalorder %s13, 0
    %p129 = por %p127, %p128
    %p130 = scmp.ne.s32.totalorder %s122, %s124
    %p131 = scmp.eq.s32.totalorder %s18, 3
    %p132 = por %p130, %p131
    %p133 = scmp.ne.s32.totalorder %s124, %s125
    %p134 = scmp.eq.s32.totalorder %s18, 0
    %p135 = por %p133, %p134
    %p136 = scmp.ne.s32.totalorder %s124, %s125
    %p137 = scmp.eq.s32.totalorder %s19, 3
    %p138 = por %p136, %p137
    %p140 = scmp.ne.s32.totalorder %s125, %s139
    %p141 = scmp.eq.s32.totalorder %s19, 0
    %p142 = por %p140, %p141
    %s144 = sadd.s32 %s143, 1
    %p147 = scmp.eq.s32.totalorder %s13, 3
    %p148 = scmp.ne.s32.totalorder %s143, %s145
    %p149 = scmp.eq.s32.totalorder %s13, 0
    %p150 = por %p148, %p149
    %p151 = scmp.ne.s32.totalorder %s143, %s145
    %p152 = scmp.eq.s32.totalorder %s18, 3
    %p153 = por %p151, %p152
    %p154 = scmp.ne.s32.totalorder %s145, %s146
    %p155 = scmp.eq.s32.totalorder %s18, 0
    %p156 = por %p154, %p155
    %p157 = scmp.ne.s32.totalorder %s145, %s146
    %p158 = scmp.eq.s32.totalorder %s19, 3
    %p159 = por %p157, %p158
    %p161 = scmp.ne.s32.totalorder %s146, %s160
    %p162 = scmp.eq.s32.totalorder %s19, 0
    %p163 = por %p161, %p162
    %s165 = sadd.s32 %s164, 1
    %p168 = scmp.eq.s32.totalorder %s13, 3
    %p169 = scmp.ne.s32.totalorder %s164, %s166
    %p170 = scmp.eq.s32.totalorder %s13, 0
    %p171 = por %p169, %p170
    %p172 = scmp.ne.s32.totalorder %s164, %s166
    %p173 = scmp.eq.s32.totalorder %s18, 3
    %p174 = por %p172, %p173
    %p175 = scmp.ne.s32.totalorder %s166, %s167
    %p176 = scmp.eq.s32.totalorder %s18, 0
    %p177 = por %p175, %p176
    %p178 = scmp.ne.s32.totalorder %s166, %s167
    %p179 = scmp.eq.s32.totalorder %s19, 3
    %p180 = por %p178, %p179
    %p182 = scmp.ne.s32.totalorder %s167, %s181
    %p183 = scmp.eq.s32.totalorder %s19, 0
    %p184 = por %p182, %p183
    %s185 = ssub.s32 %s20, %s32
    %s186 = ssub.s32 %s21, %s28
    %s187 = sor.u32 %s185, %s186
    %p188 = scmp.eq.s32.totalorder %s187, 0
    %s190 = sadd.s32 %s189, 1
    %s191 = scalar_select %p188, %s189, %s190
    %p194 = pneg %p188
    %p195 = scmp.eq.s32.totalorder %s13, 3
    %p196 = por %p194, %p195
    %p197 = scmp.ne.s32.totalorder %s189, %s192
    %p198 = scmp.eq.s32.totalorder %s13, 0
    %p199 = por %p197, %p198
    %p200 = scmp.ne.s32.totalorder %s189, %s192
    %p201 = scmp.eq.s32.totalorder %s18, 3
    %p202 = por %p200, %p201
    %p203 = scmp.ne.s32.totalorder %s192, %s193
    %p204 = scmp.eq.s32.totalorder %s18, 0
    %p205 = por %p203, %p204
    %p206 = scmp.ne.s32.totalorder %s192, %s193
    %p207 = scmp.eq.s32.totalorder %s19, 3
    %p208 = por %p206, %p207
    %p210 = scmp.ne.s32.totalorder %s193, %s209
    %p211 = scmp.eq.s32.totalorder %s19, 0
    %p212 = por %p210, %p211
    %p213 = scmp.le.s32.totalorder 1, %s13
    %p214 = scmp.lt.s32.totalorder %s13, 5
    %p215 = pnand %p213, %p214
    %p216 = pneg %p215
    // Predicated region
    $region9: #{inconv_forward.1} parent=5 // pred_check
      _
    $region10: #{inconv_forward.1} parent=5 // pred_check_branch
      %218 = sbr.rel (%p215) target = $region12
    $region11: #{inconv_forward.1} parent=5 // pred_region
      %s219 = ssub.s32 %s13, 1
      // Predicated region
      $region13: #{inconv_forward.1} parent=11 // pred_check
        %p220 = pneg %p72
      $region14: #{inconv_forward.1} parent=11 // pred_check_branch
        %222 = sbr.rel (%p220) target = $region16
      $region15: #{inconv_forward.1} parent=11 // pred_region
        _
      $region16: #{inconv_forward.1} parent=11 // pred_fallthru
        _
      // Predicated region
      $region17: #{inconv_forward.1} parent=11 // pred_check
        %p223 = pneg %p93
      $region18: #{inconv_forward.1} parent=11 // pred_check_branch
        %225 = sbr.rel (%p223) target = $region20
      $region19: #{inconv_forward.1} parent=11 // pred_region
        _
      $region20: #{inconv_forward.1} parent=11 // pred_fallthru
        _
      // Predicated region
      $region21: #{inconv_forward.1} parent=11 // pred_check
        %p226 = pneg %p114
      $region22: #{inconv_forward.1} parent=11 // pred_check_branch
        %228 = sbr.rel (%p226) target = $region24
      $region23: #{inconv_forward.1} parent=11 // pred_region
        _
      $region24: #{inconv_forward.1} parent=11 // pred_fallthru
        _
      // Predicated region
      $region25: #{inconv_forward.1} parent=11 // pred_check
        %p229 = pneg %p135
      $region26: #{inconv_forward.1} parent=11 // pred_check_branch
        %231 = sbr.rel (%p229) target = $region28
      $region27: #{inconv_forward.1} parent=11 // pred_region
        _
      $region28: #{inconv_forward.1} parent=11 // pred_fallthru
        _
      // Predicated region
      $region29: #{inconv_forward.1} parent=11 // pred_check
        %p232 = pneg %p156
      $region30: #{inconv_forward.1} parent=11 // pred_check_branch
        %234 = sbr.rel (%p232) target = $region32
      $region31: #{inconv_forward.1} parent=11 // pred_region
        _
      $region32: #{inconv_forward.1} parent=11 // pred_fallthru
        _
      // Predicated region
      $region33: #{inconv_forward.1} parent=11 // pred_check
        %p235 = pneg %p177
      $region34: #{inconv_forward.1} parent=11 // pred_check_branch
        %237 = sbr.rel (%p235) target = $region36
      $region35: #{inconv_forward.1} parent=11 // pred_region
        _
      $region36: #{inconv_forward.1} parent=11 // pred_fallthru
        _
    $region12: #{inconv_forward.1} parent=5 // pred_fallthru
      _
    %p238 = scmp.lt.s32.totalorder %s13, 4
    // Predicated region
    $region37: #{inconv_forward.1} parent=5 // pred_check
      %p239 = pneg %p238
    $region38: #{inconv_forward.1} parent=5 // pred_check_branch
      %241 = sbr.rel (%p239) target = $region40
    $region39: #{inconv_forward.1} parent=5 // pred_region
      // Predicated region
      $region41: #{inconv_forward.1} parent=39 // pred_check
        %p242 = pneg %p45
      $region42: #{inconv_forward.1} parent=39 // pred_check_branch
        %244 = sbr.rel (%p242) target = $region44
      $region43: #{inconv_forward.1} parent=39 // pred_region
        %p245 = scmp.lt.s32.totalorder %s20, 1
        %s246 = scalar_select %p245, %s20, 1
        %s247 = smul.addr %s246, 72
        %s248 = smul.addr %s247, 4
        %s249 = scalar_lea.vmem %s0, %s248
      $region44: #{inconv_forward.1} parent=39 // pred_fallthru
        _
    $region40: #{inconv_forward.1} parent=5 // pred_fallthru
      _
    %p250 = scmp.le.s32.totalorder 1, %s13
    %p251 = scmp.lt.s32.totalorder %s13, 5
    %p252 = pnand %p250, %p251
    %p253 = pneg %p252
    // Predicated region
    $region45: #{inconv_forward.1} parent=5 // pred_check
      _
    $region46: #{inconv_forward.1} parent=5 // pred_check_branch
      %255 = sbr.rel (%p252) target = $region48
    $region47: #{inconv_forward.1} parent=5 // pred_region
      %s256 = ssub.s32 %s13, 1
      %p257 = scmp.lt.s32.totalorder %s22, 1
      %s258 = scalar_select %p257, %s22, 1
      %s259 = smul.addr %s258, 72
      %s260 = smul.addr %s259, 4
      %s261 = scalar_lea.vmem %s0, %s260
      %p262 = pneg %p51
      %p263 = pneg %p48
      %p264 = pneg %p72
      %p265 = pneg %p69
      %p266 = pneg %p93
      %p267 = pneg %p90
      %p268 = pneg %p114
      %p269 = pneg %p111
      %p270 = pneg %p135
      %p271 = pneg %p132
      %p272 = pneg %p156
      %p273 = pneg %p153
      %p274 = pneg %p177
      %p275 = pneg %p174
      %p276 = pneg %p205
      %p277 = pneg %p202
      %s278 = smul.u32 8, %s23
      %p279 = scmp.lt.s32.totalorder %s22, 1
      %s280 = scalar_select %p279, %s22, 1
      %p281 = scmp.lt.s32.totalorder %s278, 15
      %s282 = scalar_select %p281, %s278, 15
      %s283 = smul.addr %s282, 2
      %s284 = smul.addr %s280, 32
      %s285 = sadd.s32 %s283, %s284
      %s286 = smul.addr %s285, 4
      %s287 = scalar_lea.vmem %s7, %s286
      %p288 = scmp.lt.s32.totalorder %s22, 1
      %s289 = scalar_select %p288, %s22, 1
      %s290 = smul.addr %s289, 72
      %s291 = smul.addr %s290, 4
      %s292 = scalar_lea.vmem %s0, %s291
      %s293 = smul.u32 8, %s23
      %p294 = scmp.lt.s32.totalorder %s22, 1
      %s295 = scalar_select %p294, %s22, 1
      %p296 = scmp.lt.s32.totalorder %s293, 15
      %s297 = scalar_select %p296, %s293, 15
      %s298 = smul.addr %s297, 2
      %s299 = smul.addr %s295, 32
      %s300 = sadd.s32 %s298, %s299
      %s301 = smul.addr %s300, 4
      %s302 = scalar_lea.vmem %s7, %s301
      %s303 = smul.u32 8, %s23
      %s305 = smul.u32 %s23, 8
      %s306 = smul.u32 %s305, 4
      %s307 = smul.addr %s306, 4
      %s308 = scalar_lea.vmem %s292, %s307
      %v309 = vld [vmem:[%s308] sm:$0xf]
      %v310 = vld [vmem:[%s308 + $0x4] sm:$0xf]
      %v311 = vld [vmem:[%s308 + $0x8] sm:$0xf]
      %v312 = vld [vmem:[%s308 + $0xc] sm:$0xf]
      %v313 = vld [vmem:[%s308 + $0x10] sm:$0xf]
      %v314 = vld [vmem:[%s308 + $0x14] sm:$0xf]
      %v315 = vld [vmem:[%s308 + $0x18] sm:$0xf]
      %v316 = vld [vmem:[%s308 + $0x1c] sm:$0xf]
      %v317 = vld [vmem:[%s308 + $0x20] sm:$0xf]
      %v318 = vld [vmem:[%s308 + $0x24] sm:$0xf]
      %v319 = vld [vmem:[%s308 + $0x28] sm:$0xf]
      %v320 = vld [vmem:[%s308 + $0x2c] sm:$0xf]
      %v321 = vld [vmem:[%s308 + $0x30] sm:$0xf]
      %v322 = vld [vmem:[%s308 + $0x34] sm:$0xf]
      %v323 = vld [vmem:[%s308 + $0x38] sm:$0xf]
      %v324 = vld [vmem:[%s308 + $0x3c] sm:$0xf]
      %v325 = vld [vmem:[%s308 + $0x40] sm:$0xf]
      %v326 = vld [vmem:[%s308 + $0x44] sm:$0xf]
      %v327 = vld [vmem:[%s308 + $0x48] sm:$0xf]
      %v328 = vld [vmem:[%s308 + $0x4c] sm:$0xf]
      %v329 = vld [vmem:[%s308 + $0x50] sm:$0xf]
      %v330 = vld [vmem:[%s308 + $0x54] sm:$0xf]
      %v331 = vld [vmem:[%s308 + $0x58] sm:$0xf]
      %v332 = vld [vmem:[%s308 + $0x5c] sm:$0xf]
      %v333 = vld [vmem:[%s308 + $0x60] sm:$0xf]
      %v334 = vld [vmem:[%s308 + $0x64] sm:$0xf]
      %v335 = vld [vmem:[%s308 + $0x68] sm:$0xf]
      %v336 = vld [vmem:[%s308 + $0x6c] sm:$0xf]
      %v337 = vld [vmem:[%s308 + $0x70] sm:$0xf]
      %v338 = vld [vmem:[%s308 + $0x74] sm:$0xf]
      %v339 = vld [vmem:[%s308 + $0x78] sm:$0xf]
      %v340 = vld [vmem:[%s308 + $0x7c] sm:$0xf]
      %v341 = vld [vmem:[%s308 + $0x80] sm:$0xf]
      %v342 = vld [vmem:[%s308 + $0x84] sm:$0xf]
      %v343 = vld [vmem:[%s308 + $0x88] sm:$0xf]
      %v344 = vld [vmem:[%s308 + $0x8c] sm:$0xf]
      %v345 = vld [vmem:[%s308 + $0x90] sm:$0xf]
      %v346 = vld [vmem:[%s308 + $0x94] sm:$0xf]
      %v347 = vld [vmem:[%s308 + $0x98] sm:$0xf]
      %v348 = vld [vmem:[%s308 + $0x9c] sm:$0xf]
      %v349 = vld [vmem:[%s1] sm:$0xf]
      %v350 = vld [vmem:[%s1 + $0x4] sm:$0xf]
      %v351 = vld [vmem:[%s1 + $0x8] sm:$0xf]
      %v352 = vld [vmem:[%s1 + $0xc] sm:$0xf]
      %v353 = vld [vmem:[%s1 + $0x10] sm:$0x3]
      %v394 = vunpack.c.l.b16 %v309
      %v395 = vunpack.c.l.b16 %v310
      %v396 = vunpack.c.l.b16 %v311
      %v397 = vunpack.c.l.b16 %v312
      %v398 = vunpack.c.l.b16 %v313
      %v399 = vunpack.c.l.b16 %v314
      %v400 = vunpack.c.l.b16 %v315
      %v401 = vunpack.c.l.b16 %v316
      %v402 = vunpack.c.l.b16 %v317
      %v403 = vunpack.c.l.b16 %v318
      %v404 = vunpack.c.l.b16 %v319
      %v405 = vunpack.c.l.b16 %v320
      %v406 = vunpack.c.l.b16 %v321
      %v407 = vunpack.c.l.b16 %v322
      %v408 = vunpack.c.l.b16 %v323
      %v409 = vunpack.c.l.b16 %v324
      %v410 = vunpack.c.l.b16 %v325
      %v411 = vunpack.c.l.b16 %v326
      %v412 = vunpack.c.l.b16 %v327
      %v413 = vunpack.c.l.b16 %v328
      %v414 = vunpack.c.l.b16 %v329
      %v415 = vunpack.c.l.b16 %v330
      %v416 = vunpack.c.l.b16 %v331
      %v417 = vunpack.c.l.b16 %v332
      %v418 = vunpack.c.l.b16 %v333
      %v419 = vunpack.c.l.b16 %v334
      %v420 = vunpack.c.l.b16 %v335
      %v421 = vunpack.c.l.b16 %v336
      %v422 = vunpack.c.l.b16 %v337
      %v423 = vunpack.c.l.b16 %v338
      %v424 = vunpack.c.l.b16 %v339
      %v425 = vunpack.c.l.b16 %v340
      %v426 = vunpack.c.l.b16 %v341
      %v427 = vunpack.c.l.b16 %v342
      %v428 = vunpack.c.l.b16 %v343
      %v429 = vunpack.c.l.b16 %v344
      %v430 = vunpack.c.l.b16 %v345
      %v431 = vunpack.c.l.b16 %v346
      %v432 = vunpack.c.l.b16 %v347
      %v433 = vunpack.c.l.b16 %v348
      %v434 = vpack.c.b16 %v395, %v394
      %v435 = vpack.c.b16 %v397, %v396
      %v436 = vpack.c.b16 %v399, %v398
      %v437 = vpack.c.b16 %v401, %v400
      %v438 = vpack.c.b16 %v403, %v402
      %v439 = vpack.c.b16 %v405, %v404
      %v440 = vpack.c.b16 %v407, %v406
      %v441 = vpack.c.b16 %v409, %v408
      %v442 = vpack.c.b16 %v411, %v410
      %v443 = vpack.c.b16 %v413, %v412
      %v444 = vpack.c.b16 %v415, %v414
      %v445 = vpack.c.b16 %v417, %v416
      %v446 = vpack.c.b16 %v419, %v418
      %v447 = vpack.c.b16 %v421, %v420
      %v448 = vpack.c.b16 %v423, %v422
      %v449 = vpack.c.b16 %v425, %v424
      %v450 = vpack.c.b16 %v427, %v426
      %v451 = vpack.c.b16 %v429, %v428
      %v452 = vpack.c.b16 %v431, %v430
      %v453 = vpack.c.b16 %v433, %v432
      %v459 = vunpack.c.l.b16 %v349
      %v460 = vunpack.c.l.b16 %v350
      %v461 = vunpack.c.l.b16 %v351
      %v462 = vunpack.c.l.b16 %v352
      %v463 = vunpack.c.l.b16 %v353
      %v464 = vpack.c.b16 %v460, %v459
      %v465 = vpack.c.b16 %v462, %v461
      %v466 = vpack.c.b16 %v463, %v463
      %vm469 = vcmask 293888
      %v471 = vsel %vm469, %v434, 0
      %v474 = vsel %vm469, %v435, 0
      %v477 = vsel %vm469, %v436, 0
      %v480 = vsel %vm469, %v437, 0
      %v483 = vsel %vm469, %v438, 0
      %v486 = vsel %vm469, %v439, 0
      %v489 = vsel %vm469, %v440, 0
      %v492 = vsel %vm469, %v441, 0
      %v495 = vsel %vm469, %v442, 0
      %v498 = vsel %vm469, %v443, 0
      %v501 = vsel %vm469, %v444, 0
      %v504 = vsel %vm469, %v445, 0
      %v507 = vsel %vm469, %v446, 0
      %v510 = vsel %vm469, %v447, 0
      %v513 = vsel %vm469, %v448, 0
      %v516 = vsel %vm469, %v449, 0
      %v519 = vsel %vm469, %v450, 0
      %v522 = vsel %vm469, %v451, 0
      %v525 = vsel %vm469, %v452, 0
      %v528 = vsel %vm469, %v453, 0
      %vm530 = vcmask 1041408
      %v532 = vsel %vm530, %v466, 0
      %534 = vmatprep.subr.bf16.mxu0 0
      %535 = vmatpush1.bf16.msra.mxu0 0
      %536 = vmatprep.subr.bf16.mxu0 0
      %537 = vmatpush1.bf16.msra.mxu0 0
      %538 = vmatprep.subr.bf16.mxu0 0
      %539 = vmatpush1.bf16.msra.mxu0 0
      %540 = vmatprep.subr.bf16.mxu0 0
      %541 = vmatpush1.bf16.msra.mxu0 0
      %542 = vmatprep.subr.bf16.mxu0 0
      %543 = vmatpush1.bf16.msra.mxu0 0
      %544 = vmatprep.subr.bf16.mxu0 0
      %545 = vmatpush1.bf16.msra.mxu0 %v532
      %546 = vmatprep.subr.bf16.mxu0 0
      %547 = vmatpush1.bf16.msra.mxu0 %v465
      %548 = vmatprep.subr.bf16.mxu0 0
      %549 = vmatpush1.bf16.msra.mxu0 %v464
      %550 = vmatprep.subr.bf16.mxu0 0
      %551 = vmatpush2.bf16.msra.mxu0 0
      %552 = vmatprep.subr.bf16.mxu0 0
      %553 = vmatpush2.bf16.msra.mxu0 0
      %554 = vmatprep.subr.bf16.mxu0 0
      %555 = vmatpush2.bf16.msra.mxu0 0
      %556 = vmatprep.subr.bf16.mxu0 0
      %557 = vmatpush2.bf16.msra.mxu0 0
      %558 = vmatprep.subr.bf16.mxu0 0
      %559 = vmatpush2.bf16.msra.mxu0 0
      %560 = vmatprep.subr.bf16.mxu0 0
      %561 = vmatpush2.bf16.msra.mxu0 0
      %562 = vmatprep.subr.bf16.mxu0 0
      %563 = vmatpush2.bf16.msra.mxu0 0
      %564 = vmatprep.subr.bf16.mxu0 0
      %565 = vmatpush2.bf16.msra.mxu0 0
      %566 = vmatprep.mubr.bf16.mxu0 0
      %567 = vmatmul.mubr.bf16.gmra.mxu0 %v471
      %v568 = vpop.f32.mrf.mxu0
      %v569 = vadd.f32 0.0, %v568
      %v570 = vpop.f32.mrf.mxu0
      %v571 = vpop.f32.mrf.mxu0
      %v572 = vadd.f32 0.0, %v571
      %v573 = vpop.f32.mrf.mxu0
      %574 = vmatprep.mubr.bf16.mxu0 0
      %575 = vmatmul.mubr.bf16.gmra.mxu0 %v474
      %v576 = vpop.f32.mrf.mxu0
      %v577 = vadd.f32 0.0, %v576
      %v578 = vpop.f32.mrf.mxu0
      %v579 = vpop.f32.mrf.mxu0
      %v580 = vadd.f32 0.0, %v579
      %v581 = vpop.f32.mrf.mxu0
      %582 = vmatprep.mubr.bf16.mxu0 0
      %583 = vmatmul.mubr.bf16.gmra.mxu0 %v477
      %v584 = vpop.f32.mrf.mxu0
      %v585 = vadd.f32 0.0, %v584
      %v586 = vpop.f32.mrf.mxu0
      %v587 = vpop.f32.mrf.mxu0
      %v588 = vadd.f32 0.0, %v587
      %v589 = vpop.f32.mrf.mxu0
      %590 = vmatprep.mubr.bf16.mxu0 0
      %591 = vmatmul.mubr.bf16.gmra.mxu0 %v480
      %v592 = vpop.f32.mrf.mxu0
      %v593 = vadd.f32 0.0, %v592
      %v594 = vpop.f32.mrf.mxu0
      %v595 = vpop.f32.mrf.mxu0
      %v596 = vadd.f32 0.0, %v595
      %v597 = vpop.f32.mrf.mxu0
      %598 = vmatprep.mubr.bf16.mxu0 0
      %599 = vmatmul.mubr.bf16.gmra.mxu0 %v483
      %v600 = vpop.f32.mrf.mxu0
      %v601 = vadd.f32 0.0, %v600
      %v602 = vpop.f32.mrf.mxu0
      %v603 = vpop.f32.mrf.mxu0
      %v604 = vadd.f32 0.0, %v603
      %v605 = vpop.f32.mrf.mxu0
      %606 = vmatprep.mubr.bf16.mxu0 0
      %607 = vmatmul.mubr.bf16.gmra.mxu0 %v486
      %v608 = vpop.f32.mrf.mxu0
      %v609 = vadd.f32 0.0, %v608
      %v610 = vpop.f32.mrf.mxu0
      %v611 = vpop.f32.mrf.mxu0
      %v612 = vadd.f32 0.0, %v611
      %v613 = vpop.f32.mrf.mxu0
      %614 = vmatprep.mubr.bf16.mxu0 0
      %615 = vmatmul.mubr.bf16.gmra.mxu0 %v489
      %v616 = vpop.f32.mrf.mxu0
      %v617 = vadd.f32 0.0, %v616
      %v618 = vpop.f32.mrf.mxu0
      %v619 = vpop.f32.mrf.mxu0
      %v620 = vadd.f32 0.0, %v619
      %v621 = vpop.f32.mrf.mxu0
      %622 = vmatprep.mubr.bf16.mxu0 0
      %623 = vmatmul.mubr.bf16.gmra.mxu0 %v492
      %v624 = vpop.f32.mrf.mxu0
      %v625 = vadd.f32 0.0, %v624
      %v626 = vpop.f32.mrf.mxu0
      %v627 = vpop.f32.mrf.mxu0
      %v628 = vadd.f32 0.0, %v627
      %v629 = vpop.f32.mrf.mxu0
      %630 = vmatprep.mubr.bf16.mxu0 0
      %631 = vmatmul.mubr.bf16.gmra.mxu0 %v495
      %v632 = vpop.f32.mrf.mxu0
      %v633 = vadd.f32 0.0, %v632
      %v634 = vpop.f32.mrf.mxu0
      %v635 = vpop.f32.mrf.mxu0
      %v636 = vadd.f32 0.0, %v635
      %v637 = vpop.f32.mrf.mxu0
      %638 = vmatprep.mubr.bf16.mxu0 0
      %639 = vmatmul.mubr.bf16.gmra.mxu0 %v498
      %v640 = vpop.f32.mrf.mxu0
      %v641 = vadd.f32 0.0, %v640
      %v642 = vpop.f32.mrf.mxu0
      %v643 = vpop.f32.mrf.mxu0
      %v644 = vadd.f32 0.0, %v643
      %v645 = vpop.f32.mrf.mxu0
      %646 = vmatprep.mubr.bf16.mxu0 0
      %647 = vmatmul.mubr.bf16.gmra.mxu0 %v501
      %v648 = vpop.f32.mrf.mxu0
      %v649 = vadd.f32 0.0, %v648
      %v650 = vpop.f32.mrf.mxu0
      %v651 = vpop.f32.mrf.mxu0
      %v652 = vadd.f32 0.0, %v651
      %v653 = vpop.f32.mrf.mxu0
      %654 = vmatprep.mubr.bf16.mxu0 0
      %655 = vmatmul.mubr.bf16.gmra.mxu0 %v504
      %v656 = vpop.f32.mrf.mxu0
      %v657 = vadd.f32 0.0, %v656
      %v658 = vpop.f32.mrf.mxu0
      %v659 = vpop.f32.mrf.mxu0
      %v660 = vadd.f32 0.0, %v659
      %v661 = vpop.f32.mrf.mxu0
      %662 = vmatprep.mubr.bf16.mxu0 0
      %663 = vmatmul.mubr.bf16.gmra.mxu0 %v507
      %v664 = vpop.f32.mrf.mxu0
      %v665 = vadd.f32 0.0, %v664
      %v666 = vpop.f32.mrf.mxu0
      %v667 = vpop.f32.mrf.mxu0
      %v668 = vadd.f32 0.0, %v667
      %v669 = vpop.f32.mrf.mxu0
      %670 = vmatprep.mubr.bf16.mxu0 0
      %671 = vmatmul.mubr.bf16.gmra.mxu0 %v510
      %v672 = vpop.f32.mrf.mxu0
      %v673 = vadd.f32 0.0, %v672
      %v674 = vpop.f32.mrf.mxu0
      %v675 = vpop.f32.mrf.mxu0
      %v676 = vadd.f32 0.0, %v675
      %v677 = vpop.f32.mrf.mxu0
      %678 = vmatprep.mubr.bf16.mxu0 0
      %679 = vmatmul.mubr.bf16.gmra.mxu0 %v513
      %v680 = vpop.f32.mrf.mxu0
      %v681 = vadd.f32 0.0, %v680
      %v682 = vpop.f32.mrf.mxu0
      %v683 = vpop.f32.mrf.mxu0
      %v684 = vadd.f32 0.0, %v683
      %v685 = vpop.f32.mrf.mxu0
      %686 = vmatprep.mubr.bf16.mxu0 0
      %687 = vmatmul.mubr.bf16.gmra.mxu0 %v516
      %v688 = vpop.f32.mrf.mxu0
      %v689 = vadd.f32 0.0, %v688
      %v690 = vpop.f32.mrf.mxu0
      %v691 = vpop.f32.mrf.mxu0
      %v692 = vadd.f32 0.0, %v691
      %v693 = vpop.f32.mrf.mxu0
      %694 = vmatprep.mubr.bf16.mxu0 0
      %695 = vmatmul.mubr.bf16.gmra.mxu0 %v519
      %v696 = vpop.f32.mrf.mxu0
      %v697 = vadd.f32 0.0, %v696
      %v698 = vpop.f32.mrf.mxu0
      %v699 = vpop.f32.mrf.mxu0
      %v700 = vadd.f32 0.0, %v699
      %v701 = vpop.f32.mrf.mxu0
      %702 = vmatprep.mubr.bf16.mxu0 0
      %703 = vmatmul.mubr.bf16.gmra.mxu0 %v522
      %v704 = vpop.f32.mrf.mxu0
      %v705 = vadd.f32 0.0, %v704
      %v706 = vpop.f32.mrf.mxu0
      %v707 = vpop.f32.mrf.mxu0
      %v708 = vadd.f32 0.0, %v707
      %v709 = vpop.f32.mrf.mxu0
      %710 = vmatprep.mubr.bf16.mxu0 0
      %711 = vmatmul.mubr.bf16.gmra.mxu0 %v525
      %v712 = vpop.f32.mrf.mxu0
      %v713 = vadd.f32 0.0, %v712
      %v714 = vpop.f32.mrf.mxu0
      %v715 = vpop.f32.mrf.mxu0
      %v716 = vadd.f32 0.0, %v715
      %v717 = vpop.f32.mrf.mxu0
      %718 = vmatprep.mubr.bf16.mxu0 0
      %719 = vmatmul.mubr.bf16.gmra.mxu0 %v528
      %v720 = vpop.f32.mrf.mxu0
      %v721 = vadd.f32 0.0, %v720
      %v722 = vpop.f32.mrf.mxu0
      %v723 = vpop.f32.mrf.mxu0
      %v724 = vadd.f32 0.0, %v723
      %v725 = vpop.f32.mrf.mxu0
      %726 = vdwg.mxu0
      %v727 = vld [vmem:[%s2] sm:$0x1]
      %v729 = vlaneseq
      %v730 = vshrl.u32 %v729, 7
      %v731 = vsub.s32 0, %v730
      %v732 = vrot.slane %v727, %v731
      %v734 = vmul.f32 %v569, %v732
      %v735 = vmul.f32 %v572, %v732
      %v736 = vmul.f32 %v577, %v732
      %v737 = vmul.f32 %v580, %v732
      %v738 = vmul.f32 %v585, %v732
      %v739 = vmul.f32 %v588, %v732
      %v740 = vmul.f32 %v593, %v732
      %v741 = vmul.f32 %v596, %v732
      %v742 = vmul.f32 %v601, %v732
      %v743 = vmul.f32 %v604, %v732
      %v744 = vmul.f32 %v609, %v732
      %v745 = vmul.f32 %v612, %v732
      %v746 = vmul.f32 %v617, %v732
      %v747 = vmul.f32 %v620, %v732
      %v748 = vmul.f32 %v625, %v732
      %v749 = vmul.f32 %v628, %v732
      %v750 = vmul.f32 %v633, %v732
      %v751 = vmul.f32 %v636, %v732
      %v752 = vmul.f32 %v641, %v732
      %v753 = vmul.f32 %v644, %v732
      %v754 = vmul.f32 %v649, %v732
      %v755 = vmul.f32 %v652, %v732
      %v756 = vmul.f32 %v657, %v732
      %v757 = vmul.f32 %v660, %v732
      %v758 = vmul.f32 %v665, %v732
      %v759 = vmul.f32 %v668, %v732
      %v760 = vmul.f32 %v673, %v732
      %v761 = vmul.f32 %v676, %v732
      %v762 = vmul.f32 %v681, %v732
      %v763 = vmul.f32 %v684, %v732
      %v764 = vmul.f32 %v689, %v732
      %v765 = vmul.f32 %v692, %v732
      %v766 = vmul.f32 %v697, %v732
      %v767 = vmul.f32 %v700, %v732
      %v768 = vmul.f32 %v705, %v732
      %v769 = vmul.f32 %v708, %v732
      %v770 = vmul.f32 %v713, %v732
      %v771 = vmul.f32 %v716, %v732
      %v772 = vmul.f32 %v721, %v732
      %v773 = vmul.f32 %v724, %v732
      %v774 = vld [vmem:[%s3] sm:$0x1]
      %v776 = vlaneseq
      %v777 = vshrl.u32 %v776, 7
      %v778 = vsub.s32 0, %v777
      %v779 = vrot.slane %v774, %v778
      %v781 = vadd.f32 %v734, %v779
      %v782 = vadd.f32 %v735, %v779
      %v783 = vadd.f32 %v736, %v779
      %v784 = vadd.f32 %v737, %v779
      %v785 = vadd.f32 %v738, %v779
      %v786 = vadd.f32 %v739, %v779
      %v787 = vadd.f32 %v740, %v779
      %v788 = vadd.f32 %v741, %v779
      %v789 = vadd.f32 %v742, %v779
      %v790 = vadd.f32 %v743, %v779
      %v791 = vadd.f32 %v744, %v779
      %v792 = vadd.f32 %v745, %v779
      %v793 = vadd.f32 %v746, %v779
      %v794 = vadd.f32 %v747, %v779
      %v795 = vadd.f32 %v748, %v779
      %v796 = vadd.f32 %v749, %v779
      %v797 = vadd.f32 %v750, %v779
      %v798 = vadd.f32 %v751, %v779
      %v799 = vadd.f32 %v752, %v779
      %v800 = vadd.f32 %v753, %v779
      %v801 = vadd.f32 %v754, %v779
      %v802 = vadd.f32 %v755, %v779
      %v803 = vadd.f32 %v756, %v779
      %v804 = vadd.f32 %v757, %v779
      %v805 = vadd.f32 %v758, %v779
      %v806 = vadd.f32 %v759, %v779
      %v807 = vadd.f32 %v760, %v779
      %v808 = vadd.f32 %v761, %v779
      %v809 = vadd.f32 %v762, %v779
      %v810 = vadd.f32 %v763, %v779
      %v811 = vadd.f32 %v764, %v779
      %v812 = vadd.f32 %v765, %v779
      %v813 = vadd.f32 %v766, %v779
      %v814 = vadd.f32 %v767, %v779
      %v815 = vadd.f32 %v768, %v779
      %v816 = vadd.f32 %v769, %v779
      %v817 = vadd.f32 %v770, %v779
      %v818 = vadd.f32 %v771, %v779
      %v819 = vadd.f32 %v772, %v779
      %v820 = vadd.f32 %v773, %v779
      %v821 = vmax.f32 %v781, 0.0
      %v822 = vmax.f32 %v782, 0.0
      %v823 = vmax.f32 %v783, 0.0
      %v824 = vmax.f32 %v784, 0.0
      %v825 = vmax.f32 %v785, 0.0
      %v826 = vmax.f32 %v786, 0.0
      %v827 = vmax.f32 %v787, 0.0
      %v828 = vmax.f32 %v788, 0.0
      %v829 = vmax.f32 %v789, 0.0
      %v830 = vmax.f32 %v790, 0.0
      %v831 = vmax.f32 %v791, 0.0
      %v832 = vmax.f32 %v792, 0.0
      %v833 = vmax.f32 %v793, 0.0
      %v834 = vmax.f32 %v794, 0.0
      %v835 = vmax.f32 %v795, 0.0
      %v836 = vmax.f32 %v796, 0.0
      %v837 = vmax.f32 %v797, 0.0
      %v838 = vmax.f32 %v798, 0.0
      %v839 = vmax.f32 %v799, 0.0
      %v840 = vmax.f32 %v800, 0.0
      %v841 = vmax.f32 %v801, 0.0
      %v842 = vmax.f32 %v802, 0.0
      %v843 = vmax.f32 %v803, 0.0
      %v844 = vmax.f32 %v804, 0.0
      %v845 = vmax.f32 %v805, 0.0
      %v846 = vmax.f32 %v806, 0.0
      %v847 = vmax.f32 %v807, 0.0
      %v848 = vmax.f32 %v808, 0.0
      %v849 = vmax.f32 %v809, 0.0
      %v850 = vmax.f32 %v810, 0.0
      %v851 = vmax.f32 %v811, 0.0
      %v852 = vmax.f32 %v812, 0.0
      %v853 = vmax.f32 %v813, 0.0
      %v854 = vmax.f32 %v814, 0.0
      %v855 = vmax.f32 %v815, 0.0
      %v856 = vmax.f32 %v816, 0.0
      %v857 = vmax.f32 %v817, 0.0
      %v858 = vmax.f32 %v818, 0.0
      %v859 = vmax.f32 %v819, 0.0
      %v860 = vmax.f32 %v820, 0.0
      %v861 = vstv %s305
      %v862 = vadd.s32 %v861, 1
      %v863 = vadd.s32 %v861, 2
      %v864 = vadd.s32 %v861, 3
      %v865 = vadd.s32 %v861, 4
      %v866 = vadd.s32 %v861, 5
      %v867 = vadd.s32 %v861, 6
      %v868 = vadd.s32 %v861, 7
      %v869 = vadd.s32 %v861, 8
      %v870 = vadd.s32 %v861, 9
      %v871 = vlaneseq
      %v872 = vshrl.u32 %v871, 7
      %v873 = vadd.s32 %v872, 8
      %v874 = vadd.s32 %v872, 16
      %v875 = vadd.s32 %v872, 24
      %vm876 = vcmp.ge.s32.totalorder %v861, 1
      %vm877 = vcmp.ge.s32.totalorder %v862, 1
      %vm878 = vcmp.ge.s32.totalorder %v863, 1
      %vm879 = vcmp.ge.s32.totalorder %v864, 1
      %vm880 = vcmp.ge.s32.totalorder %v865, 1
      %vm881 = vcmp.ge.s32.totalorder %v866, 1
      %vm882 = vcmp.ge.s32.totalorder %v867, 1
      %vm883 = vcmp.ge.s32.totalorder %v868, 1
      %vm884 = vcmp.ge.s32.totalorder %v869, 1
      %vm885 = vcmp.ge.s32.totalorder %v870, 1
      %vm886 = vcmp.le.s32.totalorder %v861, 16
      %vm887 = vcmp.le.s32.totalorder %v862, 16
      %vm888 = vcmp.le.s32.totalorder %v863, 16
      %vm889 = vcmp.le.s32.totalorder %v864, 16
      %vm890 = vcmp.le.s32.totalorder %v865, 16
      %vm891 = vcmp.le.s32.totalorder %v866, 16
      %vm892 = vcmp.le.s32.totalorder %v867, 16
      %vm893 = vcmp.le.s32.totalorder %v868, 16
      %vm894 = vcmp.le.s32.totalorder %v869, 16
      %vm895 = vcmp.le.s32.totalorder %v870, 16
      %vm896 = vmand %vm876, %vm886
      %vm897 = vmand %vm877, %vm887
      %vm898 = vmand %vm878, %vm888
      %vm899 = vmand %vm879, %vm889
      %vm900 = vmand %vm880, %vm890
      %vm901 = vmand %vm881, %vm891
      %vm902 = vmand %vm882, %vm892
      %vm903 = vmand %vm883, %vm893
      %vm904 = vmand %vm884, %vm894
      %vm905 = vmand %vm885, %vm895
      %vm906 = vcmp.ge.s32.totalorder %v872, 1
      %vm907 = vcmp.ge.s32.totalorder %v873, 1
      %vm908 = vcmp.ge.s32.totalorder %v874, 1
      %vm909 = vcmp.ge.s32.totalorder %v875, 1
      %vm910 = vmand %vm896, %vm906
      %vm911 = vmand %vm896, %vm907
      %vm912 = vmand %vm896, %vm908
      %vm913 = vmand %vm896, %vm909
      %vm914 = vmand %vm897, %vm906
      %vm915 = vmand %vm897, %vm907
      %vm916 = vmand %vm897, %vm908
      %vm917 = vmand %vm897, %vm909
      %vm918 = vmand %vm898, %vm906
      %vm919 = vmand %vm898, %vm907
      %vm920 = vmand %vm898, %vm908
      %vm921 = vmand %vm898, %vm909
      %vm922 = vmand %vm899, %vm906
      %vm923 = vmand %vm899, %vm907
      %vm924 = vmand %vm899, %vm908
      %vm925 = vmand %vm899, %vm909
      %vm926 = vmand %vm900, %vm906
      %vm927 = vmand %vm900, %vm907
      %vm928 = vmand %vm900, %vm908
      %vm929 = vmand %vm900, %vm909
      %vm930 = vmand %vm901, %vm906
      %vm931 = vmand %vm901, %vm907
      %vm932 = vmand %vm901, %vm908
      %vm933 = vmand %vm901, %vm909
      %vm934 = vmand %vm902, %vm906
      %vm935 = vmand %vm902, %vm907
      %vm936 = vmand %vm902, %vm908
      %vm937 = vmand %vm902, %vm909
      %vm938 = vmand %vm903, %vm906
      %vm939 = vmand %vm903, %vm907
      %vm940 = vmand %vm903, %vm908
      %vm941 = vmand %vm903, %vm909
      %vm942 = vmand %vm904, %vm906
      %vm943 = vmand %vm904, %vm907
      %vm944 = vmand %vm904, %vm908
      %vm945 = vmand %vm904, %vm909
      %vm946 = vmand %vm905, %vm906
      %vm947 = vmand %vm905, %vm907
      %vm948 = vmand %vm905, %vm908
      %vm949 = vmand %vm905, %vm909
      %vm950 = vcmp.le.s32.totalorder %v872, 16
      %vm951 = vcmp.le.s32.totalorder %v873, 16
      %vm952 = vcmp.le.s32.totalorder %v874, 16
      %vm953 = vcmp.le.s32.totalorder %v875, 16
      %vm954 = vmand %vm910, %vm950
      %vm955 = vmand %vm911, %vm951
      %vm956 = vmand %vm912, %vm952
      %vm957 = vmand %vm913, %vm953
      %vm958 = vmand %vm914, %vm950
      %vm959 = vmand %vm915, %vm951
      %vm960 = vmand %vm916, %vm952
      %vm961 = vmand %vm917, %vm953
      %vm962 = vmand %vm918, %vm950
      %vm963 = vmand %vm919, %vm951
      %vm964 = vmand %vm920, %vm952
      %vm965 = vmand %vm921, %vm953
      %vm966 = vmand %vm922, %vm950
      %vm967 = vmand %vm923, %vm951
      %vm968 = vmand %vm924, %vm952
      %vm969 = vmand %vm925, %vm953
      %vm970 = vmand %vm926, %vm950
      %vm971 = vmand %vm927, %vm951
      %vm972 = vmand %vm928, %vm952
      %vm973 = vmand %vm929, %vm953
      %vm974 = vmand %vm930, %vm950
      %vm975 = vmand %vm931, %vm951
      %vm976 = vmand %vm932, %vm952
      %vm977 = vmand %vm933, %vm953
      %vm978 = vmand %vm934, %vm950
      %vm979 = vmand %vm935, %vm951
      %vm980 = vmand %vm936, %vm952
      %vm981 = vmand %vm937, %vm953
      %vm982 = vmand %vm938, %vm950
      %vm983 = vmand %vm939, %vm951
      %vm984 = vmand %vm940, %vm952
      %vm985 = vmand %vm941, %vm953
      %vm986 = vmand %vm942, %vm950
      %vm987 = vmand %vm943, %vm951
      %vm988 = vmand %vm944, %vm952
      %vm989 = vmand %vm945, %vm953
      %vm990 = vmand %vm946, %vm950
      %vm991 = vmand %vm947, %vm951
      %vm992 = vmand %vm948, %vm952
      %vm993 = vmand %vm949, %vm953
      %v994 = vsel %vm954, 1, 0
      %v995 = vsel %vm955, 1, 0
      %v996 = vsel %vm956, 1, 0
      %v997 = vsel %vm957, 1, 0
      %v998 = vsel %vm958, 1, 0
      %v999 = vsel %vm959, 1, 0
      %v1000 = vsel %vm960, 1, 0
      %v1001 = vsel %vm961, 1, 0
      %v1002 = vsel %vm962, 1, 0
      %v1003 = vsel %vm963, 1, 0
      %v1004 = vsel %vm964, 1, 0
      %v1005 = vsel %vm965, 1, 0
      %v1006 = vsel %vm966, 1, 0
      %v1007 = vsel %vm967, 1, 0
      %v1008 = vsel %vm968, 1, 0
      %v1009 = vsel %vm969, 1, 0
      %v1010 = vsel %vm970, 1, 0
      %v1011 = vsel %vm971, 1, 0
      %v1012 = vsel %vm972, 1, 0
      %v1013 = vsel %vm973, 1, 0
      %v1014 = vsel %vm974, 1, 0
      %v1015 = vsel %vm975, 1, 0
      %v1016 = vsel %vm976, 1, 0
      %v1017 = vsel %vm977, 1, 0
      %v1018 = vsel %vm978, 1, 0
      %v1019 = vsel %vm979, 1, 0
      %v1020 = vsel %vm980, 1, 0
      %v1021 = vsel %vm981, 1, 0
      %v1022 = vsel %vm982, 1, 0
      %v1023 = vsel %vm983, 1, 0
      %v1024 = vsel %vm984, 1, 0
      %v1025 = vsel %vm985, 1, 0
      %v1026 = vsel %vm986, 1, 0
      %v1027 = vsel %vm987, 1, 0
      %v1028 = vsel %vm988, 1, 0
      %v1029 = vsel %vm989, 1, 0
      %v1030 = vsel %vm990, 1, 0
      %v1031 = vsel %vm991, 1, 0
      %v1032 = vsel %vm992, 1, 0
      %v1033 = vsel %vm993, 1, 0
      %vm1034 = vcmp.eq.s32.totalorder %v994, 1
      %vm1035 = vcmp.eq.s32.totalorder %v995, 1
      %vm1036 = vcmp.eq.s32.totalorder %v996, 1
      %vm1037 = vcmp.eq.s32.totalorder %v997, 1
      %vm1038 = vcmp.eq.s32.totalorder %v998, 1
      %vm1039 = vcmp.eq.s32.totalorder %v999, 1
      %vm1040 = vcmp.eq.s32.totalorder %v1000, 1
      %vm1041 = vcmp.eq.s32.totalorder %v1001, 1
      %vm1042 = vcmp.eq.s32.totalorder %v1002, 1
      %vm1043 = vcmp.eq.s32.totalorder %v1003, 1
      %vm1044 = vcmp.eq.s32.totalorder %v1004, 1
      %vm1045 = vcmp.eq.s32.totalorder %v1005, 1
      %vm1046 = vcmp.eq.s32.totalorder %v1006, 1
      %vm1047 = vcmp.eq.s32.totalorder %v1007, 1
      %vm1048 = vcmp.eq.s32.totalorder %v1008, 1
      %vm1049 = vcmp.eq.s32.totalorder %v1009, 1
      %vm1050 = vcmp.eq.s32.totalorder %v1010, 1
      %vm1051 = vcmp.eq.s32.totalorder %v1011, 1
      %vm1052 = vcmp.eq.s32.totalorder %v1012, 1
      %vm1053 = vcmp.eq.s32.totalorder %v1013, 1
      %vm1054 = vcmp.eq.s32.totalorder %v1014, 1
      %vm1055 = vcmp.eq.s32.totalorder %v1015, 1
      %vm1056 = vcmp.eq.s32.totalorder %v1016, 1
      %vm1057 = vcmp.eq.s32.totalorder %v1017, 1
      %vm1058 = vcmp.eq.s32.totalorder %v1018, 1
      %vm1059 = vcmp.eq.s32.totalorder %v1019, 1
      %vm1060 = vcmp.eq.s32.totalorder %v1020, 1
      %vm1061 = vcmp.eq.s32.totalorder %v1021, 1
      %vm1062 = vcmp.eq.s32.totalorder %v1022, 1
      %vm1063 = vcmp.eq.s32.totalorder %v1023, 1
      %vm1064 = vcmp.eq.s32.totalorder %v1024, 1
      %vm1065 = vcmp.eq.s32.totalorder %v1025, 1
      %vm1066 = vcmp.eq.s32.totalorder %v1026, 1
      %vm1067 = vcmp.eq.s32.totalorder %v1027, 1
      %vm1068 = vcmp.eq.s32.totalorder %v1028, 1
      %vm1069 = vcmp.eq.s32.totalorder %v1029, 1
      %vm1070 = vcmp.eq.s32.totalorder %v1030, 1
      %vm1071 = vcmp.eq.s32.totalorder %v1031, 1
      %vm1072 = vcmp.eq.s32.totalorder %v1032, 1
      %vm1073 = vcmp.eq.s32.totalorder %v1033, 1
      %v1074 = vsel %vm1034, %v821, 0.0
      %v1075 = vsel %vm1035, %v822, 0.0
      %v1076 = vsel %vm1036, %v823, 0.0
      %v1077 = vsel %vm1037, %v824, 0.0
      %v1078 = vsel %vm1038, %v825, 0.0
      %v1079 = vsel %vm1039, %v826, 0.0
      %v1080 = vsel %vm1040, %v827, 0.0
      %v1081 = vsel %vm1041, %v828, 0.0
      %v1082 = vsel %vm1042, %v829, 0.0
      %v1083 = vsel %vm1043, %v830, 0.0
      %v1084 = vsel %vm1044, %v831, 0.0
      %v1085 = vsel %vm1045, %v832, 0.0
      %v1086 = vsel %vm1046, %v833, 0.0
      %v1087 = vsel %vm1047, %v834, 0.0
      %v1088 = vsel %vm1048, %v835, 0.0
      %v1089 = vsel %vm1049, %v836, 0.0
      %v1090 = vsel %vm1050, %v837, 0.0
      %v1091 = vsel %vm1051, %v838, 0.0
      %v1092 = vsel %vm1052, %v839, 0.0
      %v1093 = vsel %vm1053, %v840, 0.0
      %v1094 = vsel %vm1054, %v841, 0.0
      %v1095 = vsel %vm1055, %v842, 0.0
      %v1096 = vsel %vm1056, %v843, 0.0
      %v1097 = vsel %vm1057, %v844, 0.0
      %v1098 = vsel %vm1058, %v845, 0.0
      %v1099 = vsel %vm1059, %v846, 0.0
      %v1100 = vsel %vm1060, %v847, 0.0
      %v1101 = vsel %vm1061, %v848, 0.0
      %v1102 = vsel %vm1062, %v849, 0.0
      %v1103 = vsel %vm1063, %v850, 0.0
      %v1104 = vsel %vm1064, %v851, 0.0
      %v1105 = vsel %vm1065, %v852, 0.0
      %v1106 = vsel %vm1066, %v853, 0.0
      %v1107 = vsel %vm1067, %v854, 0.0
      %v1108 = vsel %vm1068, %v855, 0.0
      %v1109 = vsel %vm1069, %v856, 0.0
      %v1110 = vsel %vm1070, %v857, 0.0
      %v1111 = vsel %vm1071, %v858, 0.0
      %v1112 = vsel %vm1072, %v859, 0.0
      %v1113 = vsel %vm1073, %v860, 0.0
      %v1114 = vpack.c.bf16 %v1075, %v1074
      %v1115 = vpack.c.bf16 %v1077, %v1076
      %v1116 = vpack.c.bf16 %v1079, %v1078
      %v1117 = vpack.c.bf16 %v1081, %v1080
      %v1118 = vpack.c.bf16 %v1083, %v1082
      %v1119 = vpack.c.bf16 %v1085, %v1084
      %v1120 = vpack.c.bf16 %v1087, %v1086
      %v1121 = vpack.c.bf16 %v1089, %v1088
      %v1122 = vpack.c.bf16 %v1091, %v1090
      %v1123 = vpack.c.bf16 %v1093, %v1092
      %v1124 = vpack.c.bf16 %v1095, %v1094
      %v1125 = vpack.c.bf16 %v1097, %v1096
      %v1126 = vpack.c.bf16 %v1099, %v1098
      %v1127 = vpack.c.bf16 %v1101, %v1100
      %v1128 = vpack.c.bf16 %v1103, %v1102
      %v1129 = vpack.c.bf16 %v1105, %v1104
      %v1130 = vpack.c.bf16 %v1107, %v1106
      %v1131 = vpack.c.bf16 %v1109, %v1108
      %v1132 = vpack.c.bf16 %v1111, %v1110
      %v1133 = vpack.c.bf16 %v1113, %v1112
      %v1154 = vunpack.c.l.b16 %v1114
      %v1155 = vunpack.c.h.b16 %v1114
      %v1156 = vunpack.c.l.b16 %v1115
      %v1157 = vunpack.c.h.b16 %v1115
      %v1158 = vunpack.c.l.b16 %v1116
      %v1159 = vunpack.c.h.b16 %v1116
      %v1160 = vunpack.c.l.b16 %v1117
      %v1161 = vunpack.c.h.b16 %v1117
      %v1162 = vunpack.c.l.b16 %v1118
      %v1163 = vunpack.c.h.b16 %v1118
      %v1164 = vunpack.c.l.b16 %v1119
      %v1165 = vunpack.c.h.b16 %v1119
      %v1166 = vunpack.c.l.b16 %v1120
      %v1167 = vunpack.c.h.b16 %v1120
      %v1168 = vunpack.c.l.b16 %v1121
      %v1169 = vunpack.c.h.b16 %v1121
      %v1170 = vunpack.c.l.b16 %v1122
      %v1171 = vunpack.c.h.b16 %v1122
      %v1172 = vunpack.c.l.b16 %v1123
      %v1173 = vunpack.c.h.b16 %v1123
      %v1174 = vunpack.c.l.b16 %v1124
      %v1175 = vunpack.c.h.b16 %v1124
      %v1176 = vunpack.c.l.b16 %v1125
      %v1177 = vunpack.c.h.b16 %v1125
      %v1178 = vunpack.c.l.b16 %v1126
      %v1179 = vunpack.c.h.b16 %v1126
      %v1180 = vunpack.c.l.b16 %v1127
      %v1181 = vunpack.c.h.b16 %v1127
      %v1182 = vunpack.c.l.b16 %v1128
      %v1183 = vunpack.c.h.b16 %v1128
      %v1184 = vunpack.c.l.b16 %v1129
      %v1185 = vunpack.c.h.b16 %v1129
      %v1186 = vunpack.c.l.b16 %v1130
      %v1187 = vunpack.c.h.b16 %v1130
      %v1188 = vunpack.c.l.b16 %v1131
      %v1189 = vunpack.c.h.b16 %v1131
      %v1190 = vunpack.c.l.b16 %v1132
      %v1191 = vunpack.c.h.b16 %v1132
      %v1192 = vunpack.c.l.b16 %v1133
      %v1193 = vunpack.c.h.b16 %v1133
      %v1194 = vpack.c.b16 %v1154, %v1154
      %v1195 = vpack.c.b16 %v1155, %v1155
      %v1196 = vpack.c.b16 %v1156, %v1156
      %v1197 = vpack.c.b16 %v1157, %v1157
      %v1198 = vpack.c.b16 %v1158, %v1158
      %v1199 = vpack.c.b16 %v1159, %v1159
      %v1200 = vpack.c.b16 %v1160, %v1160
      %v1201 = vpack.c.b16 %v1161, %v1161
      %v1202 = vpack.c.b16 %v1162, %v1162
      %v1203 = vpack.c.b16 %v1163, %v1163
      %v1204 = vpack.c.b16 %v1164, %v1164
      %v1205 = vpack.c.b16 %v1165, %v1165
      %v1206 = vpack.c.b16 %v1166, %v1166
      %v1207 = vpack.c.b16 %v1167, %v1167
      %v1208 = vpack.c.b16 %v1168, %v1168
      %v1209 = vpack.c.b16 %v1169, %v1169
      %v1210 = vpack.c.b16 %v1170, %v1170
      %v1211 = vpack.c.b16 %v1171, %v1171
      %v1212 = vpack.c.b16 %v1172, %v1172
      %v1213 = vpack.c.b16 %v1173, %v1173
      %v1214 = vpack.c.b16 %v1174, %v1174
      %v1215 = vpack.c.b16 %v1175, %v1175
      %v1216 = vpack.c.b16 %v1176, %v1176
      %v1217 = vpack.c.b16 %v1177, %v1177
      %v1218 = vpack.c.b16 %v1178, %v1178
      %v1219 = vpack.c.b16 %v1179, %v1179
      %v1220 = vpack.c.b16 %v1180, %v1180
      %v1221 = vpack.c.b16 %v1181, %v1181
      %v1222 = vpack.c.b16 %v1182, %v1182
      %v1223 = vpack.c.b16 %v1183, %v1183
      %v1224 = vpack.c.b16 %v1184, %v1184
      %v1225 = vpack.c.b16 %v1185, %v1185
      %v1226 = vpack.c.b16 %v1186, %v1186
      %v1227 = vpack.c.b16 %v1187, %v1187
      %v1228 = vpack.c.b16 %v1188, %v1188
      %v1229 = vpack.c.b16 %v1189, %v1189
      %v1230 = vpack.c.b16 %v1190, %v1190
      %v1231 = vpack.c.b16 %v1191, %v1191
      %v1232 = vpack.c.b16 %v1192, %v1192
      %v1233 = vpack.c.b16 %v1193, %v1193
      %1274 = vst [vmem:[#allocation2] sm:$0xf] %v1194
      %1275 = vst [vmem:[#allocation2 + $0x4] sm:$0xf] %v1195
      %1276 = vst [vmem:[#allocation2 + $0x8] sm:$0xf] %v1196
      %1277 = vst [vmem:[#allocation2 + $0xc] sm:$0xf] %v1197
      %1278 = vst [vmem:[#allocation2 + $0x10] sm:$0xf] %v1198
      %1279 = vst [vmem:[#allocation2 + $0x14] sm:$0xf] %v1199
      %1280 = vst [vmem:[#allocation2 + $0x18] sm:$0xf] %v1200
      %1281 = vst [vmem:[#allocation2 + $0x1c] sm:$0xf] %v1201
      %1282 = vst [vmem:[#allocation2 + $0x20] sm:$0xf] %v1202
      %1283 = vst [vmem:[#allocation2 + $0x24] sm:$0xf] %v1203
      %1284 = vst [vmem:[#allocation2 + $0x28] sm:$0xf] %v1204
      %1285 = vst [vmem:[#allocation2 + $0x2c] sm:$0xf] %v1205
      %1286 = vst [vmem:[#allocation2 + $0x30] sm:$0xf] %v1206
      %1287 = vst [vmem:[#allocation2 + $0x34] sm:$0xf] %v1207
      %1288 = vst [vmem:[#allocation2 + $0x38] sm:$0xf] %v1208
      %1289 = vst [vmem:[#allocation2 + $0x3c] sm:$0xf] %v1209
      %1290 = vst [vmem:[#allocation2 + $0x40] sm:$0xf] %v1210
      %1291 = vst [vmem:[#allocation2 + $0x44] sm:$0xf] %v1211
      %1292 = vst [vmem:[#allocation2 + $0x48] sm:$0xf] %v1212
      %1293 = vst [vmem:[#allocation2 + $0x4c] sm:$0xf] %v1213
      %1294 = vst [vmem:[#allocation2 + $0x50] sm:$0xf] %v1214
      %1295 = vst [vmem:[#allocation2 + $0x54] sm:$0xf] %v1215
      %1296 = vst [vmem:[#allocation2 + $0x58] sm:$0xf] %v1216
      %1297 = vst [vmem:[#allocation2 + $0x5c] sm:$0xf] %v1217
      %1298 = vst [vmem:[#allocation2 + $0x60] sm:$0xf] %v1218
      %1299 = vst [vmem:[#allocation2 + $0x64] sm:$0xf] %v1219
      %1300 = vst [vmem:[#allocation2 + $0x68] sm:$0xf] %v1220
      %1301 = vst [vmem:[#allocation2 + $0x6c] sm:$0xf] %v1221
      %1302 = vst [vmem:[#allocation2 + $0x70] sm:$0xf] %v1222
      %1303 = vst [vmem:[#allocation2 + $0x74] sm:$0xf] %v1223
      %1304 = vst [vmem:[#allocation2 + $0x78] sm:$0xf] %v1224
      %1305 = vst [vmem:[#allocation2 + $0x7c] sm:$0xf] %v1225
      %1306 = vst [vmem:[#allocation2 + $0x80] sm:$0xf] %v1226
      %1307 = vst [vmem:[#allocation2 + $0x84] sm:$0xf] %v1227
      %1308 = vst [vmem:[#allocation2 + $0x88] sm:$0xf] %v1228
      %1309 = vst [vmem:[#allocation2 + $0x8c] sm:$0xf] %v1229
      %1310 = vst [vmem:[#allocation2 + $0x90] sm:$0xf] %v1230
      %1311 = vst [vmem:[#allocation2 + $0x94] sm:$0xf] %v1231
      %1312 = vst [vmem:[#allocation2 + $0x98] sm:$0xf] %v1232
      %1313 = vst [vmem:[#allocation2 + $0x9c] sm:$0xf] %v1233
      %1314 = vst [vmem:[#allocation2 + $0xa0] sm:$0xf] 0
      %1315 = vst [vmem:[#allocation2 + $0xa4] sm:$0xf] 0
      %v1316 = vld [vmem:[#allocation2] sm:$0xf]
      %v1317 = vld [vmem:[#allocation2 + $0x4] sm:$0xf]
      %v1318 = vld [vmem:[#allocation2 + $0x8] sm:$0xf]
      %v1319 = vld [vmem:[#allocation2 + $0xc] sm:$0xf]
      %v1320 = vld [vmem:[#allocation2 + $0x10] sm:$0xf]
      %v1321 = vld [vmem:[#allocation2 + $0x14] sm:$0xf]
      %v1322 = vld [vmem:[#allocation2 + $0x18] sm:$0xf]
      %v1323 = vld [vmem:[#allocation2 + $0x1c] sm:$0xf]
      %v1324 = vld [vmem:[#allocation2 + $0x20] sm:$0xf]
      %v1325 = vld [vmem:[#allocation2 + $0x24] sm:$0xf]
      %v1326 = vld [vmem:[#allocation2 + $0x28] sm:$0xf]
      %v1327 = vld [vmem:[#allocation2 + $0x2c] sm:$0xf]
      %v1328 = vld [vmem:[#allocation2 + $0x30] sm:$0xf]
      %v1329 = vld [vmem:[#allocation2 + $0x34] sm:$0xf]
      %v1330 = vld [vmem:[#allocation2 + $0x38] sm:$0xf]
      %v1331 = vld [vmem:[#allocation2 + $0x3c] sm:$0xf]
      %v1332 = vld [vmem:[#allocation2 + $0x40] sm:$0xf]
      %v1333 = vld [vmem:[#allocation2 + $0x44] sm:$0xf]
      %v1334 = vld [vmem:[#allocation2 + $0x48] sm:$0xf]
      %v1335 = vld [vmem:[#allocation2 + $0x4c] sm:$0xf]
      %v1336 = vld [vmem:[#allocation2 + $0x50] sm:$0xf]
      %v1337 = vld [vmem:[#allocation2 + $0x54] sm:$0xf]
      %v1338 = vld [vmem:[#allocation2 + $0x58] sm:$0xf]
      %v1339 = vld [vmem:[#allocation2 + $0x5c] sm:$0xf]
      %v1340 = vld [vmem:[#allocation2 + $0x60] sm:$0xf]
      %v1341 = vld [vmem:[#allocation2 + $0x64] sm:$0xf]
      %v1342 = vld [vmem:[#allocation2 + $0x68] sm:$0xf]
      %v1343 = vld [vmem:[#allocation2 + $0x6c] sm:$0xf]
      %v1344 = vld [vmem:[#allocation2 + $0x70] sm:$0xf]
      %v1345 = vld [vmem:[#allocation2 + $0x74] sm:$0xf]
      %v1346 = vld [vmem:[#allocation2 + $0x78] sm:$0xf]
      %v1347 = vld [vmem:[#allocation2 + $0x7c] sm:$0xf]
      %v1348 = vld [vmem:[%s4] sm:$0xf]
      %v1349 = vld [vmem:[%s4 + $0x4] sm:$0xf]
      %v1350 = vld [vmem:[%s4 + $0x8] sm:$0xf]
      %v1351 = vld [vmem:[%s4 + $0xc] sm:$0xf]
      %v1352 = vld [vmem:[%s4 + $0x10] sm:$0xf]
      %v1353 = vld [vmem:[%s4 + $0x14] sm:$0xf]
      %v1354 = vld [vmem:[%s4 + $0x18] sm:$0xf]
      %v1355 = vld [vmem:[%s4 + $0x1c] sm:$0xf]
      %v1356 = vld [vmem:[%s4 + $0x20] sm:$0xf]
      %v1357 = vld [vmem:[%s4 + $0x24] sm:$0xf]
      %v1358 = vld [vmem:[%s4 + $0x28] sm:$0xf]
      %v1359 = vld [vmem:[%s4 + $0x2c] sm:$0xf]
      %v1360 = vld [vmem:[%s4 + $0x30] sm:$0xf]
      %v1361 = vld [vmem:[%s4 + $0x34] sm:$0xf]
      %v1362 = vld [vmem:[%s4 + $0x38] sm:$0xf]
      %v1363 = vld [vmem:[%s4 + $0x3c] sm:$0xf]
      %v1364 = vld [vmem:[#allocation2 + $0x80] sm:$0x1]
      %s1365 = scalar_lea.vmem %s4, 64
      %v1366 = vld [vmem:[%s1365] sm:$0xf]
      %v1367 = vld [vmem:[%s1365 + $0x4] sm:$0xf]
      %v1368 = vld [vmem:[%s1365 + $0x8] sm:$0xf]
      %v1369 = vld [vmem:[%s1365 + $0xc] sm:$0xf]
      %v1370 = vld [vmem:[%s1365 + $0x10] sm:$0xf]
      %v1371 = vld [vmem:[%s1365 + $0x14] sm:$0xf]
      %v1372 = vld [vmem:[%s1365 + $0x18] sm:$0xf]
      %v1373 = vld [vmem:[%s1365 + $0x1c] sm:$0xf]
      %v1374 = vld [vmem:[%s1365 + $0x20] sm:$0xf]
      %v1375 = vld [vmem:[%s1365 + $0x24] sm:$0xf]
      %v1376 = vld [vmem:[%s1365 + $0x28] sm:$0xf]
      %v1377 = vld [vmem:[%s1365 + $0x2c] sm:$0xf]
      %v1378 = vld [vmem:[%s1365 + $0x30] sm:$0xf]
      %v1379 = vld [vmem:[%s1365 + $0x34] sm:$0xf]
      %v1380 = vld [vmem:[%s1365 + $0x38] sm:$0xf]
      %v1381 = vld [vmem:[%s1365 + $0x3c] sm:$0xf]
      %v1415 = vunpack.c.l.b16 %v1316
      %v1416 = vunpack.c.l.b16 %v1317
      %v1417 = vunpack.c.l.b16 %v1318
      %v1418 = vunpack.c.l.b16 %v1319
      %v1419 = vunpack.c.l.b16 %v1320
      %v1420 = vunpack.c.l.b16 %v1321
      %v1421 = vunpack.c.l.b16 %v1322
      %v1422 = vunpack.c.l.b16 %v1323
      %v1423 = vunpack.c.l.b16 %v1324
      %v1424 = vunpack.c.l.b16 %v1325
      %v1425 = vunpack.c.l.b16 %v1326
      %v1426 = vunpack.c.l.b16 %v1327
      %v1427 = vunpack.c.l.b16 %v1328
      %v1428 = vunpack.c.l.b16 %v1329
      %v1429 = vunpack.c.l.b16 %v1330
      %v1430 = vunpack.c.l.b16 %v1331
      %v1431 = vunpack.c.l.b16 %v1332
      %v1432 = vunpack.c.l.b16 %v1333
      %v1433 = vunpack.c.l.b16 %v1334
      %v1434 = vunpack.c.l.b16 %v1335
      %v1435 = vunpack.c.l.b16 %v1336
      %v1436 = vunpack.c.l.b16 %v1337
      %v1437 = vunpack.c.l.b16 %v1338
      %v1438 = vunpack.c.l.b16 %v1339
      %v1439 = vunpack.c.l.b16 %v1340
      %v1440 = vunpack.c.l.b16 %v1341
      %v1441 = vunpack.c.l.b16 %v1342
      %v1442 = vunpack.c.l.b16 %v1343
      %v1443 = vunpack.c.l.b16 %v1344
      %v1444 = vunpack.c.l.b16 %v1345
      %v1445 = vunpack.c.l.b16 %v1346
      %v1446 = vunpack.c.l.b16 %v1347
      %v1447 = vunpack.c.l.b16 %v1364
      %v1448 = vpack.c.b16 %v1416, %v1415
      %v1449 = vpack.c.b16 %v1418, %v1417
      %v1450 = vpack.c.b16 %v1420, %v1419
      %v1451 = vpack.c.b16 %v1422, %v1421
      %v1452 = vpack.c.b16 %v1424, %v1423
      %v1453 = vpack.c.b16 %v1426, %v1425
      %v1454 = vpack.c.b16 %v1428, %v1427
      %v1455 = vpack.c.b16 %v1430, %v1429
      %v1456 = vpack.c.b16 %v1432, %v1431
      %v1457 = vpack.c.b16 %v1434, %v1433
      %v1458 = vpack.c.b16 %v1436, %v1435
      %v1459 = vpack.c.b16 %v1438, %v1437
      %v1460 = vpack.c.b16 %v1440, %v1439
      %v1461 = vpack.c.b16 %v1442, %v1441
      %v1462 = vpack.c.b16 %v1444, %v1443
      %v1463 = vpack.c.b16 %v1446, %v1445
      %v1464 = vpack.c.b16 %v1447, %v1447
      %vm1465 = vsmask.f32 7424
      %v1467 = vshrl.u32 %v1448, 16
      %v1469 = vshll.u32 %v1448, 16
      %v1471 = vrot.slane %v1469, 1
      %v1472 = vor.u32 %v1467, %v1471
      %v1474 = vshll.u32 %v1449, 16
      %v1476 = vrot.slane %v1474, 1
      %v1477 = vsel %vm1465, %v1472, %v1476
      %v1478 = vshrl.u32 %v1449, 16
      %v1480 = vor.u32 %v1478, %v1476
      %v1482 = vshll.u32 %v1450, 16
      %v1484 = vrot.slane %v1482, 1
      %v1485 = vsel %vm1465, %v1480, %v1484
      %v1486 = vshrl.u32 %v1450, 16
      %v1488 = vor.u32 %v1486, %v1484
      %v1490 = vshll.u32 %v1451, 16
      %v1492 = vrot.slane %v1490, 1
      %v1493 = vsel %vm1465, %v1488, %v1492
      %v1494 = vshrl.u32 %v1451, 16
      %v1496 = vor.u32 %v1494, %v1492
      %v1498 = vshll.u32 %v1452, 16
      %v1500 = vrot.slane %v1498, 1
      %v1501 = vsel %vm1465, %v1496, %v1500
      %v1502 = vshrl.u32 %v1452, 16
      %v1504 = vor.u32 %v1502, %v1500
      %v1506 = vshll.u32 %v1453, 16
      %v1508 = vrot.slane %v1506, 1
      %v1509 = vsel %vm1465, %v1504, %v1508
      %v1510 = vshrl.u32 %v1453, 16
      %v1512 = vor.u32 %v1510, %v1508
      %v1514 = vshll.u32 %v1454, 16
      %v1516 = vrot.slane %v1514, 1
      %v1517 = vsel %vm1465, %v1512, %v1516
      %v1518 = vshrl.u32 %v1454, 16
      %v1520 = vor.u32 %v1518, %v1516
      %v1522 = vshll.u32 %v1455, 16
      %v1524 = vrot.slane %v1522, 1
      %v1525 = vsel %vm1465, %v1520, %v1524
      %v1526 = vshrl.u32 %v1455, 16
      %v1528 = vor.u32 %v1526, %v1524
      %v1530 = vshll.u32 %v1456, 16
      %v1532 = vrot.slane %v1530, 1
      %v1533 = vsel %vm1465, %v1528, %v1532
      %v1534 = vshrl.u32 %v1456, 16
      %v1536 = vor.u32 %v1534, %v1532
      %v1538 = vshll.u32 %v1457, 16
      %v1540 = vrot.slane %v1538, 1
      %v1541 = vsel %vm1465, %v1536, %v1540
      %v1542 = vshrl.u32 %v1457, 16
      %v1544 = vor.u32 %v1542, %v1540
      %v1546 = vshll.u32 %v1458, 16
      %v1548 = vrot.slane %v1546, 1
      %v1549 = vsel %vm1465, %v1544, %v1548
      %v1550 = vshrl.u32 %v1458, 16
      %v1552 = vor.u32 %v1550, %v1548
      %v1554 = vshll.u32 %v1459, 16
      %v1556 = vrot.slane %v1554, 1
      %v1557 = vsel %vm1465, %v1552, %v1556
      %v1558 = vshrl.u32 %v1459, 16
      %v1560 = vor.u32 %v1558, %v1556
      %v1562 = vshll.u32 %v1460, 16
      %v1564 = vrot.slane %v1562, 1
      %v1565 = vsel %vm1465, %v1560, %v1564
      %v1566 = vshrl.u32 %v1460, 16
      %v1568 = vor.u32 %v1566, %v1564
      %v1570 = vshll.u32 %v1461, 16
      %v1572 = vrot.slane %v1570, 1
      %v1573 = vsel %vm1465, %v1568, %v1572
      %v1574 = vshrl.u32 %v1461, 16
      %v1576 = vor.u32 %v1574, %v1572
      %v1578 = vshll.u32 %v1462, 16
      %v1580 = vrot.slane %v1578, 1
      %v1581 = vsel %vm1465, %v1576, %v1580
      %v1582 = vshrl.u32 %v1462, 16
      %v1584 = vor.u32 %v1582, %v1580
      %v1586 = vshll.u32 %v1463, 16
      %v1588 = vrot.slane %v1586, 1
      %v1589 = vsel %vm1465, %v1584, %v1588
      %v1590 = vshrl.u32 %v1463, 16
      %v1592 = vor.u32 %v1590, %v1588
      %v1594 = vshll.u32 %v1464, 16
      %v1596 = vrot.slane %v1594, 1
      %v1597 = vsel %vm1465, %v1592, %v1596
      %v1630 = vunpack.c.l.b16 %v1366
      %v1631 = vunpack.c.l.b16 %v1367
      %v1632 = vunpack.c.l.b16 %v1368
      %v1633 = vunpack.c.l.b16 %v1369
      %v1634 = vunpack.c.l.b16 %v1370
      %v1635 = vunpack.c.l.b16 %v1371
      %v1636 = vunpack.c.l.b16 %v1372
      %v1637 = vunpack.c.l.b16 %v1373
      %v1638 = vunpack.c.l.b16 %v1374
      %v1639 = vunpack.c.l.b16 %v1375
      %v1640 = vunpack.c.l.b16 %v1376
      %v1641 = vunpack.c.l.b16 %v1377
      %v1642 = vunpack.c.l.b16 %v1378
      %v1643 = vunpack.c.l.b16 %v1379
      %v1644 = vunpack.c.l.b16 %v1380
      %v1645 = vunpack.c.l.b16 %v1381
      %v1646 = vpack.c.b16 %v1631, %v1630
      %v1647 = vpack.c.b16 %v1633, %v1632
      %v1648 = vpack.c.b16 %v1635, %v1634
      %v1649 = vpack.c.b16 %v1637, %v1636
      %v1650 = vpack.c.b16 %v1639, %v1638
      %v1651 = vpack.c.b16 %v1641, %v1640
      %v1652 = vpack.c.b16 %v1643, %v1642
      %v1653 = vpack.c.b16 %v1645, %v1644
      %1662 = vmatprep.subr.bf16.mxu0 0
      %1663 = vmatpush1.bf16.msra.mxu0 %v1653
      %1664 = vmatprep.subr.bf16.mxu0 0
      %1665 = vmatpush1.bf16.msra.mxu0 %v1652
      %1666 = vmatprep.subr.bf16.mxu0 0
      %1667 = vmatpush1.bf16.msra.mxu0 %v1651
      %1668 = vmatprep.subr.bf16.mxu0 0
      %1669 = vmatpush1.bf16.msra.mxu0 %v1650
      %1670 = vmatprep.subr.bf16.mxu0 0
      %1671 = vmatpush1.bf16.msra.mxu0 %v1649
      %1672 = vmatprep.subr.bf16.mxu0 0
      %1673 = vmatpush1.bf16.msra.mxu0 %v1648
      %1674 = vmatprep.subr.bf16.mxu0 0
      %1675 = vmatpush1.bf16.msra.mxu0 %v1647
      %1676 = vmatprep.subr.bf16.mxu0 0
      %1677 = vmatpush1.bf16.msra.mxu0 %v1646
      %1678 = vmatprep.subr.bf16.mxu0 0
      %1679 = vmatpush2.bf16.msra.mxu0 0
      %1680 = vmatprep.subr.bf16.mxu0 0
      %1681 = vmatpush2.bf16.msra.mxu0 0
      %1682 = vmatprep.subr.bf16.mxu0 0
      %1683 = vmatpush2.bf16.msra.mxu0 0
      %1684 = vmatprep.subr.bf16.mxu0 0
      %1685 = vmatpush2.bf16.msra.mxu0 0
      %1686 = vmatprep.subr.bf16.mxu0 0
      %1687 = vmatpush2.bf16.msra.mxu0 0
      %1688 = vmatprep.subr.bf16.mxu0 0
      %1689 = vmatpush2.bf16.msra.mxu0 0
      %1690 = vmatprep.subr.bf16.mxu0 0
      %1691 = vmatpush2.bf16.msra.mxu0 0
      %1692 = vmatprep.subr.bf16.mxu0 0
      %1693 = vmatpush2.bf16.msra.mxu0 0
      %1694 = vmatprep.mubr.bf16.mxu0 0
      %1695 = vmatmul.mubr.bf16.gmra.mxu0 %v1477
      %v1696 = vpop.f32.mrf.mxu0
      %v1697 = vadd.f32 0.0, %v1696
      %v1698 = vpop.f32.mrf.mxu0
      %v1699 = vpop.f32.mrf.mxu0
      %v1700 = vadd.f32 0.0, %v1699
      %v1701 = vpop.f32.mrf.mxu0
      %1702 = vmatprep.mubr.bf16.mxu0 0
      %1703 = vmatmul.mubr.bf16.gmra.mxu0 %v1485
      %v1704 = vpop.f32.mrf.mxu0
      %v1705 = vpop.f32.mrf.mxu0
      %v1706 = vpop.f32.mrf.mxu0
      %v1707 = vpop.f32.mrf.mxu0
      %1708 = vmatprep.mubr.bf16.mxu0 0
      %1709 = vmatmul.mubr.bf16.gmra.mxu0 %v1493
      %v1710 = vpop.f32.mrf.mxu0
      %v1711 = vadd.f32 0.0, %v1710
      %v1712 = vpop.f32.mrf.mxu0
      %v1713 = vpop.f32.mrf.mxu0
      %v1714 = vadd.f32 0.0, %v1713
      %v1715 = vpop.f32.mrf.mxu0
      %1716 = vmatprep.mubr.bf16.mxu0 0
      %1717 = vmatmul.mubr.bf16.gmra.mxu0 %v1501
      %v1718 = vpop.f32.mrf.mxu0
      %v1719 = vpop.f32.mrf.mxu0
      %v1720 = vpop.f32.mrf.mxu0
      %v1721 = vpop.f32.mrf.mxu0
      %1722 = vmatprep.mubr.bf16.mxu0 0
      %1723 = vmatmul.mubr.bf16.gmra.mxu0 %v1509
      %v1724 = vpop.f32.mrf.mxu0
      %v1725 = vadd.f32 0.0, %v1724
      %v1726 = vpop.f32.mrf.mxu0
      %v1727 = vpop.f32.mrf.mxu0
      %v1728 = vadd.f32 0.0, %v1727
      %v1729 = vpop.f32.mrf.mxu0
      %1730 = vmatprep.mubr.bf16.mxu0 0
      %1731 = vmatmul.mubr.bf16.gmra.mxu0 %v1517
      %v1732 = vpop.f32.mrf.mxu0
      %v1733 = vpop.f32.mrf.mxu0
      %v1734 = vpop.f32.mrf.mxu0
      %v1735 = vpop.f32.mrf.mxu0
      %1736 = vmatprep.mubr.bf16.mxu0 0
      %1737 = vmatmul.mubr.bf16.gmra.mxu0 %v1525
      %v1738 = vpop.f32.mrf.mxu0
      %v1739 = vadd.f32 0.0, %v1738
      %v1740 = vpop.f32.mrf.mxu0
      %v1741 = vpop.f32.mrf.mxu0
      %v1742 = vadd.f32 0.0, %v1741
      %v1743 = vpop.f32.mrf.mxu0
      %1744 = vmatprep.mubr.bf16.mxu0 0
      %1745 = vmatmul.mubr.bf16.gmra.mxu0 %v1533
      %v1746 = vpop.f32.mrf.mxu0
      %v1747 = vpop.f32.mrf.mxu0
      %v1748 = vpop.f32.mrf.mxu0
      %v1749 = vpop.f32.mrf.mxu0
      %1750 = vmatprep.mubr.bf16.mxu0 0
      %1751 = vmatmul.mubr.bf16.gmra.mxu0 %v1541
      %v1752 = vpop.f32.mrf.mxu0
      %v1753 = vadd.f32 0.0, %v1752
      %v1754 = vpop.f32.mrf.mxu0
      %v1755 = vpop.f32.mrf.mxu0
      %v1756 = vadd.f32 0.0, %v1755
      %v1757 = vpop.f32.mrf.mxu0
      %1758 = vmatprep.mubr.bf16.mxu0 0
      %1759 = vmatmul.mubr.bf16.gmra.mxu0 %v1549
      %v1760 = vpop.f32.mrf.mxu0
      %v1761 = vpop.f32.mrf.mxu0
      %v1762 = vpop.f32.mrf.mxu0
      %v1763 = vpop.f32.mrf.mxu0
      %1764 = vmatprep.mubr.bf16.mxu0 0
      %1765 = vmatmul.mubr.bf16.gmra.mxu0 %v1557
      %v1766 = vpop.f32.mrf.mxu0
      %v1767 = vadd.f32 0.0, %v1766
      %v1768 = vpop.f32.mrf.mxu0
      %v1769 = vpop.f32.mrf.mxu0
      %v1770 = vadd.f32 0.0, %v1769
      %v1771 = vpop.f32.mrf.mxu0
      %1772 = vmatprep.mubr.bf16.mxu0 0
      %1773 = vmatmul.mubr.bf16.gmra.mxu0 %v1565
      %v1774 = vpop.f32.mrf.mxu0
      %v1775 = vpop.f32.mrf.mxu0
      %v1776 = vpop.f32.mrf.mxu0
      %v1777 = vpop.f32.mrf.mxu0
      %1778 = vmatprep.mubr.bf16.mxu0 0
      %1779 = vmatmul.mubr.bf16.gmra.mxu0 %v1573
      %v1780 = vpop.f32.mrf.mxu0
      %v1781 = vadd.f32 0.0, %v1780
      %v1782 = vpop.f32.mrf.mxu0
      %v1783 = vpop.f32.mrf.mxu0
      %v1784 = vadd.f32 0.0, %v1783
      %v1785 = vpop.f32.mrf.mxu0
      %1786 = vmatprep.mubr.bf16.mxu0 0
      %1787 = vmatmul.mubr.bf16.gmra.mxu0 %v1581
      %v1788 = vpop.f32.mrf.mxu0
      %v1789 = vpop.f32.mrf.mxu0
      %v1790 = vpop.f32.mrf.mxu0
      %v1791 = vpop.f32.mrf.mxu0
      %1792 = vmatprep.mubr.bf16.mxu0 0
      %1793 = vmatmul.mubr.bf16.gmra.mxu0 %v1589
      %v1794 = vpop.f32.mrf.mxu0
      %v1795 = vadd.f32 0.0, %v1794
      %v1796 = vpop.f32.mrf.mxu0
      %v1797 = vpop.f32.mrf.mxu0
      %v1798 = vadd.f32 0.0, %v1797
      %v1799 = vpop.f32.mrf.mxu0
      %1800 = vmatprep.mubr.bf16.mxu0 0
      %1801 = vmatmul.mubr.bf16.gmra.mxu0 %v1597
      %v1802 = vpop.f32.mrf.mxu0
      %v1803 = vpop.f32.mrf.mxu0
      %v1804 = vpop.f32.mrf.mxu0
      %v1805 = vpop.f32.mrf.mxu0
      %1806 = vdwg.mxu0
      %v1839 = vunpack.c.l.b16 %v1348
      %v1840 = vunpack.c.l.b16 %v1349
      %v1841 = vunpack.c.l.b16 %v1350
      %v1842 = vunpack.c.l.b16 %v1351
      %v1843 = vunpack.c.l.b16 %v1352
      %v1844 = vunpack.c.l.b16 %v1353
      %v1845 = vunpack.c.l.b16 %v1354
      %v1846 = vunpack.c.l.b16 %v1355
      %v1847 = vunpack.c.l.b16 %v1356
      %v1848 = vunpack.c.l.b16 %v1357
      %v1849 = vunpack.c.l.b16 %v1358
      %v1850 = vunpack.c.l.b16 %v1359
      %v1851 = vunpack.c.l.b16 %v1360
      %v1852 = vunpack.c.l.b16 %v1361
      %v1853 = vunpack.c.l.b16 %v1362
      %v1854 = vunpack.c.l.b16 %v1363
      %v1855 = vpack.c.b16 %v1840, %v1839
      %v1856 = vpack.c.b16 %v1842, %v1841
      %v1857 = vpack.c.b16 %v1844, %v1843
      %v1858 = vpack.c.b16 %v1846, %v1845
      %v1859 = vpack.c.b16 %v1848, %v1847
      %v1860 = vpack.c.b16 %v1850, %v1849
      %v1861 = vpack.c.b16 %v1852, %v1851
      %v1862 = vpack.c.b16 %v1854, %v1853
      %1871 = vmatprep.subr.bf16.mxu0 0
      %1872 = vmatpush1.bf16.msra.mxu0 %v1862
      %1873 = vmatprep.subr.bf16.mxu0 0
      %1874 = vmatpush1.bf16.msra.mxu0 %v1861
      %1875 = vmatprep.subr.bf16.mxu0 0
      %1876 = vmatpush1.bf16.msra.mxu0 %v1860
      %1877 = vmatprep.subr.bf16.mxu0 0
      %1878 = vmatpush1.bf16.msra.mxu0 %v1859
      %1879 = vmatprep.subr.bf16.mxu0 0
      %1880 = vmatpush1.bf16.msra.mxu0 %v1858
      %1881 = vmatprep.subr.bf16.mxu0 0
      %1882 = vmatpush1.bf16.msra.mxu0 %v1857
      %1883 = vmatprep.subr.bf16.mxu0 0
      %1884 = vmatpush1.bf16.msra.mxu0 %v1856
      %1885 = vmatprep.subr.bf16.mxu0 0
      %1886 = vmatpush1.bf16.msra.mxu0 %v1855
      %1887 = vmatprep.subr.bf16.mxu0 0
      %1888 = vmatpush2.bf16.msra.mxu0 0
      %1889 = vmatprep.subr.bf16.mxu0 0
      %1890 = vmatpush2.bf16.msra.mxu0 0
      %1891 = vmatprep.subr.bf16.mxu0 0
      %1892 = vmatpush2.bf16.msra.mxu0 0
      %1893 = vmatprep.subr.bf16.mxu0 0
      %1894 = vmatpush2.bf16.msra.mxu0 0
      %1895 = vmatprep.subr.bf16.mxu0 0
      %1896 = vmatpush2.bf16.msra.mxu0 0
      %1897 = vmatprep.subr.bf16.mxu0 0
      %1898 = vmatpush2.bf16.msra.mxu0 0
      %1899 = vmatprep.subr.bf16.mxu0 0
      %1900 = vmatpush2.bf16.msra.mxu0 0
      %1901 = vmatprep.subr.bf16.mxu0 0
      %1902 = vmatpush2.bf16.msra.mxu0 0
      %1903 = vmatprep.mubr.bf16.mxu0 0
      %1904 = vmatmul.mubr.bf16.gmra.mxu0 %v1448
      %v1905 = vpop.f32.mrf.mxu0
      %v1906 = vadd.f32 %v1697, %v1905
      %v1907 = vpop.f32.mrf.mxu0
      %v1908 = vpop.f32.mrf.mxu0
      %v1909 = vadd.f32 %v1700, %v1908
      %v1910 = vpop.f32.mrf.mxu0
      %1911 = vmatprep.mubr.bf16.mxu0 0
      %1912 = vmatmul.mubr.bf16.gmra.mxu0 %v1449
      %v1913 = vpop.f32.mrf.mxu0
      %v1914 = vpop.f32.mrf.mxu0
      %v1915 = vpop.f32.mrf.mxu0
      %v1916 = vpop.f32.mrf.mxu0
      %1917 = vmatprep.mubr.bf16.mxu0 0
      %1918 = vmatmul.mubr.bf16.gmra.mxu0 %v1450
      %v1919 = vpop.f32.mrf.mxu0
      %v1920 = vadd.f32 %v1711, %v1919
      %v1921 = vpop.f32.mrf.mxu0
      %v1922 = vpop.f32.mrf.mxu0
      %v1923 = vadd.f32 %v1714, %v1922
      %v1924 = vpop.f32.mrf.mxu0
      %1925 = vmatprep.mubr.bf16.mxu0 0
      %1926 = vmatmul.mubr.bf16.gmra.mxu0 %v1451
      %v1927 = vpop.f32.mrf.mxu0
      %v1928 = vpop.f32.mrf.mxu0
      %v1929 = vpop.f32.mrf.mxu0
      %v1930 = vpop.f32.mrf.mxu0
      %1931 = vmatprep.mubr.bf16.mxu0 0
      %1932 = vmatmul.mubr.bf16.gmra.mxu0 %v1452
      %v1933 = vpop.f32.mrf.mxu0
      %v1934 = vadd.f32 %v1725, %v1933
      %v1935 = vpop.f32.mrf.mxu0
      %v1936 = vpop.f32.mrf.mxu0
      %v1937 = vadd.f32 %v1728, %v1936
      %v1938 = vpop.f32.mrf.mxu0
      %1939 = vmatprep.mubr.bf16.mxu0 0
      %1940 = vmatmul.mubr.bf16.gmra.mxu0 %v1453
      %v1941 = vpop.f32.mrf.mxu0
      %v1942 = vpop.f32.mrf.mxu0
      %v1943 = vpop.f32.mrf.mxu0
      %v1944 = vpop.f32.mrf.mxu0
      %1945 = vmatprep.mubr.bf16.mxu0 0
      %1946 = vmatmul.mubr.bf16.gmra.mxu0 %v1454
      %v1947 = vpop.f32.mrf.mxu0
      %v1948 = vadd.f32 %v1739, %v1947
      %v1949 = vpop.f32.mrf.mxu0
      %v1950 = vpop.f32.mrf.mxu0
      %v1951 = vadd.f32 %v1742, %v1950
      %v1952 = vpop.f32.mrf.mxu0
      %1953 = vmatprep.mubr.bf16.mxu0 0
      %1954 = vmatmul.mubr.bf16.gmra.mxu0 %v1455
      %v1955 = vpop.f32.mrf.mxu0
      %v1956 = vpop.f32.mrf.mxu0
      %v1957 = vpop.f32.mrf.mxu0
      %v1958 = vpop.f32.mrf.mxu0
      %1959 = vmatprep.mubr.bf16.mxu0 0
      %1960 = vmatmul.mubr.bf16.gmra.mxu0 %v1456
      %v1961 = vpop.f32.mrf.mxu0
      %v1962 = vadd.f32 %v1753, %v1961
      %v1963 = vpop.f32.mrf.mxu0
      %v1964 = vpop.f32.mrf.mxu0
      %v1965 = vadd.f32 %v1756, %v1964
      %v1966 = vpop.f32.mrf.mxu0
      %1967 = vmatprep.mubr.bf16.mxu0 0
      %1968 = vmatmul.mubr.bf16.gmra.mxu0 %v1457
      %v1969 = vpop.f32.mrf.mxu0
      %v1970 = vpop.f32.mrf.mxu0
      %v1971 = vpop.f32.mrf.mxu0
      %v1972 = vpop.f32.mrf.mxu0
      %1973 = vmatprep.mubr.bf16.mxu0 0
      %1974 = vmatmul.mubr.bf16.gmra.mxu0 %v1458
      %v1975 = vpop.f32.mrf.mxu0
      %v1976 = vadd.f32 %v1767, %v1975
      %v1977 = vpop.f32.mrf.mxu0
      %v1978 = vpop.f32.mrf.mxu0
      %v1979 = vadd.f32 %v1770, %v1978
      %v1980 = vpop.f32.mrf.mxu0
      %1981 = vmatprep.mubr.bf16.mxu0 0
      %1982 = vmatmul.mubr.bf16.gmra.mxu0 %v1459
      %v1983 = vpop.f32.mrf.mxu0
      %v1984 = vpop.f32.mrf.mxu0
      %v1985 = vpop.f32.mrf.mxu0
      %v1986 = vpop.f32.mrf.mxu0
      %1987 = vmatprep.mubr.bf16.mxu0 0
      %1988 = vmatmul.mubr.bf16.gmra.mxu0 %v1460
      %v1989 = vpop.f32.mrf.mxu0
      %v1990 = vadd.f32 %v1781, %v1989
      %v1991 = vpop.f32.mrf.mxu0
      %v1992 = vpop.f32.mrf.mxu0
      %v1993 = vadd.f32 %v1784, %v1992
      %v1994 = vpop.f32.mrf.mxu0
      %1995 = vmatprep.mubr.bf16.mxu0 0
      %1996 = vmatmul.mubr.bf16.gmra.mxu0 %v1461
      %v1997 = vpop.f32.mrf.mxu0
      %v1998 = vpop.f32.mrf.mxu0
      %v1999 = vpop.f32.mrf.mxu0
      %v2000 = vpop.f32.mrf.mxu0
      %2001 = vmatprep.mubr.bf16.mxu0 0
      %2002 = vmatmul.mubr.bf16.gmra.mxu0 %v1462
      %v2003 = vpop.f32.mrf.mxu0
      %v2004 = vadd.f32 %v1795, %v2003
      %v2005 = vpop.f32.mrf.mxu0
      %v2006 = vpop.f32.mrf.mxu0
      %v2007 = vadd.f32 %v1798, %v2006
      %v2008 = vpop.f32.mrf.mxu0
      %2009 = vmatprep.mubr.bf16.mxu0 0
      %2010 = vmatmul.mubr.bf16.gmra.mxu0 %v1463
      %v2011 = vpop.f32.mrf.mxu0
      %v2012 = vpop.f32.mrf.mxu0
      %v2013 = vpop.f32.mrf.mxu0
      %v2014 = vpop.f32.mrf.mxu0
      %2015 = vdwg.mxu0
      %v2016 = vld [vmem:[#allocation2] sm:$0xe]
      %s2017 = scalar_lea.vmem %s4, 128
      %v2018 = vld [vmem:[%s2017] sm:$0xf]
      %v2019 = vld [vmem:[%s2017 + $0x4] sm:$0xf]
      %v2020 = vld [vmem:[%s2017 + $0x8] sm:$0xf]
      %v2021 = vld [vmem:[%s2017 + $0xc] sm:$0xf]
      %v2022 = vld [vmem:[%s2017 + $0x10] sm:$0xf]
      %v2023 = vld [vmem:[%s2017 + $0x14] sm:$0xf]
      %v2024 = vld [vmem:[%s2017 + $0x18] sm:$0xf]
      %v2025 = vld [vmem:[%s2017 + $0x1c] sm:$0xf]
      %v2026 = vld [vmem:[%s2017 + $0x20] sm:$0xf]
      %v2027 = vld [vmem:[%s2017 + $0x24] sm:$0xf]
      %v2028 = vld [vmem:[%s2017 + $0x28] sm:$0xf]
      %v2029 = vld [vmem:[%s2017 + $0x2c] sm:$0xf]
      %v2030 = vld [vmem:[%s2017 + $0x30] sm:$0xf]
      %v2031 = vld [vmem:[%s2017 + $0x34] sm:$0xf]
      %v2032 = vld [vmem:[%s2017 + $0x38] sm:$0xf]
      %v2033 = vld [vmem:[%s2017 + $0x3c] sm:$0xf]
      %v2035 = vunpack.c.l.b16 %v2016
      %v2036 = vpack.c.b16 %v1416, %v2035
      %vm2037 = vcmask 1046528
      %v2038 = vrot.slane %v2036, 1
      %v2039 = vrot.slane %v1449, 1
      %v2040 = vsel %vm2037, %v2038, %v2039
      %v2041 = vrot.slane %v1450, 1
      %v2042 = vsel %vm2037, %v2039, %v2041
      %v2043 = vrot.slane %v1451, 1
      %v2044 = vsel %vm2037, %v2041, %v2043
      %v2045 = vrot.slane %v1452, 1
      %v2046 = vsel %vm2037, %v2043, %v2045
      %v2047 = vrot.slane %v1453, 1
      %v2048 = vsel %vm2037, %v2045, %v2047
      %v2049 = vrot.slane %v1454, 1
      %v2050 = vsel %vm2037, %v2047, %v2049
      %v2051 = vrot.slane %v1455, 1
      %v2052 = vsel %vm2037, %v2049, %v2051
      %v2053 = vrot.slane %v1456, 1
      %v2054 = vsel %vm2037, %v2051, %v2053
      %v2055 = vrot.slane %v1457, 1
      %v2056 = vsel %vm2037, %v2053, %v2055
      %v2057 = vrot.slane %v1458, 1
      %v2058 = vsel %vm2037, %v2055, %v2057
      %v2059 = vrot.slane %v1459, 1
      %v2060 = vsel %vm2037, %v2057, %v2059
      %v2061 = vrot.slane %v1460, 1
      %v2062 = vsel %vm2037, %v2059, %v2061
      %v2063 = vrot.slane %v1461, 1
      %v2064 = vsel %vm2037, %v2061, %v2063
      %v2065 = vrot.slane %v1462, 1
      %v2066 = vsel %vm2037, %v2063, %v2065
      %v2067 = vrot.slane %v1463, 1
      %v2068 = vsel %vm2037, %v2065, %v2067
      %v2069 = vrot.slane %v1464, 1
      %v2070 = vsel %vm2037, %v2067, %v2069
      %v2103 = vunpack.c.l.b16 %v2018
      %v2104 = vunpack.c.l.b16 %v2019
      %v2105 = vunpack.c.l.b16 %v2020
      %v2106 = vunpack.c.l.b16 %v2021
      %v2107 = vunpack.c.l.b16 %v2022
      %v2108 = vunpack.c.l.b16 %v2023
      %v2109 = vunpack.c.l.b16 %v2024
      %v2110 = vunpack.c.l.b16 %v2025
      %v2111 = vunpack.c.l.b16 %v2026
      %v2112 = vunpack.c.l.b16 %v2027
      %v2113 = vunpack.c.l.b16 %v2028
      %v2114 = vunpack.c.l.b16 %v2029
      %v2115 = vunpack.c.l.b16 %v2030
      %v2116 = vunpack.c.l.b16 %v2031
      %v2117 = vunpack.c.l.b16 %v2032
      %v2118 = vunpack.c.l.b16 %v2033
      %v2119 = vpack.c.b16 %v2104, %v2103
      %v2120 = vpack.c.b16 %v2106, %v2105
      %v2121 = vpack.c.b16 %v2108, %v2107
      %v2122 = vpack.c.b16 %v2110, %v2109
      %v2123 = vpack.c.b16 %v2112, %v2111
      %v2124 = vpack.c.b16 %v2114, %v2113
      %v2125 = vpack.c.b16 %v2116, %v2115
      %v2126 = vpack.c.b16 %v2118, %v2117
      %2135 = vmatprep.subr.bf16.mxu0 0
      %2136 = vmatpush1.bf16.msra.mxu0 %v2126
      %2137 = vmatprep.subr.bf16.mxu0 0
      %2138 = vmatpush1.bf16.msra.mxu0 %v2125
      %2139 = vmatprep.subr.bf16.mxu0 0
      %2140 = vmatpush1.bf16.msra.mxu0 %v2124
      %2141 = vmatprep.subr.bf16.mxu0 0
      %2142 = vmatpush1.bf16.msra.mxu0 %v2123
      %2143 = vmatprep.subr.bf16.mxu0 0
      %2144 = vmatpush1.bf16.msra.mxu0 %v2122
      %2145 = vmatprep.subr.bf16.mxu0 0
      %2146 = vmatpush1.bf16.msra.mxu0 %v2121
      %2147 = vmatprep.subr.bf16.mxu0 0
      %2148 = vmatpush1.bf16.msra.mxu0 %v2120
      %2149 = vmatprep.subr.bf16.mxu0 0
      %2150 = vmatpush1.bf16.msra.mxu0 %v2119
      %2151 = vmatprep.subr.bf16.mxu0 0
      %2152 = vmatpush2.bf16.msra.mxu0 0
      %2153 = vmatprep.subr.bf16.mxu0 0
      %2154 = vmatpush2.bf16.msra.mxu0 0
      %2155 = vmatprep.subr.bf16.mxu0 0
      %2156 = vmatpush2.bf16.msra.mxu0 0
      %2157 = vmatprep.subr.bf16.mxu0 0
      %2158 = vmatpush2.bf16.msra.mxu0 0
      %2159 = vmatprep.subr.bf16.mxu0 0
      %2160 = vmatpush2.bf16.msra.mxu0 0
      %2161 = vmatprep.subr.bf16.mxu0 0
      %2162 = vmatpush2.bf16.msra.mxu0 0
      %2163 = vmatprep.subr.bf16.mxu0 0
      %2164 = vmatpush2.bf16.msra.mxu0 0
      %2165 = vmatprep.subr.bf16.mxu0 0
      %2166 = vmatpush2.bf16.msra.mxu0 0
      %2167 = vmatprep.mubr.bf16.mxu0 0
      %2168 = vmatmul.mubr.bf16.gmra.mxu0 %v2040
      %v2169 = vpop.f32.mrf.mxu0
      %v2170 = vadd.f32 0.0, %v2169
      %v2171 = vpop.f32.mrf.mxu0
      %v2172 = vpop.f32.mrf.mxu0
      %v2173 = vadd.f32 0.0, %v2172
      %v2174 = vpop.f32.mrf.mxu0
      %2175 = vmatprep.mubr.bf16.mxu0 0
      %2176 = vmatmul.mubr.bf16.gmra.mxu0 %v2042
      %v2177 = vpop.f32.mrf.mxu0
      %v2178 = vpop.f32.mrf.mxu0
      %v2179 = vpop.f32.mrf.mxu0
      %v2180 = vpop.f32.mrf.mxu0
      %2181 = vmatprep.mubr.bf16.mxu0 0
      %2182 = vmatmul.mubr.bf16.gmra.mxu0 %v2044
      %v2183 = vpop.f32.mrf.mxu0
      %v2184 = vadd.f32 0.0, %v2183
      %v2185 = vpop.f32.mrf.mxu0
      %v2186 = vpop.f32.mrf.mxu0
      %v2187 = vadd.f32 0.0, %v2186
      %v2188 = vpop.f32.mrf.mxu0
      %2189 = vmatprep.mubr.bf16.mxu0 0
      %2190 = vmatmul.mubr.bf16.gmra.mxu0 %v2046
      %v2191 = vpop.f32.mrf.mxu0
      %v2192 = vpop.f32.mrf.mxu0
      %v2193 = vpop.f32.mrf.mxu0
      %v2194 = vpop.f32.mrf.mxu0
      %2195 = vmatprep.mubr.bf16.mxu0 0
      %2196 = vmatmul.mubr.bf16.gmra.mxu0 %v2048
      %v2197 = vpop.f32.mrf.mxu0
      %v2198 = vadd.f32 0.0, %v2197
      %v2199 = vpop.f32.mrf.mxu0
      %v2200 = vpop.f32.mrf.mxu0
      %v2201 = vadd.f32 0.0, %v2200
      %v2202 = vpop.f32.mrf.mxu0
      %2203 = vmatprep.mubr.bf16.mxu0 0
      %2204 = vmatmul.mubr.bf16.gmra.mxu0 %v2050
      %v2205 = vpop.f32.mrf.mxu0
      %v2206 = vpop.f32.mrf.mxu0
      %v2207 = vpop.f32.mrf.mxu0
      %v2208 = vpop.f32.mrf.mxu0
      %2209 = vmatprep.mubr.bf16.mxu0 0
      %2210 = vmatmul.mubr.bf16.gmra.mxu0 %v2052
      %v2211 = vpop.f32.mrf.mxu0
      %v2212 = vadd.f32 0.0, %v2211
      %v2213 = vpop.f32.mrf.mxu0
      %v2214 = vpop.f32.mrf.mxu0
      %v2215 = vadd.f32 0.0, %v2214
      %v2216 = vpop.f32.mrf.mxu0
      %2217 = vmatprep.mubr.bf16.mxu0 0
      %2218 = vmatmul.mubr.bf16.gmra.mxu0 %v2054
      %v2219 = vpop.f32.mrf.mxu0
      %v2220 = vpop.f32.mrf.mxu0
      %v2221 = vpop.f32.mrf.mxu0
      %v2222 = vpop.f32.mrf.mxu0
      %2223 = vmatprep.mubr.bf16.mxu0 0
      %2224 = vmatmul.mubr.bf16.gmra.mxu0 %v2056
      %v2225 = vpop.f32.mrf.mxu0
      %v2226 = vadd.f32 0.0, %v2225
      %v2227 = vpop.f32.mrf.mxu0
      %v2228 = vpop.f32.mrf.mxu0
      %v2229 = vadd.f32 0.0, %v2228
      %v2230 = vpop.f32.mrf.mxu0
      %2231 = vmatprep.mubr.bf16.mxu0 0
      %2232 = vmatmul.mubr.bf16.gmra.mxu0 %v2058
      %v2233 = vpop.f32.mrf.mxu0
      %v2234 = vpop.f32.mrf.mxu0
      %v2235 = vpop.f32.mrf.mxu0
      %v2236 = vpop.f32.mrf.mxu0
      %2237 = vmatprep.mubr.bf16.mxu0 0
      %2238 = vmatmul.mubr.bf16.gmra.mxu0 %v2060
      %v2239 = vpop.f32.mrf.mxu0
      %v2240 = vadd.f32 0.0, %v2239
      %v2241 = vpop.f32.mrf.mxu0
      %v2242 = vpop.f32.mrf.mxu0
      %v2243 = vadd.f32 0.0, %v2242
      %v2244 = vpop.f32.mrf.mxu0
      %2245 = vmatprep.mubr.bf16.mxu0 0
      %2246 = vmatmul.mubr.bf16.gmra.mxu0 %v2062
      %v2247 = vpop.f32.mrf.mxu0
      %v2248 = vpop.f32.mrf.mxu0
      %v2249 = vpop.f32.mrf.mxu0
      %v2250 = vpop.f32.mrf.mxu0
      %2251 = vmatprep.mubr.bf16.mxu0 0
      %2252 = vmatmul.mubr.bf16.gmra.mxu0 %v2064
      %v2253 = vpop.f32.mrf.mxu0
      %v2254 = vadd.f32 0.0, %v2253
      %v2255 = vpop.f32.mrf.mxu0
      %v2256 = vpop.f32.mrf.mxu0
      %v2257 = vadd.f32 0.0, %v2256
      %v2258 = vpop.f32.mrf.mxu0
      %2259 = vmatprep.mubr.bf16.mxu0 0
      %2260 = vmatmul.mubr.bf16.gmra.mxu0 %v2066
      %v2261 = vpop.f32.mrf.mxu0
      %v2262 = vpop.f32.mrf.mxu0
      %v2263 = vpop.f32.mrf.mxu0
      %v2264 = vpop.f32.mrf.mxu0
      %2265 = vmatprep.mubr.bf16.mxu0 0
      %2266 = vmatmul.mubr.bf16.gmra.mxu0 %v2068
      %v2267 = vpop.f32.mrf.mxu0
      %v2268 = vadd.f32 0.0, %v2267
      %v2269 = vpop.f32.mrf.mxu0
      %v2270 = vpop.f32.mrf.mxu0
      %v2271 = vadd.f32 0.0, %v2270
      %v2272 = vpop.f32.mrf.mxu0
      %2273 = vmatprep.mubr.bf16.mxu0 0
      %2274 = vmatmul.mubr.bf16.gmra.mxu0 %v2070
      %v2275 = vpop.f32.mrf.mxu0
      %v2276 = vpop.f32.mrf.mxu0
      %v2277 = vpop.f32.mrf.mxu0
      %v2278 = vpop.f32.mrf.mxu0
      %2279 = vdwg.mxu0
      %v2280 = vadd.f32 %v1906, %v2170
      %v2281 = vadd.f32 %v1909, %v2173
      %v2282 = vadd.f32 %v1920, %v2184
      %v2283 = vadd.f32 %v1923, %v2187
      %v2284 = vadd.f32 %v1934, %v2198
      %v2285 = vadd.f32 %v1937, %v2201
      %v2286 = vadd.f32 %v1948, %v2212
      %v2287 = vadd.f32 %v1951, %v2215
      %v2288 = vadd.f32 %v1962, %v2226
      %v2289 = vadd.f32 %v1965, %v2229
      %v2290 = vadd.f32 %v1976, %v2240
      %v2291 = vadd.f32 %v1979, %v2243
      %v2292 = vadd.f32 %v1990, %v2254
      %v2293 = vadd.f32 %v1993, %v2257
      %v2294 = vadd.f32 %v2004, %v2268
      %v2295 = vadd.f32 %v2007, %v2271
      %v2296 = vld [vmem:[#allocation2 + $0x10] sm:$0xf]
      %v2297 = vld [vmem:[#allocation2 + $0x14] sm:$0xf]
      %v2298 = vld [vmem:[#allocation2 + $0x18] sm:$0xf]
      %v2299 = vld [vmem:[#allocation2 + $0x1c] sm:$0xf]
      %v2300 = vld [vmem:[#allocation2 + $0x20] sm:$0xf]
      %v2301 = vld [vmem:[#allocation2 + $0x24] sm:$0xf]
      %v2302 = vld [vmem:[#allocation2 + $0x28] sm:$0xf]
      %v2303 = vld [vmem:[#allocation2 + $0x2c] sm:$0xf]
      %v2304 = vld [vmem:[#allocation2 + $0x30] sm:$0xf]
      %v2305 = vld [vmem:[#allocation2 + $0x34] sm:$0xf]
      %v2306 = vld [vmem:[#allocation2 + $0x38] sm:$0xf]
      %v2307 = vld [vmem:[#allocation2 + $0x3c] sm:$0xf]
      %v2308 = vld [vmem:[#allocation2 + $0x40] sm:$0xf]
      %v2309 = vld [vmem:[#allocation2 + $0x44] sm:$0xf]
      %v2310 = vld [vmem:[#allocation2 + $0x48] sm:$0xf]
      %v2311 = vld [vmem:[#allocation2 + $0x4c] sm:$0xf]
      %v2312 = vld [vmem:[#allocation2 + $0x50] sm:$0xf]
      %v2313 = vld [vmem:[#allocation2 + $0x54] sm:$0xf]
      %v2314 = vld [vmem:[#allocation2 + $0x58] sm:$0xf]
      %v2315 = vld [vmem:[#allocation2 + $0x5c] sm:$0xf]
      %v2316 = vld [vmem:[#allocation2 + $0x60] sm:$0xf]
      %v2317 = vld [vmem:[#allocation2 + $0x64] sm:$0xf]
      %v2318 = vld [vmem:[#allocation2 + $0x68] sm:$0xf]
      %v2319 = vld [vmem:[#allocation2 + $0x6c] sm:$0xf]
      %v2320 = vld [vmem:[#allocation2 + $0x70] sm:$0xf]
      %v2321 = vld [vmem:[#allocation2 + $0x74] sm:$0xf]
      %v2322 = vld [vmem:[#allocation2 + $0x78] sm:$0xf]
      %v2323 = vld [vmem:[#allocation2 + $0x7c] sm:$0xf]
      %v2324 = vld [vmem:[#allocation2 + $0x80] sm:$0xf]
      %v2325 = vld [vmem:[#allocation2 + $0x84] sm:$0xf]
      %v2326 = vld [vmem:[#allocation2 + $0x88] sm:$0xf]
      %v2327 = vld [vmem:[#allocation2 + $0x8c] sm:$0xf]
      %s2328 = scalar_lea.vmem %s4, 192
      %v2329 = vld [vmem:[%s2328] sm:$0xf]
      %v2330 = vld [vmem:[%s2328 + $0x4] sm:$0xf]
      %v2331 = vld [vmem:[%s2328 + $0x8] sm:$0xf]
      %v2332 = vld [vmem:[%s2328 + $0xc] sm:$0xf]
      %v2333 = vld [vmem:[%s2328 + $0x10] sm:$0xf]
      %v2334 = vld [vmem:[%s2328 + $0x14] sm:$0xf]
      %v2335 = vld [vmem:[%s2328 + $0x18] sm:$0xf]
      %v2336 = vld [vmem:[%s2328 + $0x1c] sm:$0xf]
      %v2337 = vld [vmem:[%s2328 + $0x20] sm:$0xf]
      %v2338 = vld [vmem:[%s2328 + $0x24] sm:$0xf]
      %v2339 = vld [vmem:[%s2328 + $0x28] sm:$0xf]
      %v2340 = vld [vmem:[%s2328 + $0x2c] sm:$0xf]
      %v2341 = vld [vmem:[%s2328 + $0x30] sm:$0xf]
      %v2342 = vld [vmem:[%s2328 + $0x34] sm:$0xf]
      %v2343 = vld [vmem:[%s2328 + $0x38] sm:$0xf]
      %v2344 = vld [vmem:[%s2328 + $0x3c] sm:$0xf]
      %v2377 = vunpack.c.l.b16 %v2296
      %v2378 = vunpack.c.l.b16 %v2297
      %v2379 = vunpack.c.l.b16 %v2298
      %v2380 = vunpack.c.l.b16 %v2299
      %v2381 = vunpack.c.l.b16 %v2300
      %v2382 = vunpack.c.l.b16 %v2301
      %v2383 = vunpack.c.l.b16 %v2302
      %v2384 = vunpack.c.l.b16 %v2303
      %v2385 = vunpack.c.l.b16 %v2304
      %v2386 = vunpack.c.l.b16 %v2305
      %v2387 = vunpack.c.l.b16 %v2306
      %v2388 = vunpack.c.l.b16 %v2307
      %v2389 = vunpack.c.l.b16 %v2308
      %v2390 = vunpack.c.l.b16 %v2309
      %v2391 = vunpack.c.l.b16 %v2310
      %v2392 = vunpack.c.l.b16 %v2311
      %v2393 = vunpack.c.l.b16 %v2312
      %v2394 = vunpack.c.l.b16 %v2313
      %v2395 = vunpack.c.l.b16 %v2314
      %v2396 = vunpack.c.l.b16 %v2315
      %v2397 = vunpack.c.l.b16 %v2316
      %v2398 = vunpack.c.l.b16 %v2317
      %v2399 = vunpack.c.l.b16 %v2318
      %v2400 = vunpack.c.l.b16 %v2319
      %v2401 = vunpack.c.l.b16 %v2320
      %v2402 = vunpack.c.l.b16 %v2321
      %v2403 = vunpack.c.l.b16 %v2322
      %v2404 = vunpack.c.l.b16 %v2323
      %v2405 = vunpack.c.l.b16 %v2324
      %v2406 = vunpack.c.l.b16 %v2325
      %v2407 = vunpack.c.l.b16 %v2326
      %v2408 = vunpack.c.l.b16 %v2327
      %v2409 = vpack.c.b16 %v2378, %v2377
      %v2410 = vpack.c.b16 %v2380, %v2379
      %v2411 = vpack.c.b16 %v2382, %v2381
      %v2412 = vpack.c.b16 %v2384, %v2383
      %v2413 = vpack.c.b16 %v2386, %v2385
      %v2414 = vpack.c.b16 %v2388, %v2387
      %v2415 = vpack.c.b16 %v2390, %v2389
      %v2416 = vpack.c.b16 %v2392, %v2391
      %v2417 = vpack.c.b16 %v2394, %v2393
      %v2418 = vpack.c.b16 %v2396, %v2395
      %v2419 = vpack.c.b16 %v2398, %v2397
      %v2420 = vpack.c.b16 %v2400, %v2399
      %v2421 = vpack.c.b16 %v2402, %v2401
      %v2422 = vpack.c.b16 %v2404, %v2403
      %v2423 = vpack.c.b16 %v2406, %v2405
      %v2424 = vpack.c.b16 %v2408, %v2407
      %v2457 = vunpack.c.l.b16 %v2329
      %v2458 = vunpack.c.l.b16 %v2330
      %v2459 = vunpack.c.l.b16 %v2331
      %v2460 = vunpack.c.l.b16 %v2332
      %v2461 = vunpack.c.l.b16 %v2333
      %v2462 = vunpack.c.l.b16 %v2334
      %v2463 = vunpack.c.l.b16 %v2335
      %v2464 = vunpack.c.l.b16 %v2336
      %v2465 = vunpack.c.l.b16 %v2337
      %v2466 = vunpack.c.l.b16 %v2338
      %v2467 = vunpack.c.l.b16 %v2339
      %v2468 = vunpack.c.l.b16 %v2340
      %v2469 = vunpack.c.l.b16 %v2341
      %v2470 = vunpack.c.l.b16 %v2342
      %v2471 = vunpack.c.l.b16 %v2343
      %v2472 = vunpack.c.l.b16 %v2344
      %v2473 = vpack.c.b16 %v2458, %v2457
      %v2474 = vpack.c.b16 %v2460, %v2459
      %v2475 = vpack.c.b16 %v2462, %v2461
      %v2476 = vpack.c.b16 %v2464, %v2463
      %v2477 = vpack.c.b16 %v2466, %v2465
      %v2478 = vpack.c.b16 %v2468, %v2467
      %v2479 = vpack.c.b16 %v2470, %v2469
      %v2480 = vpack.c.b16 %v2472, %v2471
      %2489 = vmatprep.subr.bf16.mxu0 0
      %2490 = vmatpush1.bf16.msra.mxu0 %v2480
      %2491 = vmatprep.subr.bf16.mxu0 0
      %2492 = vmatpush1.bf16.msra.mxu0 %v2479
      %2493 = vmatprep.subr.bf16.mxu0 0
      %2494 = vmatpush1.bf16.msra.mxu0 %v2478
      %2495 = vmatprep.subr.bf16.mxu0 0
      %2496 = vmatpush1.bf16.msra.mxu0 %v2477
      %2497 = vmatprep.subr.bf16.mxu0 0
      %2498 = vmatpush1.bf16.msra.mxu0 %v2476
      %2499 = vmatprep.subr.bf16.mxu0 0
      %2500 = vmatpush1.bf16.msra.mxu0 %v2475
      %2501 = vmatprep.subr.bf16.mxu0 0
      %2502 = vmatpush1.bf16.msra.mxu0 %v2474
      %2503 = vmatprep.subr.bf16.mxu0 0
      %2504 = vmatpush1.bf16.msra.mxu0 %v2473
      %2505 = vmatprep.subr.bf16.mxu0 0
      %2506 = vmatpush2.bf16.msra.mxu0 0
      %2507 = vmatprep.subr.bf16.mxu0 0
      %2508 = vmatpush2.bf16.msra.mxu0 0
      %2509 = vmatprep.subr.bf16.mxu0 0
      %2510 = vmatpush2.bf16.msra.mxu0 0
      %2511 = vmatprep.subr.bf16.mxu0 0
      %2512 = vmatpush2.bf16.msra.mxu0 0
      %2513 = vmatprep.subr.bf16.mxu0 0
      %2514 = vmatpush2.bf16.msra.mxu0 0
      %2515 = vmatprep.subr.bf16.mxu0 0
      %2516 = vmatpush2.bf16.msra.mxu0 0
      %2517 = vmatprep.subr.bf16.mxu0 0
      %2518 = vmatpush2.bf16.msra.mxu0 0
      %2519 = vmatprep.subr.bf16.mxu0 0
      %2520 = vmatpush2.bf16.msra.mxu0 0
      %2521 = vmatprep.mubr.bf16.mxu0 0
      %2522 = vmatmul.mubr.bf16.gmra.mxu0 %v2409
      %v2523 = vpop.f32.mrf.mxu0
      %v2524 = vadd.f32 0.0, %v2523
      %v2525 = vpop.f32.mrf.mxu0
      %v2526 = vpop.f32.mrf.mxu0
      %v2527 = vadd.f32 0.0, %v2526
      %v2528 = vpop.f32.mrf.mxu0
      %2529 = vmatprep.mubr.bf16.mxu0 0
      %2530 = vmatmul.mubr.bf16.gmra.mxu0 %v2410
      %v2531 = vpop.f32.mrf.mxu0
      %v2532 = vpop.f32.mrf.mxu0
      %v2533 = vpop.f32.mrf.mxu0
      %v2534 = vpop.f32.mrf.mxu0
      %2535 = vmatprep.mubr.bf16.mxu0 0
      %2536 = vmatmul.mubr.bf16.gmra.mxu0 %v2411
      %v2537 = vpop.f32.mrf.mxu0
      %v2538 = vadd.f32 0.0, %v2537
      %v2539 = vpop.f32.mrf.mxu0
      %v2540 = vpop.f32.mrf.mxu0
      %v2541 = vadd.f32 0.0, %v2540
      %v2542 = vpop.f32.mrf.mxu0
      %2543 = vmatprep.mubr.bf16.mxu0 0
      %2544 = vmatmul.mubr.bf16.gmra.mxu0 %v2412
      %v2545 = vpop.f32.mrf.mxu0
      %v2546 = vpop.f32.mrf.mxu0
      %v2547 = vpop.f32.mrf.mxu0
      %v2548 = vpop.f32.mrf.mxu0
      %2549 = vmatprep.mubr.bf16.mxu0 0
      %2550 = vmatmul.mubr.bf16.gmra.mxu0 %v2413
      %v2551 = vpop.f32.mrf.mxu0
      %v2552 = vadd.f32 0.0, %v2551
      %v2553 = vpop.f32.mrf.mxu0
      %v2554 = vpop.f32.mrf.mxu0
      %v2555 = vadd.f32 0.0, %v2554
      %v2556 = vpop.f32.mrf.mxu0
      %2557 = vmatprep.mubr.bf16.mxu0 0
      %2558 = vmatmul.mubr.bf16.gmra.mxu0 %v2414
      %v2559 = vpop.f32.mrf.mxu0
      %v2560 = vpop.f32.mrf.mxu0
      %v2561 = vpop.f32.mrf.mxu0
      %v2562 = vpop.f32.mrf.mxu0
      %2563 = vmatprep.mubr.bf16.mxu0 0
      %2564 = vmatmul.mubr.bf16.gmra.mxu0 %v2415
      %v2565 = vpop.f32.mrf.mxu0
      %v2566 = vadd.f32 0.0, %v2565
      %v2567 = vpop.f32.mrf.mxu0
      %v2568 = vpop.f32.mrf.mxu0
      %v2569 = vadd.f32 0.0, %v2568
      %v2570 = vpop.f32.mrf.mxu0
      %2571 = vmatprep.mubr.bf16.mxu0 0
      %2572 = vmatmul.mubr.bf16.gmra.mxu0 %v2416
      %v2573 = vpop.f32.mrf.mxu0
      %v2574 = vpop.f32.mrf.mxu0
      %v2575 = vpop.f32.mrf.mxu0
      %v2576 = vpop.f32.mrf.mxu0
      %2577 = vmatprep.mubr.bf16.mxu0 0
      %2578 = vmatmul.mubr.bf16.gmra.mxu0 %v2417
      %v2579 = vpop.f32.mrf.mxu0
      %v2580 = vadd.f32 0.0, %v2579
      %v2581 = vpop.f32.mrf.mxu0
      %v2582 = vpop.f32.mrf.mxu0
      %v2583 = vadd.f32 0.0, %v2582
      %v2584 = vpop.f32.mrf.mxu0
      %2585 = vmatprep.mubr.bf16.mxu0 0
      %2586 = vmatmul.mubr.bf16.gmra.mxu0 %v2418
      %v2587 = vpop.f32.mrf.mxu0
      %v2588 = vpop.f32.mrf.mxu0
      %v2589 = vpop.f32.mrf.mxu0
      %v2590 = vpop.f32.mrf.mxu0
      %2591 = vmatprep.mubr.bf16.mxu0 0
      %2592 = vmatmul.mubr.bf16.gmra.mxu0 %v2419
      %v2593 = vpop.f32.mrf.mxu0
      %v2594 = vadd.f32 0.0, %v2593
      %v2595 = vpop.f32.mrf.mxu0
      %v2596 = vpop.f32.mrf.mxu0
      %v2597 = vadd.f32 0.0, %v2596
      %v2598 = vpop.f32.mrf.mxu0
      %2599 = vmatprep.mubr.bf16.mxu0 0
      %2600 = vmatmul.mubr.bf16.gmra.mxu0 %v2420
      %v2601 = vpop.f32.mrf.mxu0
      %v2602 = vpop.f32.mrf.mxu0
      %v2603 = vpop.f32.mrf.mxu0
      %v2604 = vpop.f32.mrf.mxu0
      %2605 = vmatprep.mubr.bf16.mxu0 0
      %2606 = vmatmul.mubr.bf16.gmra.mxu0 %v2421
      %v2607 = vpop.f32.mrf.mxu0
      %v2608 = vadd.f32 0.0, %v2607
      %v2609 = vpop.f32.mrf.mxu0
      %v2610 = vpop.f32.mrf.mxu0
      %v2611 = vadd.f32 0.0, %v2610
      %v2612 = vpop.f32.mrf.mxu0
      %2613 = vmatprep.mubr.bf16.mxu0 0
      %2614 = vmatmul.mubr.bf16.gmra.mxu0 %v2422
      %v2615 = vpop.f32.mrf.mxu0
      %v2616 = vpop.f32.mrf.mxu0
      %v2617 = vpop.f32.mrf.mxu0
      %v2618 = vpop.f32.mrf.mxu0
      %2619 = vmatprep.mubr.bf16.mxu0 0
      %2620 = vmatmul.mubr.bf16.gmra.mxu0 %v2423
      %v2621 = vpop.f32.mrf.mxu0
      %v2622 = vadd.f32 0.0, %v2621
      %v2623 = vpop.f32.mrf.mxu0
      %v2624 = vpop.f32.mrf.mxu0
      %v2625 = vadd.f32 0.0, %v2624
      %v2626 = vpop.f32.mrf.mxu0
      %2627 = vmatprep.mubr.bf16.mxu0 0
      %2628 = vmatmul.mubr.bf16.gmra.mxu0 %v2424
      %v2629 = vpop.f32.mrf.mxu0
      %v2630 = vpop.f32.mrf.mxu0
      %v2631 = vpop.f32.mrf.mxu0
      %v2632 = vpop.f32.mrf.mxu0
      %2633 = vdwg.mxu0
      %v2634 = vadd.f32 %v2280, %v2524
      %v2635 = vadd.f32 %v2281, %v2527
      %v2636 = vadd.f32 %v2282, %v2538
      %v2637 = vadd.f32 %v2283, %v2541
      %v2638 = vadd.f32 %v2284, %v2552
      %v2639 = vadd.f32 %v2285, %v2555
      %v2640 = vadd.f32 %v2286, %v2566
      %v2641 = vadd.f32 %v2287, %v2569
      %v2642 = vadd.f32 %v2288, %v2580
      %v2643 = vadd.f32 %v2289, %v2583
      %v2644 = vadd.f32 %v2290, %v2594
      %v2645 = vadd.f32 %v2291, %v2597
      %v2646 = vadd.f32 %v2292, %v2608
      %v2647 = vadd.f32 %v2293, %v2611
      %v2648 = vadd.f32 %v2294, %v2622
      %v2649 = vadd.f32 %v2295, %v2625
      %v2650 = vld [vmem:[#allocation2 + $0x10] sm:$0xf]
      %v2651 = vld [vmem:[#allocation2 + $0x14] sm:$0xf]
      %v2652 = vld [vmem:[#allocation2 + $0x18] sm:$0xf]
      %v2653 = vld [vmem:[#allocation2 + $0x1c] sm:$0xf]
      %v2654 = vld [vmem:[#allocation2 + $0x20] sm:$0xf]
      %v2655 = vld [vmem:[#allocation2 + $0x24] sm:$0xf]
      %v2656 = vld [vmem:[#allocation2 + $0x28] sm:$0xf]
      %v2657 = vld [vmem:[#allocation2 + $0x2c] sm:$0xf]
      %v2658 = vld [vmem:[#allocation2 + $0x30] sm:$0xf]
      %v2659 = vld [vmem:[#allocation2 + $0x34] sm:$0xf]
      %v2660 = vld [vmem:[#allocation2 + $0x38] sm:$0xf]
      %v2661 = vld [vmem:[#allocation2 + $0x3c] sm:$0xf]
      %v2662 = vld [vmem:[#allocation2 + $0x40] sm:$0xf]
      %v2663 = vld [vmem:[#allocation2 + $0x44] sm:$0xf]
      %v2664 = vld [vmem:[#allocation2 + $0x48] sm:$0xf]
      %v2665 = vld [vmem:[#allocation2 + $0x4c] sm:$0xf]
      %v2666 = vld [vmem:[#allocation2 + $0x50] sm:$0xf]
      %v2667 = vld [vmem:[#allocation2 + $0x54] sm:$0xf]
      %v2668 = vld [vmem:[#allocation2 + $0x58] sm:$0xf]
      %v2669 = vld [vmem:[#allocation2 + $0x5c] sm:$0xf]
      %v2670 = vld [vmem:[#allocation2 + $0x60] sm:$0xf]
      %v2671 = vld [vmem:[#allocation2 + $0x64] sm:$0xf]
      %v2672 = vld [vmem:[#allocation2 + $0x68] sm:$0xf]
      %v2673 = vld [vmem:[#allocation2 + $0x6c] sm:$0xf]
      %v2674 = vld [vmem:[#allocation2 + $0x70] sm:$0xf]
      %v2675 = vld [vmem:[#allocation2 + $0x74] sm:$0xf]
      %v2676 = vld [vmem:[#allocation2 + $0x78] sm:$0xf]
      %v2677 = vld [vmem:[#allocation2 + $0x7c] sm:$0xf]
      %v2678 = vld [vmem:[#allocation2 + $0x80] sm:$0xf]
      %v2679 = vld [vmem:[#allocation2 + $0x84] sm:$0xf]
      %v2680 = vld [vmem:[#allocation2 + $0x88] sm:$0xf]
      %v2681 = vld [vmem:[#allocation2 + $0x8c] sm:$0xf]
      %v2682 = vld [vmem:[#allocation2 + $0x90] sm:$0x1]
      %s2683 = scalar_lea.vmem %s4, 256
      %v2684 = vld [vmem:[%s2683] sm:$0xf]
      %v2685 = vld [vmem:[%s2683 + $0x4] sm:$0xf]
      %v2686 = vld [vmem:[%s2683 + $0x8] sm:$0xf]
      %v2687 = vld [vmem:[%s2683 + $0xc] sm:$0xf]
      %v2688 = vld [vmem:[%s2683 + $0x10] sm:$0xf]
      %v2689 = vld [vmem:[%s2683 + $0x14] sm:$0xf]
      %v2690 = vld [vmem:[%s2683 + $0x18] sm:$0xf]
      %v2691 = vld [vmem:[%s2683 + $0x1c] sm:$0xf]
      %v2692 = vld [vmem:[%s2683 + $0x20] sm:$0xf]
      %v2693 = vld [vmem:[%s2683 + $0x24] sm:$0xf]
      %v2694 = vld [vmem:[%s2683 + $0x28] sm:$0xf]
      %v2695 = vld [vmem:[%s2683 + $0x2c] sm:$0xf]
      %v2696 = vld [vmem:[%s2683 + $0x30] sm:$0xf]
      %v2697 = vld [vmem:[%s2683 + $0x34] sm:$0xf]
      %v2698 = vld [vmem:[%s2683 + $0x38] sm:$0xf]
      %v2699 = vld [vmem:[%s2683 + $0x3c] sm:$0xf]
      %v2733 = vunpack.c.l.b16 %v2650
      %v2734 = vunpack.c.l.b16 %v2651
      %v2735 = vunpack.c.l.b16 %v2652
      %v2736 = vunpack.c.l.b16 %v2653
      %v2737 = vunpack.c.l.b16 %v2654
      %v2738 = vunpack.c.l.b16 %v2655
      %v2739 = vunpack.c.l.b16 %v2656
      %v2740 = vunpack.c.l.b16 %v2657
      %v2741 = vunpack.c.l.b16 %v2658
      %v2742 = vunpack.c.l.b16 %v2659
      %v2743 = vunpack.c.l.b16 %v2660
      %v2744 = vunpack.c.l.b16 %v2661
      %v2745 = vunpack.c.l.b16 %v2662
      %v2746 = vunpack.c.l.b16 %v2663
      %v2747 = vunpack.c.l.b16 %v2664
      %v2748 = vunpack.c.l.b16 %v2665
      %v2749 = vunpack.c.l.b16 %v2666
      %v2750 = vunpack.c.l.b16 %v2667
      %v2751 = vunpack.c.l.b16 %v2668
      %v2752 = vunpack.c.l.b16 %v2669
      %v2753 = vunpack.c.l.b16 %v2670
      %v2754 = vunpack.c.l.b16 %v2671
      %v2755 = vunpack.c.l.b16 %v2672
      %v2756 = vunpack.c.l.b16 %v2673
      %v2757 = vunpack.c.l.b16 %v2674
      %v2758 = vunpack.c.l.b16 %v2675
      %v2759 = vunpack.c.l.b16 %v2676
      %v2760 = vunpack.c.l.b16 %v2677
      %v2761 = vunpack.c.l.b16 %v2678
      %v2762 = vunpack.c.l.b16 %v2679
      %v2763 = vunpack.c.l.b16 %v2680
      %v2764 = vunpack.c.l.b16 %v2681
      %v2765 = vunpack.c.l.b16 %v2682
      %v2766 = vpack.c.b16 %v2734, %v2733
      %v2767 = vpack.c.b16 %v2736, %v2735
      %v2768 = vpack.c.b16 %v2738, %v2737
      %v2769 = vpack.c.b16 %v2740, %v2739
      %v2770 = vpack.c.b16 %v2742, %v2741
      %v2771 = vpack.c.b16 %v2744, %v2743
      %v2772 = vpack.c.b16 %v2746, %v2745
      %v2773 = vpack.c.b16 %v2748, %v2747
      %v2774 = vpack.c.b16 %v2750, %v2749
      %v2775 = vpack.c.b16 %v2752, %v2751
      %v2776 = vpack.c.b16 %v2754, %v2753
      %v2777 = vpack.c.b16 %v2756, %v2755
      %v2778 = vpack.c.b16 %v2758, %v2757
      %v2779 = vpack.c.b16 %v2760, %v2759
      %v2780 = vpack.c.b16 %v2762, %v2761
      %v2781 = vpack.c.b16 %v2764, %v2763
      %v2782 = vpack.c.b16 %v2765, %v2765
      %v2784 = vshrl.u32 %v2766, 16
      %v2786 = vshll.u32 %v2766, 16
      %v2788 = vrot.slane %v2786, 1
      %v2789 = vor.u32 %v2784, %v2788
      %v2791 = vshll.u32 %v2767, 16
      %v2793 = vrot.slane %v2791, 1
      %v2794 = vsel %vm1465, %v2789, %v2793
      %v2795 = vshrl.u32 %v2767, 16
      %v2797 = vor.u32 %v2795, %v2793
      %v2799 = vshll.u32 %v2768, 16
      %v2801 = vrot.slane %v2799, 1
      %v2802 = vsel %vm1465, %v2797, %v2801
      %v2803 = vshrl.u32 %v2768, 16
      %v2805 = vor.u32 %v2803, %v2801
      %v2807 = vshll.u32 %v2769, 16
      %v2809 = vrot.slane %v2807, 1
      %v2810 = vsel %vm1465, %v2805, %v2809
      %v2811 = vshrl.u32 %v2769, 16
      %v2813 = vor.u32 %v2811, %v2809
      %v2815 = vshll.u32 %v2770, 16
      %v2817 = vrot.slane %v2815, 1
      %v2818 = vsel %vm1465, %v2813, %v2817
      %v2819 = vshrl.u32 %v2770, 16
      %v2821 = vor.u32 %v2819, %v2817
      %v2823 = vshll.u32 %v2771, 16
      %v2825 = vrot.slane %v2823, 1
      %v2826 = vsel %vm1465, %v2821, %v2825
      %v2827 = vshrl.u32 %v2771, 16
      %v2829 = vor.u32 %v2827, %v2825
      %v2831 = vshll.u32 %v2772, 16
      %v2833 = vrot.slane %v2831, 1
      %v2834 = vsel %vm1465, %v2829, %v2833
      %v2835 = vshrl.u32 %v2772, 16
      %v2837 = vor.u32 %v2835, %v2833
      %v2839 = vshll.u32 %v2773, 16
      %v2841 = vrot.slane %v2839, 1
      %v2842 = vsel %vm1465, %v2837, %v2841
      %v2843 = vshrl.u32 %v2773, 16
      %v2845 = vor.u32 %v2843, %v2841
      %v2847 = vshll.u32 %v2774, 16
      %v2849 = vrot.slane %v2847, 1
      %v2850 = vsel %vm1465, %v2845, %v2849
      %v2851 = vshrl.u32 %v2774, 16
      %v2853 = vor.u32 %v2851, %v2849
      %v2855 = vshll.u32 %v2775, 16
      %v2857 = vrot.slane %v2855, 1
      %v2858 = vsel %vm1465, %v2853, %v2857
      %v2859 = vshrl.u32 %v2775, 16
      %v2861 = vor.u32 %v2859, %v2857
      %v2863 = vshll.u32 %v2776, 16
      %v2865 = vrot.slane %v2863, 1
      %v2866 = vsel %vm1465, %v2861, %v2865
      %v2867 = vshrl.u32 %v2776, 16
      %v2869 = vor.u32 %v2867, %v2865
      %v2871 = vshll.u32 %v2777, 16
      %v2873 = vrot.slane %v2871, 1
      %v2874 = vsel %vm1465, %v2869, %v2873
      %v2875 = vshrl.u32 %v2777, 16
      %v2877 = vor.u32 %v2875, %v2873
      %v2879 = vshll.u32 %v2778, 16
      %v2881 = vrot.slane %v2879, 1
      %v2882 = vsel %vm1465, %v2877, %v2881
      %v2883 = vshrl.u32 %v2778, 16
      %v2885 = vor.u32 %v2883, %v2881
      %v2887 = vshll.u32 %v2779, 16
      %v2889 = vrot.slane %v2887, 1
      %v2890 = vsel %vm1465, %v2885, %v2889
      %v2891 = vshrl.u32 %v2779, 16
      %v2893 = vor.u32 %v2891, %v2889
      %v2895 = vshll.u32 %v2780, 16
      %v2897 = vrot.slane %v2895, 1
      %v2898 = vsel %vm1465, %v2893, %v2897
      %v2899 = vshrl.u32 %v2780, 16
      %v2901 = vor.u32 %v2899, %v2897
      %v2903 = vshll.u32 %v2781, 16
      %v2905 = vrot.slane %v2903, 1
      %v2906 = vsel %vm1465, %v2901, %v2905
      %v2907 = vshrl.u32 %v2781, 16
      %v2909 = vor.u32 %v2907, %v2905
      %v2911 = vshll.u32 %v2782, 16
      %v2913 = vrot.slane %v2911, 1
      %v2914 = vsel %vm1465, %v2909, %v2913
      %v2947 = vunpack.c.l.b16 %v2684
      %v2948 = vunpack.c.l.b16 %v2685
      %v2949 = vunpack.c.l.b16 %v2686
      %v2950 = vunpack.c.l.b16 %v2687
      %v2951 = vunpack.c.l.b16 %v2688
      %v2952 = vunpack.c.l.b16 %v2689
      %v2953 = vunpack.c.l.b16 %v2690
      %v2954 = vunpack.c.l.b16 %v2691
      %v2955 = vunpack.c.l.b16 %v2692
      %v2956 = vunpack.c.l.b16 %v2693
      %v2957 = vunpack.c.l.b16 %v2694
      %v2958 = vunpack.c.l.b16 %v2695
      %v2959 = vunpack.c.l.b16 %v2696
      %v2960 = vunpack.c.l.b16 %v2697
      %v2961 = vunpack.c.l.b16 %v2698
      %v2962 = vunpack.c.l.b16 %v2699
      %v2963 = vpack.c.b16 %v2948, %v2947
      %v2964 = vpack.c.b16 %v2950, %v2949
      %v2965 = vpack.c.b16 %v2952, %v2951
      %v2966 = vpack.c.b16 %v2954, %v2953
      %v2967 = vpack.c.b16 %v2956, %v2955
      %v2968 = vpack.c.b16 %v2958, %v2957
      %v2969 = vpack.c.b16 %v2960, %v2959
      %v2970 = vpack.c.b16 %v2962, %v2961
      %2979 = vmatprep.subr.bf16.mxu0 0
      %2980 = vmatpush1.bf16.msra.mxu0 %v2970
      %2981 = vmatprep.subr.bf16.mxu0 0
      %2982 = vmatpush1.bf16.msra.mxu0 %v2969
      %2983 = vmatprep.subr.bf16.mxu0 0
      %2984 = vmatpush1.bf16.msra.mxu0 %v2968
      %2985 = vmatprep.subr.bf16.mxu0 0
      %2986 = vmatpush1.bf16.msra.mxu0 %v2967
      %2987 = vmatprep.subr.bf16.mxu0 0
      %2988 = vmatpush1.bf16.msra.mxu0 %v2966
      %2989 = vmatprep.subr.bf16.mxu0 0
      %2990 = vmatpush1.bf16.msra.mxu0 %v2965
      %2991 = vmatprep.subr.bf16.mxu0 0
      %2992 = vmatpush1.bf16.msra.mxu0 %v2964
      %2993 = vmatprep.subr.bf16.mxu0 0
      %2994 = vmatpush1.bf16.msra.mxu0 %v2963
      %2995 = vmatprep.subr.bf16.mxu0 0
      %2996 = vmatpush2.bf16.msra.mxu0 0
      %2997 = vmatprep.subr.bf16.mxu0 0
      %2998 = vmatpush2.bf16.msra.mxu0 0
      %2999 = vmatprep.subr.bf16.mxu0 0
      %3000 = vmatpush2.bf16.msra.mxu0 0
      %3001 = vmatprep.subr.bf16.mxu0 0
      %3002 = vmatpush2.bf16.msra.mxu0 0
      %3003 = vmatprep.subr.bf16.mxu0 0
      %3004 = vmatpush2.bf16.msra.mxu0 0
      %3005 = vmatprep.subr.bf16.mxu0 0
      %3006 = vmatpush2.bf16.msra.mxu0 0
      %3007 = vmatprep.subr.bf16.mxu0 0
      %3008 = vmatpush2.bf16.msra.mxu0 0
      %3009 = vmatprep.subr.bf16.mxu0 0
      %3010 = vmatpush2.bf16.msra.mxu0 0
      %3011 = vmatprep.mubr.bf16.mxu0 0
      %3012 = vmatmul.mubr.bf16.gmra.mxu0 %v2794
      %v3013 = vpop.f32.mrf.mxu0
      %v3014 = vadd.f32 0.0, %v3013
      %v3015 = vpop.f32.mrf.mxu0
      %v3016 = vpop.f32.mrf.mxu0
      %v3017 = vadd.f32 0.0, %v3016
      %v3018 = vpop.f32.mrf.mxu0
      %3019 = vmatprep.mubr.bf16.mxu0 0
      %3020 = vmatmul.mubr.bf16.gmra.mxu0 %v2802
      %v3021 = vpop.f32.mrf.mxu0
      %v3022 = vpop.f32.mrf.mxu0
      %v3023 = vpop.f32.mrf.mxu0
      %v3024 = vpop.f32.mrf.mxu0
      %3025 = vmatprep.mubr.bf16.mxu0 0
      %3026 = vmatmul.mubr.bf16.gmra.mxu0 %v2810
      %v3027 = vpop.f32.mrf.mxu0
      %v3028 = vadd.f32 0.0, %v3027
      %v3029 = vpop.f32.mrf.mxu0
      %v3030 = vpop.f32.mrf.mxu0
      %v3031 = vadd.f32 0.0, %v3030
      %v3032 = vpop.f32.mrf.mxu0
      %3033 = vmatprep.mubr.bf16.mxu0 0
      %3034 = vmatmul.mubr.bf16.gmra.mxu0 %v2818
      %v3035 = vpop.f32.mrf.mxu0
      %v3036 = vpop.f32.mrf.mxu0
      %v3037 = vpop.f32.mrf.mxu0
      %v3038 = vpop.f32.mrf.mxu0
      %3039 = vmatprep.mubr.bf16.mxu0 0
      %3040 = vmatmul.mubr.bf16.gmra.mxu0 %v2826
      %v3041 = vpop.f32.mrf.mxu0
      %v3042 = vadd.f32 0.0, %v3041
      %v3043 = vpop.f32.mrf.mxu0
      %v3044 = vpop.f32.mrf.mxu0
      %v3045 = vadd.f32 0.0, %v3044
      %v3046 = vpop.f32.mrf.mxu0
      %3047 = vmatprep.mubr.bf16.mxu0 0
      %3048 = vmatmul.mubr.bf16.gmra.mxu0 %v2834
      %v3049 = vpop.f32.mrf.mxu0
      %v3050 = vpop.f32.mrf.mxu0
      %v3051 = vpop.f32.mrf.mxu0
      %v3052 = vpop.f32.mrf.mxu0
      %3053 = vmatprep.mubr.bf16.mxu0 0
      %3054 = vmatmul.mubr.bf16.gmra.mxu0 %v2842
      %v3055 = vpop.f32.mrf.mxu0
      %v3056 = vadd.f32 0.0, %v3055
      %v3057 = vpop.f32.mrf.mxu0
      %v3058 = vpop.f32.mrf.mxu0
      %v3059 = vadd.f32 0.0, %v3058
      %v3060 = vpop.f32.mrf.mxu0
      %3061 = vmatprep.mubr.bf16.mxu0 0
      %3062 = vmatmul.mubr.bf16.gmra.mxu0 %v2850
      %v3063 = vpop.f32.mrf.mxu0
      %v3064 = vpop.f32.mrf.mxu0
      %v3065 = vpop.f32.mrf.mxu0
      %v3066 = vpop.f32.mrf.mxu0
      %3067 = vmatprep.mubr.bf16.mxu0 0
      %3068 = vmatmul.mubr.bf16.gmra.mxu0 %v2858
      %v3069 = vpop.f32.mrf.mxu0
      %v3070 = vadd.f32 0.0, %v3069
      %v3071 = vpop.f32.mrf.mxu0
      %v3072 = vpop.f32.mrf.mxu0
      %v3073 = vadd.f32 0.0, %v3072
      %v3074 = vpop.f32.mrf.mxu0
      %3075 = vmatprep.mubr.bf16.mxu0 0
      %3076 = vmatmul.mubr.bf16.gmra.mxu0 %v2866
      %v3077 = vpop.f32.mrf.mxu0
      %v3078 = vpop.f32.mrf.mxu0
      %v3079 = vpop.f32.mrf.mxu0
      %v3080 = vpop.f32.mrf.mxu0
      %3081 = vmatprep.mubr.bf16.mxu0 0
      %3082 = vmatmul.mubr.bf16.gmra.mxu0 %v2874
      %v3083 = vpop.f32.mrf.mxu0
      %v3084 = vadd.f32 0.0, %v3083
      %v3085 = vpop.f32.mrf.mxu0
      %v3086 = vpop.f32.mrf.mxu0
      %v3087 = vadd.f32 0.0, %v3086
      %v3088 = vpop.f32.mrf.mxu0
      %3089 = vmatprep.mubr.bf16.mxu0 0
      %3090 = vmatmul.mubr.bf16.gmra.mxu0 %v2882
      %v3091 = vpop.f32.mrf.mxu0
      %v3092 = vpop.f32.mrf.mxu0
      %v3093 = vpop.f32.mrf.mxu0
      %v3094 = vpop.f32.mrf.mxu0
      %3095 = vmatprep.mubr.bf16.mxu0 0
      %3096 = vmatmul.mubr.bf16.gmra.mxu0 %v2890
      %v3097 = vpop.f32.mrf.mxu0
      %v3098 = vadd.f32 0.0, %v3097
      %v3099 = vpop.f32.mrf.mxu0
      %v3100 = vpop.f32.mrf.mxu0
      %v3101 = vadd.f32 0.0, %v3100
      %v3102 = vpop.f32.mrf.mxu0
      %3103 = vmatprep.mubr.bf16.mxu0 0
      %3104 = vmatmul.mubr.bf16.gmra.mxu0 %v2898
      %v3105 = vpop.f32.mrf.mxu0
      %v3106 = vpop.f32.mrf.mxu0
      %v3107 = vpop.f32.mrf.mxu0
      %v3108 = vpop.f32.mrf.mxu0
      %3109 = vmatprep.mubr.bf16.mxu0 0
      %3110 = vmatmul.mubr.bf16.gmra.mxu0 %v2906
      %v3111 = vpop.f32.mrf.mxu0
      %v3112 = vadd.f32 0.0, %v3111
      %v3113 = vpop.f32.mrf.mxu0
      %v3114 = vpop.f32.mrf.mxu0
      %v3115 = vadd.f32 0.0, %v3114
      %v3116 = vpop.f32.mrf.mxu0
      %3117 = vmatprep.mubr.bf16.mxu0 0
      %3118 = vmatmul.mubr.bf16.gmra.mxu0 %v2914
      %v3119 = vpop.f32.mrf.mxu0
      %v3120 = vpop.f32.mrf.mxu0
      %v3121 = vpop.f32.mrf.mxu0
      %v3122 = vpop.f32.mrf.mxu0
      %3123 = vdwg.mxu0
      %v3124 = vadd.f32 %v2634, %v3014
      %v3125 = vadd.f32 %v2635, %v3017
      %v3126 = vadd.f32 %v2636, %v3028
      %v3127 = vadd.f32 %v2637, %v3031
      %v3128 = vadd.f32 %v2638, %v3042
      %v3129 = vadd.f32 %v2639, %v3045
      %v3130 = vadd.f32 %v2640, %v3056
      %v3131 = vadd.f32 %v2641, %v3059
      %v3132 = vadd.f32 %v2642, %v3070
      %v3133 = vadd.f32 %v2643, %v3073
      %v3134 = vadd.f32 %v2644, %v3084
      %v3135 = vadd.f32 %v2645, %v3087
      %v3136 = vadd.f32 %v2646, %v3098
      %v3137 = vadd.f32 %v2647, %v3101
      %v3138 = vadd.f32 %v2648, %v3112
      %v3139 = vadd.f32 %v2649, %v3115
      %v3140 = vld [vmem:[#allocation2 + $0x10] sm:$0xe]
      %s3141 = scalar_lea.vmem %s4, 320
      %v3142 = vld [vmem:[%s3141] sm:$0xf]
      %v3143 = vld [vmem:[%s3141 + $0x4] sm:$0xf]
      %v3144 = vld [vmem:[%s3141 + $0x8] sm:$0xf]
      %v3145 = vld [vmem:[%s3141 + $0xc] sm:$0xf]
      %v3146 = vld [vmem:[%s3141 + $0x10] sm:$0xf]
      %v3147 = vld [vmem:[%s3141 + $0x14] sm:$0xf]
      %v3148 = vld [vmem:[%s3141 + $0x18] sm:$0xf]
      %v3149 = vld [vmem:[%s3141 + $0x1c] sm:$0xf]
      %v3150 = vld [vmem:[%s3141 + $0x20] sm:$0xf]
      %v3151 = vld [vmem:[%s3141 + $0x24] sm:$0xf]
      %v3152 = vld [vmem:[%s3141 + $0x28] sm:$0xf]
      %v3153 = vld [vmem:[%s3141 + $0x2c] sm:$0xf]
      %v3154 = vld [vmem:[%s3141 + $0x30] sm:$0xf]
      %v3155 = vld [vmem:[%s3141 + $0x34] sm:$0xf]
      %v3156 = vld [vmem:[%s3141 + $0x38] sm:$0xf]
      %v3157 = vld [vmem:[%s3141 + $0x3c] sm:$0xf]
      %v3159 = vunpack.c.l.b16 %v3140
      %v3160 = vpack.c.b16 %v2734, %v3159
      %v3161 = vrot.slane %v3160, 1
      %v3162 = vrot.slane %v2767, 1
      %v3163 = vsel %vm2037, %v3161, %v3162
      %v3164 = vrot.slane %v2768, 1
      %v3165 = vsel %vm2037, %v3162, %v3164
      %v3166 = vrot.slane %v2769, 1
      %v3167 = vsel %vm2037, %v3164, %v3166
      %v3168 = vrot.slane %v2770, 1
      %v3169 = vsel %vm2037, %v3166, %v3168
      %v3170 = vrot.slane %v2771, 1
      %v3171 = vsel %vm2037, %v3168, %v3170
      %v3172 = vrot.slane %v2772, 1
      %v3173 = vsel %vm2037, %v3170, %v3172
      %v3174 = vrot.slane %v2773, 1
      %v3175 = vsel %vm2037, %v3172, %v3174
      %v3176 = vrot.slane %v2774, 1
      %v3177 = vsel %vm2037, %v3174, %v3176
      %v3178 = vrot.slane %v2775, 1
      %v3179 = vsel %vm2037, %v3176, %v3178
      %v3180 = vrot.slane %v2776, 1
      %v3181 = vsel %vm2037, %v3178, %v3180
      %v3182 = vrot.slane %v2777, 1
      %v3183 = vsel %vm2037, %v3180, %v3182
      %v3184 = vrot.slane %v2778, 1
      %v3185 = vsel %vm2037, %v3182, %v3184
      %v3186 = vrot.slane %v2779, 1
      %v3187 = vsel %vm2037, %v3184, %v3186
      %v3188 = vrot.slane %v2780, 1
      %v3189 = vsel %vm2037, %v3186, %v3188
      %v3190 = vrot.slane %v2781, 1
      %v3191 = vsel %vm2037, %v3188, %v3190
      %v3192 = vrot.slane %v2782, 1
      %v3193 = vsel %vm2037, %v3190, %v3192
      %v3226 = vunpack.c.l.b16 %v3142
      %v3227 = vunpack.c.l.b16 %v3143
      %v3228 = vunpack.c.l.b16 %v3144
      %v3229 = vunpack.c.l.b16 %v3145
      %v3230 = vunpack.c.l.b16 %v3146
      %v3231 = vunpack.c.l.b16 %v3147
      %v3232 = vunpack.c.l.b16 %v3148
      %v3233 = vunpack.c.l.b16 %v3149
      %v3234 = vunpack.c.l.b16 %v3150
      %v3235 = vunpack.c.l.b16 %v3151
      %v3236 = vunpack.c.l.b16 %v3152
      %v3237 = vunpack.c.l.b16 %v3153
      %v3238 = vunpack.c.l.b16 %v3154
      %v3239 = vunpack.c.l.b16 %v3155
      %v3240 = vunpack.c.l.b16 %v3156
      %v3241 = vunpack.c.l.b16 %v3157
      %v3242 = vpack.c.b16 %v3227, %v3226
      %v3243 = vpack.c.b16 %v3229, %v3228
      %v3244 = vpack.c.b16 %v3231, %v3230
      %v3245 = vpack.c.b16 %v3233, %v3232
      %v3246 = vpack.c.b16 %v3235, %v3234
      %v3247 = vpack.c.b16 %v3237, %v3236
      %v3248 = vpack.c.b16 %v3239, %v3238
      %v3249 = vpack.c.b16 %v3241, %v3240
      %3258 = vmatprep.subr.bf16.mxu0 0
      %3259 = vmatpush1.bf16.msra.mxu0 %v3249
      %3260 = vmatprep.subr.bf16.mxu0 0
      %3261 = vmatpush1.bf16.msra.mxu0 %v3248
      %3262 = vmatprep.subr.bf16.mxu0 0
      %3263 = vmatpush1.bf16.msra.mxu0 %v3247
      %3264 = vmatprep.subr.bf16.mxu0 0
      %3265 = vmatpush1.bf16.msra.mxu0 %v3246
      %3266 = vmatprep.subr.bf16.mxu0 0
      %3267 = vmatpush1.bf16.msra.mxu0 %v3245
      %3268 = vmatprep.subr.bf16.mxu0 0
      %3269 = vmatpush1.bf16.msra.mxu0 %v3244
      %3270 = vmatprep.subr.bf16.mxu0 0
      %3271 = vmatpush1.bf16.msra.mxu0 %v3243
      %3272 = vmatprep.subr.bf16.mxu0 0
      %3273 = vmatpush1.bf16.msra.mxu0 %v3242
      %3274 = vmatprep.subr.bf16.mxu0 0
      %3275 = vmatpush2.bf16.msra.mxu0 0
      %3276 = vmatprep.subr.bf16.mxu0 0
      %3277 = vmatpush2.bf16.msra.mxu0 0
      %3278 = vmatprep.subr.bf16.mxu0 0
      %3279 = vmatpush2.bf16.msra.mxu0 0
      %3280 = vmatprep.subr.bf16.mxu0 0
      %3281 = vmatpush2.bf16.msra.mxu0 0
      %3282 = vmatprep.subr.bf16.mxu0 0
      %3283 = vmatpush2.bf16.msra.mxu0 0
      %3284 = vmatprep.subr.bf16.mxu0 0
      %3285 = vmatpush2.bf16.msra.mxu0 0
      %3286 = vmatprep.subr.bf16.mxu0 0
      %3287 = vmatpush2.bf16.msra.mxu0 0
      %3288 = vmatprep.subr.bf16.mxu0 0
      %3289 = vmatpush2.bf16.msra.mxu0 0
      %3290 = vmatprep.mubr.bf16.mxu0 0
      %3291 = vmatmul.mubr.bf16.gmra.mxu0 %v3163
      %v3292 = vpop.f32.mrf.mxu0
      %v3293 = vadd.f32 0.0, %v3292
      %v3294 = vpop.f32.mrf.mxu0
      %v3295 = vpop.f32.mrf.mxu0
      %v3296 = vadd.f32 0.0, %v3295
      %v3297 = vpop.f32.mrf.mxu0
      %3298 = vmatprep.mubr.bf16.mxu0 0
      %3299 = vmatmul.mubr.bf16.gmra.mxu0 %v3165
      %v3300 = vpop.f32.mrf.mxu0
      %v3301 = vpop.f32.mrf.mxu0
      %v3302 = vpop.f32.mrf.mxu0
      %v3303 = vpop.f32.mrf.mxu0
      %3304 = vmatprep.mubr.bf16.mxu0 0
      %3305 = vmatmul.mubr.bf16.gmra.mxu0 %v3167
      %v3306 = vpop.f32.mrf.mxu0
      %v3307 = vadd.f32 0.0, %v3306
      %v3308 = vpop.f32.mrf.mxu0
      %v3309 = vpop.f32.mrf.mxu0
      %v3310 = vadd.f32 0.0, %v3309
      %v3311 = vpop.f32.mrf.mxu0
      %3312 = vmatprep.mubr.bf16.mxu0 0
      %3313 = vmatmul.mubr.bf16.gmra.mxu0 %v3169
      %v3314 = vpop.f32.mrf.mxu0
      %v3315 = vpop.f32.mrf.mxu0
      %v3316 = vpop.f32.mrf.mxu0
      %v3317 = vpop.f32.mrf.mxu0
      %3318 = vmatprep.mubr.bf16.mxu0 0
      %3319 = vmatmul.mubr.bf16.gmra.mxu0 %v3171
      %v3320 = vpop.f32.mrf.mxu0
      %v3321 = vadd.f32 0.0, %v3320
      %v3322 = vpop.f32.mrf.mxu0
      %v3323 = vpop.f32.mrf.mxu0
      %v3324 = vadd.f32 0.0, %v3323
      %v3325 = vpop.f32.mrf.mxu0
      %3326 = vmatprep.mubr.bf16.mxu0 0
      %3327 = vmatmul.mubr.bf16.gmra.mxu0 %v3173
      %v3328 = vpop.f32.mrf.mxu0
      %v3329 = vpop.f32.mrf.mxu0
      %v3330 = vpop.f32.mrf.mxu0
      %v3331 = vpop.f32.mrf.mxu0
      %3332 = vmatprep.mubr.bf16.mxu0 0
      %3333 = vmatmul.mubr.bf16.gmra.mxu0 %v3175
      %v3334 = vpop.f32.mrf.mxu0
      %v3335 = vadd.f32 0.0, %v3334
      %v3336 = vpop.f32.mrf.mxu0
      %v3337 = vpop.f32.mrf.mxu0
      %v3338 = vadd.f32 0.0, %v3337
      %v3339 = vpop.f32.mrf.mxu0
      %3340 = vmatprep.mubr.bf16.mxu0 0
      %3341 = vmatmul.mubr.bf16.gmra.mxu0 %v3177
      %v3342 = vpop.f32.mrf.mxu0
      %v3343 = vpop.f32.mrf.mxu0
      %v3344 = vpop.f32.mrf.mxu0
      %v3345 = vpop.f32.mrf.mxu0
      %3346 = vmatprep.mubr.bf16.mxu0 0
      %3347 = vmatmul.mubr.bf16.gmra.mxu0 %v3179
      %v3348 = vpop.f32.mrf.mxu0
      %v3349 = vadd.f32 0.0, %v3348
      %v3350 = vpop.f32.mrf.mxu0
      %v3351 = vpop.f32.mrf.mxu0
      %v3352 = vadd.f32 0.0, %v3351
      %v3353 = vpop.f32.mrf.mxu0
      %3354 = vmatprep.mubr.bf16.mxu0 0
      %3355 = vmatmul.mubr.bf16.gmra.mxu0 %v3181
      %v3356 = vpop.f32.mrf.mxu0
      %v3357 = vpop.f32.mrf.mxu0
      %v3358 = vpop.f32.mrf.mxu0
      %v3359 = vpop.f32.mrf.mxu0
      %3360 = vmatprep.mubr.bf16.mxu0 0
      %3361 = vmatmul.mubr.bf16.gmra.mxu0 %v3183
      %v3362 = vpop.f32.mrf.mxu0
      %v3363 = vadd.f32 0.0, %v3362
      %v3364 = vpop.f32.mrf.mxu0
      %v3365 = vpop.f32.mrf.mxu0
      %v3366 = vadd.f32 0.0, %v3365
      %v3367 = vpop.f32.mrf.mxu0
      %3368 = vmatprep.mubr.bf16.mxu0 0
      %3369 = vmatmul.mubr.bf16.gmra.mxu0 %v3185
      %v3370 = vpop.f32.mrf.mxu0
      %v3371 = vpop.f32.mrf.mxu0
      %v3372 = vpop.f32.mrf.mxu0
      %v3373 = vpop.f32.mrf.mxu0
      %3374 = vmatprep.mubr.bf16.mxu0 0
      %3375 = vmatmul.mubr.bf16.gmra.mxu0 %v3187
      %v3376 = vpop.f32.mrf.mxu0
      %v3377 = vadd.f32 0.0, %v3376
      %v3378 = vpop.f32.mrf.mxu0
      %v3379 = vpop.f32.mrf.mxu0
      %v3380 = vadd.f32 0.0, %v3379
      %v3381 = vpop.f32.mrf.mxu0
      %3382 = vmatprep.mubr.bf16.mxu0 0
      %3383 = vmatmul.mubr.bf16.gmra.mxu0 %v3189
      %v3384 = vpop.f32.mrf.mxu0
      %v3385 = vpop.f32.mrf.mxu0
      %v3386 = vpop.f32.mrf.mxu0
      %v3387 = vpop.f32.mrf.mxu0
      %3388 = vmatprep.mubr.bf16.mxu0 0
      %3389 = vmatmul.mubr.bf16.gmra.mxu0 %v3191
      %v3390 = vpop.f32.mrf.mxu0
      %v3391 = vadd.f32 0.0, %v3390
      %v3392 = vpop.f32.mrf.mxu0
      %v3393 = vpop.f32.mrf.mxu0
      %v3394 = vadd.f32 0.0, %v3393
      %v3395 = vpop.f32.mrf.mxu0
      %3396 = vmatprep.mubr.bf16.mxu0 0
      %3397 = vmatmul.mubr.bf16.gmra.mxu0 %v3193
      %v3398 = vpop.f32.mrf.mxu0
      %v3399 = vpop.f32.mrf.mxu0
      %v3400 = vpop.f32.mrf.mxu0
      %v3401 = vpop.f32.mrf.mxu0
      %3402 = vdwg.mxu0
      %v3403 = vadd.f32 %v3124, %v3293
      %v3404 = vadd.f32 %v3125, %v3296
      %v3405 = vadd.f32 %v3126, %v3307
      %v3406 = vadd.f32 %v3127, %v3310
      %v3407 = vadd.f32 %v3128, %v3321
      %v3408 = vadd.f32 %v3129, %v3324
      %v3409 = vadd.f32 %v3130, %v3335
      %v3410 = vadd.f32 %v3131, %v3338
      %v3411 = vadd.f32 %v3132, %v3349
      %v3412 = vadd.f32 %v3133, %v3352
      %v3413 = vadd.f32 %v3134, %v3363
      %v3414 = vadd.f32 %v3135, %v3366
      %v3415 = vadd.f32 %v3136, %v3377
      %v3416 = vadd.f32 %v3137, %v3380
      %v3417 = vadd.f32 %v3138, %v3391
      %v3418 = vadd.f32 %v3139, %v3394
      %v3419 = vld [vmem:[#allocation2 + $0x20] sm:$0xf]
      %v3420 = vld [vmem:[#allocation2 + $0x24] sm:$0xf]
      %v3421 = vld [vmem:[#allocation2 + $0x28] sm:$0xf]
      %v3422 = vld [vmem:[#allocation2 + $0x2c] sm:$0xf]
      %v3423 = vld [vmem:[#allocation2 + $0x30] sm:$0xf]
      %v3424 = vld [vmem:[#allocation2 + $0x34] sm:$0xf]
      %v3425 = vld [vmem:[#allocation2 + $0x38] sm:$0xf]
      %v3426 = vld [vmem:[#allocation2 + $0x3c] sm:$0xf]
      %v3427 = vld [vmem:[#allocation2 + $0x40] sm:$0xf]
      %v3428 = vld [vmem:[#allocation2 + $0x44] sm:$0xf]
      %v3429 = vld [vmem:[#allocation2 + $0x48] sm:$0xf]
      %v3430 = vld [vmem:[#allocation2 + $0x4c] sm:$0xf]
      %v3431 = vld [vmem:[#allocation2 + $0x50] sm:$0xf]
      %v3432 = vld [vmem:[#allocation2 + $0x54] sm:$0xf]
      %v3433 = vld [vmem:[#allocation2 + $0x58] sm:$0xf]
      %v3434 = vld [vmem:[#allocation2 + $0x5c] sm:$0xf]
      %v3435 = vld [vmem:[#allocation2 + $0x60] sm:$0xf]
      %v3436 = vld [vmem:[#allocation2 + $0x64] sm:$0xf]
      %v3437 = vld [vmem:[#allocation2 + $0x68] sm:$0xf]
      %v3438 = vld [vmem:[#allocation2 + $0x6c] sm:$0xf]
      %v3439 = vld [vmem:[#allocation2 + $0x70] sm:$0xf]
      %v3440 = vld [vmem:[#allocation2 + $0x74] sm:$0xf]
      %v3441 = vld [vmem:[#allocation2 + $0x78] sm:$0xf]
      %v3442 = vld [vmem:[#allocation2 + $0x7c] sm:$0xf]
      %v3443 = vld [vmem:[#allocation2 + $0x80] sm:$0xf]
      %v3444 = vld [vmem:[#allocation2 + $0x84] sm:$0xf]
      %v3445 = vld [vmem:[#allocation2 + $0x88] sm:$0xf]
      %v3446 = vld [vmem:[#allocation2 + $0x8c] sm:$0xf]
      %v3447 = vld [vmem:[#allocation2 + $0x90] sm:$0xf]
      %v3448 = vld [vmem:[#allocation2 + $0x94] sm:$0xf]
      %v3449 = vld [vmem:[#allocation2 + $0x98] sm:$0xf]
      %v3450 = vld [vmem:[#allocation2 + $0x9c] sm:$0xf]
      %s3451 = scalar_lea.vmem %s4, 384
      %v3452 = vld [vmem:[%s3451] sm:$0xf]
      %v3453 = vld [vmem:[%s3451 + $0x4] sm:$0xf]
      %v3454 = vld [vmem:[%s3451 + $0x8] sm:$0xf]
      %v3455 = vld [vmem:[%s3451 + $0xc] sm:$0xf]
      %v3456 = vld [vmem:[%s3451 + $0x10] sm:$0xf]
      %v3457 = vld [vmem:[%s3451 + $0x14] sm:$0xf]
      %v3458 = vld [vmem:[%s3451 + $0x18] sm:$0xf]
      %v3459 = vld [vmem:[%s3451 + $0x1c] sm:$0xf]
      %v3460 = vld [vmem:[%s3451 + $0x20] sm:$0xf]
      %v3461 = vld [vmem:[%s3451 + $0x24] sm:$0xf]
      %v3462 = vld [vmem:[%s3451 + $0x28] sm:$0xf]
      %v3463 = vld [vmem:[%s3451 + $0x2c] sm:$0xf]
      %v3464 = vld [vmem:[%s3451 + $0x30] sm:$0xf]
      %v3465 = vld [vmem:[%s3451 + $0x34] sm:$0xf]
      %v3466 = vld [vmem:[%s3451 + $0x38] sm:$0xf]
      %v3467 = vld [vmem:[%s3451 + $0x3c] sm:$0xf]
      %v3500 = vunpack.c.l.b16 %v3419
      %v3501 = vunpack.c.l.b16 %v3420
      %v3502 = vunpack.c.l.b16 %v3421
      %v3503 = vunpack.c.l.b16 %v3422
      %v3504 = vunpack.c.l.b16 %v3423
      %v3505 = vunpack.c.l.b16 %v3424
      %v3506 = vunpack.c.l.b16 %v3425
      %v3507 = vunpack.c.l.b16 %v3426
      %v3508 = vunpack.c.l.b16 %v3427
      %v3509 = vunpack.c.l.b16 %v3428
      %v3510 = vunpack.c.l.b16 %v3429
      %v3511 = vunpack.c.l.b16 %v3430
      %v3512 = vunpack.c.l.b16 %v3431
      %v3513 = vunpack.c.l.b16 %v3432
      %v3514 = vunpack.c.l.b16 %v3433
      %v3515 = vunpack.c.l.b16 %v3434
      %v3516 = vunpack.c.l.b16 %v3435
      %v3517 = vunpack.c.l.b16 %v3436
      %v3518 = vunpack.c.l.b16 %v3437
      %v3519 = vunpack.c.l.b16 %v3438
      %v3520 = vunpack.c.l.b16 %v3439
      %v3521 = vunpack.c.l.b16 %v3440
      %v3522 = vunpack.c.l.b16 %v3441
      %v3523 = vunpack.c.l.b16 %v3442
      %v3524 = vunpack.c.l.b16 %v3443
      %v3525 = vunpack.c.l.b16 %v3444
      %v3526 = vunpack.c.l.b16 %v3445
      %v3527 = vunpack.c.l.b16 %v3446
      %v3528 = vunpack.c.l.b16 %v3447
      %v3529 = vunpack.c.l.b16 %v3448
      %v3530 = vunpack.c.l.b16 %v3449
      %v3531 = vunpack.c.l.b16 %v3450
      %v3532 = vpack.c.b16 %v3501, %v3500
      %v3533 = vpack.c.b16 %v3503, %v3502
      %v3534 = vpack.c.b16 %v3505, %v3504
      %v3535 = vpack.c.b16 %v3507, %v3506
      %v3536 = vpack.c.b16 %v3509, %v3508
      %v3537 = vpack.c.b16 %v3511, %v3510
      %v3538 = vpack.c.b16 %v3513, %v3512
      %v3539 = vpack.c.b16 %v3515, %v3514
      %v3540 = vpack.c.b16 %v3517, %v3516
      %v3541 = vpack.c.b16 %v3519, %v3518
      %v3542 = vpack.c.b16 %v3521, %v3520
      %v3543 = vpack.c.b16 %v3523, %v3522
      %v3544 = vpack.c.b16 %v3525, %v3524
      %v3545 = vpack.c.b16 %v3527, %v3526
      %v3546 = vpack.c.b16 %v3529, %v3528
      %v3547 = vpack.c.b16 %v3531, %v3530
      %v3580 = vunpack.c.l.b16 %v3452
      %v3581 = vunpack.c.l.b16 %v3453
      %v3582 = vunpack.c.l.b16 %v3454
      %v3583 = vunpack.c.l.b16 %v3455
      %v3584 = vunpack.c.l.b16 %v3456
      %v3585 = vunpack.c.l.b16 %v3457
      %v3586 = vunpack.c.l.b16 %v3458
      %v3587 = vunpack.c.l.b16 %v3459
      %v3588 = vunpack.c.l.b16 %v3460
      %v3589 = vunpack.c.l.b16 %v3461
      %v3590 = vunpack.c.l.b16 %v3462
      %v3591 = vunpack.c.l.b16 %v3463
      %v3592 = vunpack.c.l.b16 %v3464
      %v3593 = vunpack.c.l.b16 %v3465
      %v3594 = vunpack.c.l.b16 %v3466
      %v3595 = vunpack.c.l.b16 %v3467
      %v3596 = vpack.c.b16 %v3581, %v3580
      %v3597 = vpack.c.b16 %v3583, %v3582
      %v3598 = vpack.c.b16 %v3585, %v3584
      %v3599 = vpack.c.b16 %v3587, %v3586
      %v3600 = vpack.c.b16 %v3589, %v3588
      %v3601 = vpack.c.b16 %v3591, %v3590
      %v3602 = vpack.c.b16 %v3593, %v3592
      %v3603 = vpack.c.b16 %v3595, %v3594
      %3612 = vmatprep.subr.bf16.mxu0 0
      %3613 = vmatpush1.bf16.msra.mxu0 %v3603
      %3614 = vmatprep.subr.bf16.mxu0 0
      %3615 = vmatpush1.bf16.msra.mxu0 %v3602
      %3616 = vmatprep.subr.bf16.mxu0 0
      %3617 = vmatpush1.bf16.msra.mxu0 %v3601
      %3618 = vmatprep.subr.bf16.mxu0 0
      %3619 = vmatpush1.bf16.msra.mxu0 %v3600
      %3620 = vmatprep.subr.bf16.mxu0 0
      %3621 = vmatpush1.bf16.msra.mxu0 %v3599
      %3622 = vmatprep.subr.bf16.mxu0 0
      %3623 = vmatpush1.bf16.msra.mxu0 %v3598
      %3624 = vmatprep.subr.bf16.mxu0 0
      %3625 = vmatpush1.bf16.msra.mxu0 %v3597
      %3626 = vmatprep.subr.bf16.mxu0 0
      %3627 = vmatpush1.bf16.msra.mxu0 %v3596
      %3628 = vmatprep.subr.bf16.mxu0 0
      %3629 = vmatpush2.bf16.msra.mxu0 0
      %3630 = vmatprep.subr.bf16.mxu0 0
      %3631 = vmatpush2.bf16.msra.mxu0 0
      %3632 = vmatprep.subr.bf16.mxu0 0
      %3633 = vmatpush2.bf16.msra.mxu0 0
      %3634 = vmatprep.subr.bf16.mxu0 0
      %3635 = vmatpush2.bf16.msra.mxu0 0
      %3636 = vmatprep.subr.bf16.mxu0 0
      %3637 = vmatpush2.bf16.msra.mxu0 0
      %3638 = vmatprep.subr.bf16.mxu0 0
      %3639 = vmatpush2.bf16.msra.mxu0 0
      %3640 = vmatprep.subr.bf16.mxu0 0
      %3641 = vmatpush2.bf16.msra.mxu0 0
      %3642 = vmatprep.subr.bf16.mxu0 0
      %3643 = vmatpush2.bf16.msra.mxu0 0
      %3644 = vmatprep.mubr.bf16.mxu0 0
      %3645 = vmatmul.mubr.bf16.gmra.mxu0 %v3532
      %v3646 = vpop.f32.mrf.mxu0
      %v3647 = vadd.f32 0.0, %v3646
      %v3648 = vpop.f32.mrf.mxu0
      %v3649 = vpop.f32.mrf.mxu0
      %v3650 = vadd.f32 0.0, %v3649
      %v3651 = vpop.f32.mrf.mxu0
      %3652 = vmatprep.mubr.bf16.mxu0 0
      %3653 = vmatmul.mubr.bf16.gmra.mxu0 %v3533
      %v3654 = vpop.f32.mrf.mxu0
      %v3655 = vpop.f32.mrf.mxu0
      %v3656 = vpop.f32.mrf.mxu0
      %v3657 = vpop.f32.mrf.mxu0
      %3658 = vmatprep.mubr.bf16.mxu0 0
      %3659 = vmatmul.mubr.bf16.gmra.mxu0 %v3534
      %v3660 = vpop.f32.mrf.mxu0
      %v3661 = vadd.f32 0.0, %v3660
      %v3662 = vpop.f32.mrf.mxu0
      %v3663 = vpop.f32.mrf.mxu0
      %v3664 = vadd.f32 0.0, %v3663
      %v3665 = vpop.f32.mrf.mxu0
      %3666 = vmatprep.mubr.bf16.mxu0 0
      %3667 = vmatmul.mubr.bf16.gmra.mxu0 %v3535
      %v3668 = vpop.f32.mrf.mxu0
      %v3669 = vpop.f32.mrf.mxu0
      %v3670 = vpop.f32.mrf.mxu0
      %v3671 = vpop.f32.mrf.mxu0
      %3672 = vmatprep.mubr.bf16.mxu0 0
      %3673 = vmatmul.mubr.bf16.gmra.mxu0 %v3536
      %v3674 = vpop.f32.mrf.mxu0
      %v3675 = vadd.f32 0.0, %v3674
      %v3676 = vpop.f32.mrf.mxu0
      %v3677 = vpop.f32.mrf.mxu0
      %v3678 = vadd.f32 0.0, %v3677
      %v3679 = vpop.f32.mrf.mxu0
      %3680 = vmatprep.mubr.bf16.mxu0 0
      %3681 = vmatmul.mubr.bf16.gmra.mxu0 %v3537
      %v3682 = vpop.f32.mrf.mxu0
      %v3683 = vpop.f32.mrf.mxu0
      %v3684 = vpop.f32.mrf.mxu0
      %v3685 = vpop.f32.mrf.mxu0
      %3686 = vmatprep.mubr.bf16.mxu0 0
      %3687 = vmatmul.mubr.bf16.gmra.mxu0 %v3538
      %v3688 = vpop.f32.mrf.mxu0
      %v3689 = vadd.f32 0.0, %v3688
      %v3690 = vpop.f32.mrf.mxu0
      %v3691 = vpop.f32.mrf.mxu0
      %v3692 = vadd.f32 0.0, %v3691
      %v3693 = vpop.f32.mrf.mxu0
      %3694 = vmatprep.mubr.bf16.mxu0 0
      %3695 = vmatmul.mubr.bf16.gmra.mxu0 %v3539
      %v3696 = vpop.f32.mrf.mxu0
      %v3697 = vpop.f32.mrf.mxu0
      %v3698 = vpop.f32.mrf.mxu0
      %v3699 = vpop.f32.mrf.mxu0
      %3700 = vmatprep.mubr.bf16.mxu0 0
      %3701 = vmatmul.mubr.bf16.gmra.mxu0 %v3540
      %v3702 = vpop.f32.mrf.mxu0
      %v3703 = vadd.f32 0.0, %v3702
      %v3704 = vpop.f32.mrf.mxu0
      %v3705 = vpop.f32.mrf.mxu0
      %v3706 = vadd.f32 0.0, %v3705
      %v3707 = vpop.f32.mrf.mxu0
      %3708 = vmatprep.mubr.bf16.mxu0 0
      %3709 = vmatmul.mubr.bf16.gmra.mxu0 %v3541
      %v3710 = vpop.f32.mrf.mxu0
      %v3711 = vpop.f32.mrf.mxu0
      %v3712 = vpop.f32.mrf.mxu0
      %v3713 = vpop.f32.mrf.mxu0
      %3714 = vmatprep.mubr.bf16.mxu0 0
      %3715 = vmatmul.mubr.bf16.gmra.mxu0 %v3542
      %v3716 = vpop.f32.mrf.mxu0
      %v3717 = vadd.f32 0.0, %v3716
      %v3718 = vpop.f32.mrf.mxu0
      %v3719 = vpop.f32.mrf.mxu0
      %v3720 = vadd.f32 0.0, %v3719
      %v3721 = vpop.f32.mrf.mxu0
      %3722 = vmatprep.mubr.bf16.mxu0 0
      %3723 = vmatmul.mubr.bf16.gmra.mxu0 %v3543
      %v3724 = vpop.f32.mrf.mxu0
      %v3725 = vpop.f32.mrf.mxu0
      %v3726 = vpop.f32.mrf.mxu0
      %v3727 = vpop.f32.mrf.mxu0
      %3728 = vmatprep.mubr.bf16.mxu0 0
      %3729 = vmatmul.mubr.bf16.gmra.mxu0 %v3544
      %v3730 = vpop.f32.mrf.mxu0
      %v3731 = vadd.f32 0.0, %v3730
      %v3732 = vpop.f32.mrf.mxu0
      %v3733 = vpop.f32.mrf.mxu0
      %v3734 = vadd.f32 0.0, %v3733
      %v3735 = vpop.f32.mrf.mxu0
      %3736 = vmatprep.mubr.bf16.mxu0 0
      %3737 = vmatmul.mubr.bf16.gmra.mxu0 %v3545
      %v3738 = vpop.f32.mrf.mxu0
      %v3739 = vpop.f32.mrf.mxu0
      %v3740 = vpop.f32.mrf.mxu0
      %v3741 = vpop.f32.mrf.mxu0
      %3742 = vmatprep.mubr.bf16.mxu0 0
      %3743 = vmatmul.mubr.bf16.gmra.mxu0 %v3546
      %v3744 = vpop.f32.mrf.mxu0
      %v3745 = vadd.f32 0.0, %v3744
      %v3746 = vpop.f32.mrf.mxu0
      %v3747 = vpop.f32.mrf.mxu0
      %v3748 = vadd.f32 0.0, %v3747
      %v3749 = vpop.f32.mrf.mxu0
      %3750 = vmatprep.mubr.bf16.mxu0 0
      %3751 = vmatmul.mubr.bf16.gmra.mxu0 %v3547
      %v3752 = vpop.f32.mrf.mxu0
      %v3753 = vpop.f32.mrf.mxu0
      %v3754 = vpop.f32.mrf.mxu0
      %v3755 = vpop.f32.mrf.mxu0
      %3756 = vdwg.mxu0
      %v3757 = vadd.f32 %v3403, %v3647
      %v3758 = vadd.f32 %v3404, %v3650
      %v3759 = vadd.f32 %v3405, %v3661
      %v3760 = vadd.f32 %v3406, %v3664
      %v3761 = vadd.f32 %v3407, %v3675
      %v3762 = vadd.f32 %v3408, %v3678
      %v3763 = vadd.f32 %v3409, %v3689
      %v3764 = vadd.f32 %v3410, %v3692
      %v3765 = vadd.f32 %v3411, %v3703
      %v3766 = vadd.f32 %v3412, %v3706
      %v3767 = vadd.f32 %v3413, %v3717
      %v3768 = vadd.f32 %v3414, %v3720
      %v3769 = vadd.f32 %v3415, %v3731
      %v3770 = vadd.f32 %v3416, %v3734
      %v3771 = vadd.f32 %v3417, %v3745
      %v3772 = vadd.f32 %v3418, %v3748
      %v3773 = vld [vmem:[#allocation2 + $0x20] sm:$0xf]
      %v3774 = vld [vmem:[#allocation2 + $0x24] sm:$0xf]
      %v3775 = vld [vmem:[#allocation2 + $0x28] sm:$0xf]
      %v3776 = vld [vmem:[#allocation2 + $0x2c] sm:$0xf]
      %v3777 = vld [vmem:[#allocation2 + $0x30] sm:$0xf]
      %v3778 = vld [vmem:[#allocation2 + $0x34] sm:$0xf]
      %v3779 = vld [vmem:[#allocation2 + $0x38] sm:$0xf]
      %v3780 = vld [vmem:[#allocation2 + $0x3c] sm:$0xf]
      %v3781 = vld [vmem:[#allocation2 + $0x40] sm:$0xf]
      %v3782 = vld [vmem:[#allocation2 + $0x44] sm:$0xf]
      %v3783 = vld [vmem:[#allocation2 + $0x48] sm:$0xf]
      %v3784 = vld [vmem:[#allocation2 + $0x4c] sm:$0xf]
      %v3785 = vld [vmem:[#allocation2 + $0x50] sm:$0xf]
      %v3786 = vld [vmem:[#allocation2 + $0x54] sm:$0xf]
      %v3787 = vld [vmem:[#allocation2 + $0x58] sm:$0xf]
      %v3788 = vld [vmem:[#allocation2 + $0x5c] sm:$0xf]
      %v3789 = vld [vmem:[#allocation2 + $0x60] sm:$0xf]
      %v3790 = vld [vmem:[#allocation2 + $0x64] sm:$0xf]
      %v3791 = vld [vmem:[#allocation2 + $0x68] sm:$0xf]
      %v3792 = vld [vmem:[#allocation2 + $0x6c] sm:$0xf]
      %v3793 = vld [vmem:[#allocation2 + $0x70] sm:$0xf]
      %v3794 = vld [vmem:[#allocation2 + $0x74] sm:$0xf]
      %v3795 = vld [vmem:[#allocation2 + $0x78] sm:$0xf]
      %v3796 = vld [vmem:[#allocation2 + $0x7c] sm:$0xf]
      %v3797 = vld [vmem:[#allocation2 + $0x80] sm:$0xf]
      %v3798 = vld [vmem:[#allocation2 + $0x84] sm:$0xf]
      %v3799 = vld [vmem:[#allocation2 + $0x88] sm:$0xf]
      %v3800 = vld [vmem:[#allocation2 + $0x8c] sm:$0xf]
      %v3801 = vld [vmem:[#allocation2 + $0x90] sm:$0xf]
      %v3802 = vld [vmem:[#allocation2 + $0x94] sm:$0xf]
      %v3803 = vld [vmem:[#allocation2 + $0x98] sm:$0xf]
      %v3804 = vld [vmem:[#allocation2 + $0x9c] sm:$0xf]
      %v3805 = vld [vmem:[#allocation2 + $0xa0] sm:$0x1]
      %s3806 = scalar_lea.vmem %s4, 448
      %v3807 = vld [vmem:[%s3806] sm:$0xf]
      %v3808 = vld [vmem:[%s3806 + $0x4] sm:$0xf]
      %v3809 = vld [vmem:[%s3806 + $0x8] sm:$0xf]
      %v3810 = vld [vmem:[%s3806 + $0xc] sm:$0xf]
      %v3811 = vld [vmem:[%s3806 + $0x10] sm:$0xf]
      %v3812 = vld [vmem:[%s3806 + $0x14] sm:$0xf]
      %v3813 = vld [vmem:[%s3806 + $0x18] sm:$0xf]
      %v3814 = vld [vmem:[%s3806 + $0x1c] sm:$0xf]
      %v3815 = vld [vmem:[%s3806 + $0x20] sm:$0xf]
      %v3816 = vld [vmem:[%s3806 + $0x24] sm:$0xf]
      %v3817 = vld [vmem:[%s3806 + $0x28] sm:$0xf]
      %v3818 = vld [vmem:[%s3806 + $0x2c] sm:$0xf]
      %v3819 = vld [vmem:[%s3806 + $0x30] sm:$0xf]
      %v3820 = vld [vmem:[%s3806 + $0x34] sm:$0xf]
      %v3821 = vld [vmem:[%s3806 + $0x38] sm:$0xf]
      %v3822 = vld [vmem:[%s3806 + $0x3c] sm:$0xf]
      %v3856 = vunpack.c.l.b16 %v3773
      %v3857 = vunpack.c.l.b16 %v3774
      %v3858 = vunpack.c.l.b16 %v3775
      %v3859 = vunpack.c.l.b16 %v3776
      %v3860 = vunpack.c.l.b16 %v3777
      %v3861 = vunpack.c.l.b16 %v3778
      %v3862 = vunpack.c.l.b16 %v3779
      %v3863 = vunpack.c.l.b16 %v3780
      %v3864 = vunpack.c.l.b16 %v3781
      %v3865 = vunpack.c.l.b16 %v3782
      %v3866 = vunpack.c.l.b16 %v3783
      %v3867 = vunpack.c.l.b16 %v3784
      %v3868 = vunpack.c.l.b16 %v3785
      %v3869 = vunpack.c.l.b16 %v3786
      %v3870 = vunpack.c.l.b16 %v3787
      %v3871 = vunpack.c.l.b16 %v3788
      %v3872 = vunpack.c.l.b16 %v3789
      %v3873 = vunpack.c.l.b16 %v3790
      %v3874 = vunpack.c.l.b16 %v3791
      %v3875 = vunpack.c.l.b16 %v3792
      %v3876 = vunpack.c.l.b16 %v3793
      %v3877 = vunpack.c.l.b16 %v3794
      %v3878 = vunpack.c.l.b16 %v3795
      %v3879 = vunpack.c.l.b16 %v3796
      %v3880 = vunpack.c.l.b16 %v3797
      %v3881 = vunpack.c.l.b16 %v3798
      %v3882 = vunpack.c.l.b16 %v3799
      %v3883 = vunpack.c.l.b16 %v3800
      %v3884 = vunpack.c.l.b16 %v3801
      %v3885 = vunpack.c.l.b16 %v3802
      %v3886 = vunpack.c.l.b16 %v3803
      %v3887 = vunpack.c.l.b16 %v3804
      %v3888 = vunpack.c.l.b16 %v3805
      %v3889 = vpack.c.b16 %v3857, %v3856
      %v3890 = vpack.c.b16 %v3859, %v3858
      %v3891 = vpack.c.b16 %v3861, %v3860
      %v3892 = vpack.c.b16 %v3863, %v3862
      %v3893 = vpack.c.b16 %v3865, %v3864
      %v3894 = vpack.c.b16 %v3867, %v3866
      %v3895 = vpack.c.b16 %v3869, %v3868
      %v3896 = vpack.c.b16 %v3871, %v3870
      %v3897 = vpack.c.b16 %v3873, %v3872
      %v3898 = vpack.c.b16 %v3875, %v3874
      %v3899 = vpack.c.b16 %v3877, %v3876
      %v3900 = vpack.c.b16 %v3879, %v3878
      %v3901 = vpack.c.b16 %v3881, %v3880
      %v3902 = vpack.c.b16 %v3883, %v3882
      %v3903 = vpack.c.b16 %v3885, %v3884
      %v3904 = vpack.c.b16 %v3887, %v3886
      %v3905 = vpack.c.b16 %v3888, %v3888
      %v3907 = vshrl.u32 %v3889, 16
      %v3909 = vshll.u32 %v3889, 16
      %v3911 = vrot.slane %v3909, 1
      %v3912 = vor.u32 %v3907, %v3911
      %v3914 = vshll.u32 %v3890, 16
      %v3916 = vrot.slane %v3914, 1
      %v3917 = vsel %vm1465, %v3912, %v3916
      %v3918 = vshrl.u32 %v3890, 16
      %v3920 = vor.u32 %v3918, %v3916
      %v3922 = vshll.u32 %v3891, 16
      %v3924 = vrot.slane %v3922, 1
      %v3925 = vsel %vm1465, %v3920, %v3924
      %v3926 = vshrl.u32 %v3891, 16
      %v3928 = vor.u32 %v3926, %v3924
      %v3930 = vshll.u32 %v3892, 16
      %v3932 = vrot.slane %v3930, 1
      %v3933 = vsel %vm1465, %v3928, %v3932
      %v3934 = vshrl.u32 %v3892, 16
      %v3936 = vor.u32 %v3934, %v3932
      %v3938 = vshll.u32 %v3893, 16
      %v3940 = vrot.slane %v3938, 1
      %v3941 = vsel %vm1465, %v3936, %v3940
      %v3942 = vshrl.u32 %v3893, 16
      %v3944 = vor.u32 %v3942, %v3940
      %v3946 = vshll.u32 %v3894, 16
      %v3948 = vrot.slane %v3946, 1
      %v3949 = vsel %vm1465, %v3944, %v3948
      %v3950 = vshrl.u32 %v3894, 16
      %v3952 = vor.u32 %v3950, %v3948
      %v3954 = vshll.u32 %v3895, 16
      %v3956 = vrot.slane %v3954, 1
      %v3957 = vsel %vm1465, %v3952, %v3956
      %v3958 = vshrl.u32 %v3895, 16
      %v3960 = vor.u32 %v3958, %v3956
      %v3962 = vshll.u32 %v3896, 16
      %v3964 = vrot.slane %v3962, 1
      %v3965 = vsel %vm1465, %v3960, %v3964
      %v3966 = vshrl.u32 %v3896, 16
      %v3968 = vor.u32 %v3966, %v3964
      %v3970 = vshll.u32 %v3897, 16
      %v3972 = vrot.slane %v3970, 1
      %v3973 = vsel %vm1465, %v3968, %v3972
      %v3974 = vshrl.u32 %v3897, 16
      %v3976 = vor.u32 %v3974, %v3972
      %v3978 = vshll.u32 %v3898, 16
      %v3980 = vrot.slane %v3978, 1
      %v3981 = vsel %vm1465, %v3976, %v3980
      %v3982 = vshrl.u32 %v3898, 16
      %v3984 = vor.u32 %v3982, %v3980
      %v3986 = vshll.u32 %v3899, 16
      %v3988 = vrot.slane %v3986, 1
      %v3989 = vsel %vm1465, %v3984, %v3988
      %v3990 = vshrl.u32 %v3899, 16
      %v3992 = vor.u32 %v3990, %v3988
      %v3994 = vshll.u32 %v3900, 16
      %v3996 = vrot.slane %v3994, 1
      %v3997 = vsel %vm1465, %v3992, %v3996
      %v3998 = vshrl.u32 %v3900, 16
      %v4000 = vor.u32 %v3998, %v3996
      %v4002 = vshll.u32 %v3901, 16
      %v4004 = vrot.slane %v4002, 1
      %v4005 = vsel %vm1465, %v4000, %v4004
      %v4006 = vshrl.u32 %v3901, 16
      %v4008 = vor.u32 %v4006, %v4004
      %v4010 = vshll.u32 %v3902, 16
      %v4012 = vrot.slane %v4010, 1
      %v4013 = vsel %vm1465, %v4008, %v4012
      %v4014 = vshrl.u32 %v3902, 16
      %v4016 = vor.u32 %v4014, %v4012
      %v4018 = vshll.u32 %v3903, 16
      %v4020 = vrot.slane %v4018, 1
      %v4021 = vsel %vm1465, %v4016, %v4020
      %v4022 = vshrl.u32 %v3903, 16
      %v4024 = vor.u32 %v4022, %v4020
      %v4026 = vshll.u32 %v3904, 16
      %v4028 = vrot.slane %v4026, 1
      %v4029 = vsel %vm1465, %v4024, %v4028
      %v4030 = vshrl.u32 %v3904, 16
      %v4032 = vor.u32 %v4030, %v4028
      %v4034 = vshll.u32 %v3905, 16
      %v4036 = vrot.slane %v4034, 1
      %v4037 = vsel %vm1465, %v4032, %v4036
      %v4070 = vunpack.c.l.b16 %v3807
      %v4071 = vunpack.c.l.b16 %v3808
      %v4072 = vunpack.c.l.b16 %v3809
      %v4073 = vunpack.c.l.b16 %v3810
      %v4074 = vunpack.c.l.b16 %v3811
      %v4075 = vunpack.c.l.b16 %v3812
      %v4076 = vunpack.c.l.b16 %v3813
      %v4077 = vunpack.c.l.b16 %v3814
      %v4078 = vunpack.c.l.b16 %v3815
      %v4079 = vunpack.c.l.b16 %v3816
      %v4080 = vunpack.c.l.b16 %v3817
      %v4081 = vunpack.c.l.b16 %v3818
      %v4082 = vunpack.c.l.b16 %v3819
      %v4083 = vunpack.c.l.b16 %v3820
      %v4084 = vunpack.c.l.b16 %v3821
      %v4085 = vunpack.c.l.b16 %v3822
      %v4086 = vpack.c.b16 %v4071, %v4070
      %v4087 = vpack.c.b16 %v4073, %v4072
      %v4088 = vpack.c.b16 %v4075, %v4074
      %v4089 = vpack.c.b16 %v4077, %v4076
      %v4090 = vpack.c.b16 %v4079, %v4078
      %v4091 = vpack.c.b16 %v4081, %v4080
      %v4092 = vpack.c.b16 %v4083, %v4082
      %v4093 = vpack.c.b16 %v4085, %v4084
      %4102 = vmatprep.subr.bf16.mxu0 0
      %4103 = vmatpush1.bf16.msra.mxu0 %v4093
      %4104 = vmatprep.subr.bf16.mxu0 0
      %4105 = vmatpush1.bf16.msra.mxu0 %v4092
      %4106 = vmatprep.subr.bf16.mxu0 0
      %4107 = vmatpush1.bf16.msra.mxu0 %v4091
      %4108 = vmatprep.subr.bf16.mxu0 0
      %4109 = vmatpush1.bf16.msra.mxu0 %v4090
      %4110 = vmatprep.subr.bf16.mxu0 0
      %4111 = vmatpush1.bf16.msra.mxu0 %v4089
      %4112 = vmatprep.subr.bf16.mxu0 0
      %4113 = vmatpush1.bf16.msra.mxu0 %v4088
      %4114 = vmatprep.subr.bf16.mxu0 0
      %4115 = vmatpush1.bf16.msra.mxu0 %v4087
      %4116 = vmatprep.subr.bf16.mxu0 0
      %4117 = vmatpush1.bf16.msra.mxu0 %v4086
      %4118 = vmatprep.subr.bf16.mxu0 0
      %4119 = vmatpush2.bf16.msra.mxu0 0
      %4120 = vmatprep.subr.bf16.mxu0 0
      %4121 = vmatpush2.bf16.msra.mxu0 0
      %4122 = vmatprep.subr.bf16.mxu0 0
      %4123 = vmatpush2.bf16.msra.mxu0 0
      %4124 = vmatprep.subr.bf16.mxu0 0
      %4125 = vmatpush2.bf16.msra.mxu0 0
      %4126 = vmatprep.subr.bf16.mxu0 0
      %4127 = vmatpush2.bf16.msra.mxu0 0
      %4128 = vmatprep.subr.bf16.mxu0 0
      %4129 = vmatpush2.bf16.msra.mxu0 0
      %4130 = vmatprep.subr.bf16.mxu0 0
      %4131 = vmatpush2.bf16.msra.mxu0 0
      %4132 = vmatprep.subr.bf16.mxu0 0
      %4133 = vmatpush2.bf16.msra.mxu0 0
      %4134 = vmatprep.mubr.bf16.mxu0 0
      %4135 = vmatmul.mubr.bf16.gmra.mxu0 %v3917
      %v4136 = vpop.f32.mrf.mxu0
      %v4137 = vadd.f32 0.0, %v4136
      %v4138 = vpop.f32.mrf.mxu0
      %v4139 = vpop.f32.mrf.mxu0
      %v4140 = vadd.f32 0.0, %v4139
      %v4141 = vpop.f32.mrf.mxu0
      %4142 = vmatprep.mubr.bf16.mxu0 0
      %4143 = vmatmul.mubr.bf16.gmra.mxu0 %v3925
      %v4144 = vpop.f32.mrf.mxu0
      %v4145 = vpop.f32.mrf.mxu0
      %v4146 = vpop.f32.mrf.mxu0
      %v4147 = vpop.f32.mrf.mxu0
      %4148 = vmatprep.mubr.bf16.mxu0 0
      %4149 = vmatmul.mubr.bf16.gmra.mxu0 %v3933
      %v4150 = vpop.f32.mrf.mxu0
      %v4151 = vadd.f32 0.0, %v4150
      %v4152 = vpop.f32.mrf.mxu0
      %v4153 = vpop.f32.mrf.mxu0
      %v4154 = vadd.f32 0.0, %v4153
      %v4155 = vpop.f32.mrf.mxu0
      %4156 = vmatprep.mubr.bf16.mxu0 0
      %4157 = vmatmul.mubr.bf16.gmra.mxu0 %v3941
      %v4158 = vpop.f32.mrf.mxu0
      %v4159 = vpop.f32.mrf.mxu0
      %v4160 = vpop.f32.mrf.mxu0
      %v4161 = vpop.f32.mrf.mxu0
      %4162 = vmatprep.mubr.bf16.mxu0 0
      %4163 = vmatmul.mubr.bf16.gmra.mxu0 %v3949
      %v4164 = vpop.f32.mrf.mxu0
      %v4165 = vadd.f32 0.0, %v4164
      %v4166 = vpop.f32.mrf.mxu0
      %v4167 = vpop.f32.mrf.mxu0
      %v4168 = vadd.f32 0.0, %v4167
      %v4169 = vpop.f32.mrf.mxu0
      %4170 = vmatprep.mubr.bf16.mxu0 0
      %4171 = vmatmul.mubr.bf16.gmra.mxu0 %v3957
      %v4172 = vpop.f32.mrf.mxu0
      %v4173 = vpop.f32.mrf.mxu0
      %v4174 = vpop.f32.mrf.mxu0
      %v4175 = vpop.f32.mrf.mxu0
      %4176 = vmatprep.mubr.bf16.mxu0 0
      %4177 = vmatmul.mubr.bf16.gmra.mxu0 %v3965
      %v4178 = vpop.f32.mrf.mxu0
      %v4179 = vadd.f32 0.0, %v4178
      %v4180 = vpop.f32.mrf.mxu0
      %v4181 = vpop.f32.mrf.mxu0
      %v4182 = vadd.f32 0.0, %v4181
      %v4183 = vpop.f32.mrf.mxu0
      %4184 = vmatprep.mubr.bf16.mxu0 0
      %4185 = vmatmul.mubr.bf16.gmra.mxu0 %v3973
      %v4186 = vpop.f32.mrf.mxu0
      %v4187 = vpop.f32.mrf.mxu0
      %v4188 = vpop.f32.mrf.mxu0
      %v4189 = vpop.f32.mrf.mxu0
      %4190 = vmatprep.mubr.bf16.mxu0 0
      %4191 = vmatmul.mubr.bf16.gmra.mxu0 %v3981
      %v4192 = vpop.f32.mrf.mxu0
      %v4193 = vadd.f32 0.0, %v4192
      %v4194 = vpop.f32.mrf.mxu0
      %v4195 = vpop.f32.mrf.mxu0
      %v4196 = vadd.f32 0.0, %v4195
      %v4197 = vpop.f32.mrf.mxu0
      %4198 = vmatprep.mubr.bf16.mxu0 0
      %4199 = vmatmul.mubr.bf16.gmra.mxu0 %v3989
      %v4200 = vpop.f32.mrf.mxu0
      %v4201 = vpop.f32.mrf.mxu0
      %v4202 = vpop.f32.mrf.mxu0
      %v4203 = vpop.f32.mrf.mxu0
      %4204 = vmatprep.mubr.bf16.mxu0 0
      %4205 = vmatmul.mubr.bf16.gmra.mxu0 %v3997
      %v4206 = vpop.f32.mrf.mxu0
      %v4207 = vadd.f32 0.0, %v4206
      %v4208 = vpop.f32.mrf.mxu0
      %v4209 = vpop.f32.mrf.mxu0
      %v4210 = vadd.f32 0.0, %v4209
      %v4211 = vpop.f32.mrf.mxu0
      %4212 = vmatprep.mubr.bf16.mxu0 0
      %4213 = vmatmul.mubr.bf16.gmra.mxu0 %v4005
      %v4214 = vpop.f32.mrf.mxu0
      %v4215 = vpop.f32.mrf.mxu0
      %v4216 = vpop.f32.mrf.mxu0
      %v4217 = vpop.f32.mrf.mxu0
      %4218 = vmatprep.mubr.bf16.mxu0 0
      %4219 = vmatmul.mubr.bf16.gmra.mxu0 %v4013
      %v4220 = vpop.f32.mrf.mxu0
      %v4221 = vadd.f32 0.0, %v4220
      %v4222 = vpop.f32.mrf.mxu0
      %v4223 = vpop.f32.mrf.mxu0
      %v4224 = vadd.f32 0.0, %v4223
      %v4225 = vpop.f32.mrf.mxu0
      %4226 = vmatprep.mubr.bf16.mxu0 0
      %4227 = vmatmul.mubr.bf16.gmra.mxu0 %v4021
      %v4228 = vpop.f32.mrf.mxu0
      %v4229 = vpop.f32.mrf.mxu0
      %v4230 = vpop.f32.mrf.mxu0
      %v4231 = vpop.f32.mrf.mxu0
      %4232 = vmatprep.mubr.bf16.mxu0 0
      %4233 = vmatmul.mubr.bf16.gmra.mxu0 %v4029
      %v4234 = vpop.f32.mrf.mxu0
      %v4235 = vadd.f32 0.0, %v4234
      %v4236 = vpop.f32.mrf.mxu0
      %v4237 = vpop.f32.mrf.mxu0
      %v4238 = vadd.f32 0.0, %v4237
      %v4239 = vpop.f32.mrf.mxu0
      %4240 = vmatprep.mubr.bf16.mxu0 0
      %4241 = vmatmul.mubr.bf16.gmra.mxu0 %v4037
      %v4242 = vpop.f32.mrf.mxu0
      %v4243 = vpop.f32.mrf.mxu0
      %v4244 = vpop.f32.mrf.mxu0
      %v4245 = vpop.f32.mrf.mxu0
      %4246 = vdwg.mxu0
      %v4247 = vadd.f32 %v3757, %v4137
      %v4248 = vadd.f32 %v3758, %v4140
      %v4249 = vadd.f32 %v3759, %v4151
      %v4250 = vadd.f32 %v3760, %v4154
      %v4251 = vadd.f32 %v3761, %v4165
      %v4252 = vadd.f32 %v3762, %v4168
      %v4253 = vadd.f32 %v3763, %v4179
      %v4254 = vadd.f32 %v3764, %v4182
      %v4255 = vadd.f32 %v3765, %v4193
      %v4256 = vadd.f32 %v3766, %v4196
      %v4257 = vadd.f32 %v3767, %v4207
      %v4258 = vadd.f32 %v3768, %v4210
      %v4259 = vadd.f32 %v3769, %v4221
      %v4260 = vadd.f32 %v3770, %v4224
      %v4261 = vadd.f32 %v3771, %v4235
      %v4262 = vadd.f32 %v3772, %v4238
      %v4263 = vld [vmem:[#allocation2 + $0x20] sm:$0xe]
      %s4264 = scalar_lea.vmem %s4, 512
      %v4265 = vld [vmem:[%s4264] sm:$0xf]
      %v4266 = vld [vmem:[%s4264 + $0x4] sm:$0xf]
      %v4267 = vld [vmem:[%s4264 + $0x8] sm:$0xf]
      %v4268 = vld [vmem:[%s4264 + $0xc] sm:$0xf]
      %v4269 = vld [vmem:[%s4264 + $0x10] sm:$0xf]
      %v4270 = vld [vmem:[%s4264 + $0x14] sm:$0xf]
      %v4271 = vld [vmem:[%s4264 + $0x18] sm:$0xf]
      %v4272 = vld [vmem:[%s4264 + $0x1c] sm:$0xf]
      %v4273 = vld [vmem:[%s4264 + $0x20] sm:$0xf]
      %v4274 = vld [vmem:[%s4264 + $0x24] sm:$0xf]
      %v4275 = vld [vmem:[%s4264 + $0x28] sm:$0xf]
      %v4276 = vld [vmem:[%s4264 + $0x2c] sm:$0xf]
      %v4277 = vld [vmem:[%s4264 + $0x30] sm:$0xf]
      %v4278 = vld [vmem:[%s4264 + $0x34] sm:$0xf]
      %v4279 = vld [vmem:[%s4264 + $0x38] sm:$0xf]
      %v4280 = vld [vmem:[%s4264 + $0x3c] sm:$0xf]
      %v4282 = vunpack.c.l.b16 %v4263
      %v4283 = vpack.c.b16 %v3857, %v4282
      %v4284 = vrot.slane %v4283, 1
      %v4285 = vrot.slane %v3890, 1
      %v4286 = vsel %vm2037, %v4284, %v4285
      %v4287 = vrot.slane %v3891, 1
      %v4288 = vsel %vm2037, %v4285, %v4287
      %v4289 = vrot.slane %v3892, 1
      %v4290 = vsel %vm2037, %v4287, %v4289
      %v4291 = vrot.slane %v3893, 1
      %v4292 = vsel %vm2037, %v4289, %v4291
      %v4293 = vrot.slane %v3894, 1
      %v4294 = vsel %vm2037, %v4291, %v4293
      %v4295 = vrot.slane %v3895, 1
      %v4296 = vsel %vm2037, %v4293, %v4295
      %v4297 = vrot.slane %v3896, 1
      %v4298 = vsel %vm2037, %v4295, %v4297
      %v4299 = vrot.slane %v3897, 1
      %v4300 = vsel %vm2037, %v4297, %v4299
      %v4301 = vrot.slane %v3898, 1
      %v4302 = vsel %vm2037, %v4299, %v4301
      %v4303 = vrot.slane %v3899, 1
      %v4304 = vsel %vm2037, %v4301, %v4303
      %v4305 = vrot.slane %v3900, 1
      %v4306 = vsel %vm2037, %v4303, %v4305
      %v4307 = vrot.slane %v3901, 1
      %v4308 = vsel %vm2037, %v4305, %v4307
      %v4309 = vrot.slane %v3902, 1
      %v4310 = vsel %vm2037, %v4307, %v4309
      %v4311 = vrot.slane %v3903, 1
      %v4312 = vsel %vm2037, %v4309, %v4311
      %v4313 = vrot.slane %v3904, 1
      %v4314 = vsel %vm2037, %v4311, %v4313
      %v4315 = vrot.slane %v3905, 1
      %v4316 = vsel %vm2037, %v4313, %v4315
      %v4349 = vunpack.c.l.b16 %v4265
      %v4350 = vunpack.c.l.b16 %v4266
      %v4351 = vunpack.c.l.b16 %v4267
      %v4352 = vunpack.c.l.b16 %v4268
      %v4353 = vunpack.c.l.b16 %v4269
      %v4354 = vunpack.c.l.b16 %v4270
      %v4355 = vunpack.c.l.b16 %v4271
      %v4356 = vunpack.c.l.b16 %v4272
      %v4357 = vunpack.c.l.b16 %v4273
      %v4358 = vunpack.c.l.b16 %v4274
      %v4359 = vunpack.c.l.b16 %v4275
      %v4360 = vunpack.c.l.b16 %v4276
      %v4361 = vunpack.c.l.b16 %v4277
      %v4362 = vunpack.c.l.b16 %v4278
      %v4363 = vunpack.c.l.b16 %v4279
      %v4364 = vunpack.c.l.b16 %v4280
      %v4365 = vpack.c.b16 %v4350, %v4349
      %v4366 = vpack.c.b16 %v4352, %v4351
      %v4367 = vpack.c.b16 %v4354, %v4353
      %v4368 = vpack.c.b16 %v4356, %v4355
      %v4369 = vpack.c.b16 %v4358, %v4357
      %v4370 = vpack.c.b16 %v4360, %v4359
      %v4371 = vpack.c.b16 %v4362, %v4361
      %v4372 = vpack.c.b16 %v4364, %v4363
      %4381 = vmatprep.subr.bf16.mxu0 0
      %4382 = vmatpush1.bf16.msra.mxu0 %v4372
      %4383 = vmatprep.subr.bf16.mxu0 0
      %4384 = vmatpush1.bf16.msra.mxu0 %v4371
      %4385 = vmatprep.subr.bf16.mxu0 0
      %4386 = vmatpush1.bf16.msra.mxu0 %v4370
      %4387 = vmatprep.subr.bf16.mxu0 0
      %4388 = vmatpush1.bf16.msra.mxu0 %v4369
      %4389 = vmatprep.subr.bf16.mxu0 0
      %4390 = vmatpush1.bf16.msra.mxu0 %v4368
      %4391 = vmatprep.subr.bf16.mxu0 0
      %4392 = vmatpush1.bf16.msra.mxu0 %v4367
      %4393 = vmatprep.subr.bf16.mxu0 0
      %4394 = vmatpush1.bf16.msra.mxu0 %v4366
      %4395 = vmatprep.subr.bf16.mxu0 0
      %4396 = vmatpush1.bf16.msra.mxu0 %v4365
      %4397 = vmatprep.subr.bf16.mxu0 0
      %4398 = vmatpush2.bf16.msra.mxu0 0
      %4399 = vmatprep.subr.bf16.mxu0 0
      %4400 = vmatpush2.bf16.msra.mxu0 0
      %4401 = vmatprep.subr.bf16.mxu0 0
      %4402 = vmatpush2.bf16.msra.mxu0 0
      %4403 = vmatprep.subr.bf16.mxu0 0
      %4404 = vmatpush2.bf16.msra.mxu0 0
      %4405 = vmatprep.subr.bf16.mxu0 0
      %4406 = vmatpush2.bf16.msra.mxu0 0
      %4407 = vmatprep.subr.bf16.mxu0 0
      %4408 = vmatpush2.bf16.msra.mxu0 0
      %4409 = vmatprep.subr.bf16.mxu0 0
      %4410 = vmatpush2.bf16.msra.mxu0 0
      %4411 = vmatprep.subr.bf16.mxu0 0
      %4412 = vmatpush2.bf16.msra.mxu0 0
      %4413 = vmatprep.mubr.bf16.mxu0 0
      %4414 = vmatmul.mubr.bf16.gmra.mxu0 %v4286
      %v4415 = vpop.f32.mrf.mxu0
      %v4416 = vadd.f32 0.0, %v4415
      %v4417 = vpop.f32.mrf.mxu0
      %v4418 = vpop.f32.mrf.mxu0
      %v4419 = vadd.f32 0.0, %v4418
      %v4420 = vpop.f32.mrf.mxu0
      %4421 = vmatprep.mubr.bf16.mxu0 0
      %4422 = vmatmul.mubr.bf16.gmra.mxu0 %v4288
      %v4423 = vpop.f32.mrf.mxu0
      %v4424 = vpop.f32.mrf.mxu0
      %v4425 = vpop.f32.mrf.mxu0
      %v4426 = vpop.f32.mrf.mxu0
      %4427 = vmatprep.mubr.bf16.mxu0 0
      %4428 = vmatmul.mubr.bf16.gmra.mxu0 %v4290
      %v4429 = vpop.f32.mrf.mxu0
      %v4430 = vadd.f32 0.0, %v4429
      %v4431 = vpop.f32.mrf.mxu0
      %v4432 = vpop.f32.mrf.mxu0
      %v4433 = vadd.f32 0.0, %v4432
      %v4434 = vpop.f32.mrf.mxu0
      %4435 = vmatprep.mubr.bf16.mxu0 0
      %4436 = vmatmul.mubr.bf16.gmra.mxu0 %v4292
      %v4437 = vpop.f32.mrf.mxu0
      %v4438 = vpop.f32.mrf.mxu0
      %v4439 = vpop.f32.mrf.mxu0
      %v4440 = vpop.f32.mrf.mxu0
      %4441 = vmatprep.mubr.bf16.mxu0 0
      %4442 = vmatmul.mubr.bf16.gmra.mxu0 %v4294
      %v4443 = vpop.f32.mrf.mxu0
      %v4444 = vadd.f32 0.0, %v4443
      %v4445 = vpop.f32.mrf.mxu0
      %v4446 = vpop.f32.mrf.mxu0
      %v4447 = vadd.f32 0.0, %v4446
      %v4448 = vpop.f32.mrf.mxu0
      %4449 = vmatprep.mubr.bf16.mxu0 0
      %4450 = vmatmul.mubr.bf16.gmra.mxu0 %v4296
      %v4451 = vpop.f32.mrf.mxu0
      %v4452 = vpop.f32.mrf.mxu0
      %v4453 = vpop.f32.mrf.mxu0
      %v4454 = vpop.f32.mrf.mxu0
      %4455 = vmatprep.mubr.bf16.mxu0 0
      %4456 = vmatmul.mubr.bf16.gmra.mxu0 %v4298
      %v4457 = vpop.f32.mrf.mxu0
      %v4458 = vadd.f32 0.0, %v4457
      %v4459 = vpop.f32.mrf.mxu0
      %v4460 = vpop.f32.mrf.mxu0
      %v4461 = vadd.f32 0.0, %v4460
      %v4462 = vpop.f32.mrf.mxu0
      %4463 = vmatprep.mubr.bf16.mxu0 0
      %4464 = vmatmul.mubr.bf16.gmra.mxu0 %v4300
      %v4465 = vpop.f32.mrf.mxu0
      %v4466 = vpop.f32.mrf.mxu0
      %v4467 = vpop.f32.mrf.mxu0
      %v4468 = vpop.f32.mrf.mxu0
      %4469 = vmatprep.mubr.bf16.mxu0 0
      %4470 = vmatmul.mubr.bf16.gmra.mxu0 %v4302
      %v4471 = vpop.f32.mrf.mxu0
      %v4472 = vadd.f32 0.0, %v4471
      %v4473 = vpop.f32.mrf.mxu0
      %v4474 = vpop.f32.mrf.mxu0
      %v4475 = vadd.f32 0.0, %v4474
      %v4476 = vpop.f32.mrf.mxu0
      %4477 = vmatprep.mubr.bf16.mxu0 0
      %4478 = vmatmul.mubr.bf16.gmra.mxu0 %v4304
      %v4479 = vpop.f32.mrf.mxu0
      %v4480 = vpop.f32.mrf.mxu0
      %v4481 = vpop.f32.mrf.mxu0
      %v4482 = vpop.f32.mrf.mxu0
      %4483 = vmatprep.mubr.bf16.mxu0 0
      %4484 = vmatmul.mubr.bf16.gmra.mxu0 %v4306
      %v4485 = vpop.f32.mrf.mxu0
      %v4486 = vadd.f32 0.0, %v4485
      %v4487 = vpop.f32.mrf.mxu0
      %v4488 = vpop.f32.mrf.mxu0
      %v4489 = vadd.f32 0.0, %v4488
      %v4490 = vpop.f32.mrf.mxu0
      %4491 = vmatprep.mubr.bf16.mxu0 0
      %4492 = vmatmul.mubr.bf16.gmra.mxu0 %v4308
      %v4493 = vpop.f32.mrf.mxu0
      %v4494 = vpop.f32.mrf.mxu0
      %v4495 = vpop.f32.mrf.mxu0
      %v4496 = vpop.f32.mrf.mxu0
      %4497 = vmatprep.mubr.bf16.mxu0 0
      %4498 = vmatmul.mubr.bf16.gmra.mxu0 %v4310
      %v4499 = vpop.f32.mrf.mxu0
      %v4500 = vadd.f32 0.0, %v4499
      %v4501 = vpop.f32.mrf.mxu0
      %v4502 = vpop.f32.mrf.mxu0
      %v4503 = vadd.f32 0.0, %v4502
      %v4504 = vpop.f32.mrf.mxu0
      %4505 = vmatprep.mubr.bf16.mxu0 0
      %4506 = vmatmul.mubr.bf16.gmra.mxu0 %v4312
      %v4507 = vpop.f32.mrf.mxu0
      %v4508 = vpop.f32.mrf.mxu0
      %v4509 = vpop.f32.mrf.mxu0
      %v4510 = vpop.f32.mrf.mxu0
      %4511 = vmatprep.mubr.bf16.mxu0 0
      %4512 = vmatmul.mubr.bf16.gmra.mxu0 %v4314
      %v4513 = vpop.f32.mrf.mxu0
      %v4514 = vadd.f32 0.0, %v4513
      %v4515 = vpop.f32.mrf.mxu0
      %v4516 = vpop.f32.mrf.mxu0
      %v4517 = vadd.f32 0.0, %v4516
      %v4518 = vpop.f32.mrf.mxu0
      %4519 = vmatprep.mubr.bf16.mxu0 0
      %4520 = vmatmul.mubr.bf16.gmra.mxu0 %v4316
      %v4521 = vpop.f32.mrf.mxu0
      %v4522 = vpop.f32.mrf.mxu0
      %v4523 = vpop.f32.mrf.mxu0
      %v4524 = vpop.f32.mrf.mxu0
      %4525 = vdwg.mxu0
      %v4526 = vadd.f32 %v4247, %v4416
      %v4527 = vadd.f32 %v4248, %v4419
      %v4528 = vadd.f32 %v4249, %v4430
      %v4529 = vadd.f32 %v4250, %v4433
      %v4530 = vadd.f32 %v4251, %v4444
      %v4531 = vadd.f32 %v4252, %v4447
      %v4532 = vadd.f32 %v4253, %v4458
      %v4533 = vadd.f32 %v4254, %v4461
      %v4534 = vadd.f32 %v4255, %v4472
      %v4535 = vadd.f32 %v4256, %v4475
      %v4536 = vadd.f32 %v4257, %v4486
      %v4537 = vadd.f32 %v4258, %v4489
      %v4538 = vadd.f32 %v4259, %v4500
      %v4539 = vadd.f32 %v4260, %v4503
      %v4540 = vadd.f32 %v4261, %v4514
      %v4541 = vadd.f32 %v4262, %v4517
      %v4542 = vld [vmem:[%s5] sm:$0x1]
      %v4544 = vlaneseq
      %v4545 = vshrl.u32 %v4544, 7
      %v4546 = vsub.s32 0, %v4545
      %v4547 = vrot.slane %v4542, %v4546
      %v4549 = vmul.f32 %v4526, %v4547
      %v4550 = vmul.f32 %v4527, %v4547
      %v4551 = vmul.f32 %v4528, %v4547
      %v4552 = vmul.f32 %v4529, %v4547
      %v4553 = vmul.f32 %v4530, %v4547
      %v4554 = vmul.f32 %v4531, %v4547
      %v4555 = vmul.f32 %v4532, %v4547
      %v4556 = vmul.f32 %v4533, %v4547
      %v4557 = vmul.f32 %v4534, %v4547
      %v4558 = vmul.f32 %v4535, %v4547
      %v4559 = vmul.f32 %v4536, %v4547
      %v4560 = vmul.f32 %v4537, %v4547
      %v4561 = vmul.f32 %v4538, %v4547
      %v4562 = vmul.f32 %v4539, %v4547
      %v4563 = vmul.f32 %v4540, %v4547
      %v4564 = vmul.f32 %v4541, %v4547
      %v4565 = vld [vmem:[%s6] sm:$0x1]
      %v4567 = vlaneseq
      %v4568 = vshrl.u32 %v4567, 7
      %v4569 = vsub.s32 0, %v4568
      %v4570 = vrot.slane %v4565, %v4569
      %v4572 = vadd.f32 %v4549, %v4570
      %v4573 = vadd.f32 %v4550, %v4570
      %v4574 = vadd.f32 %v4551, %v4570
      %v4575 = vadd.f32 %v4552, %v4570
      %v4576 = vadd.f32 %v4553, %v4570
      %v4577 = vadd.f32 %v4554, %v4570
      %v4578 = vadd.f32 %v4555, %v4570
      %v4579 = vadd.f32 %v4556, %v4570
      %v4580 = vadd.f32 %v4557, %v4570
      %v4581 = vadd.f32 %v4558, %v4570
      %v4582 = vadd.f32 %v4559, %v4570
      %v4583 = vadd.f32 %v4560, %v4570
      %v4584 = vadd.f32 %v4561, %v4570
      %v4585 = vadd.f32 %v4562, %v4570
      %v4586 = vadd.f32 %v4563, %v4570
      %v4587 = vadd.f32 %v4564, %v4570
      %v4588 = vmax.f32 %v4572, 0.0
      %v4589 = vmax.f32 %v4573, 0.0
      %v4590 = vmax.f32 %v4574, 0.0
      %v4591 = vmax.f32 %v4575, 0.0
      %v4592 = vmax.f32 %v4576, 0.0
      %v4593 = vmax.f32 %v4577, 0.0
      %v4594 = vmax.f32 %v4578, 0.0
      %v4595 = vmax.f32 %v4579, 0.0
      %v4596 = vmax.f32 %v4580, 0.0
      %v4597 = vmax.f32 %v4581, 0.0
      %v4598 = vmax.f32 %v4582, 0.0
      %v4599 = vmax.f32 %v4583, 0.0
      %v4600 = vmax.f32 %v4584, 0.0
      %v4601 = vmax.f32 %v4585, 0.0
      %v4602 = vmax.f32 %v4586, 0.0
      %v4603 = vmax.f32 %v4587, 0.0
      %v4604 = vpack.c.bf16 %v4589, %v4588
      %v4605 = vpack.c.bf16 %v4591, %v4590
      %v4606 = vpack.c.bf16 %v4593, %v4592
      %v4607 = vpack.c.bf16 %v4595, %v4594
      %v4608 = vpack.c.bf16 %v4597, %v4596
      %v4609 = vpack.c.bf16 %v4599, %v4598
      %v4610 = vpack.c.bf16 %v4601, %v4600
      %v4611 = vpack.c.bf16 %v4603, %v4602
      %v4620 = vunpack.c.l.b16 %v4604
      %v4621 = vunpack.c.h.b16 %v4604
      %v4622 = vunpack.c.l.b16 %v4605
      %v4623 = vunpack.c.h.b16 %v4605
      %v4624 = vunpack.c.l.b16 %v4606
      %v4625 = vunpack.c.h.b16 %v4606
      %v4626 = vunpack.c.l.b16 %v4607
      %v4627 = vunpack.c.h.b16 %v4607
      %v4628 = vunpack.c.l.b16 %v4608
      %v4629 = vunpack.c.h.b16 %v4608
      %v4630 = vunpack.c.l.b16 %v4609
      %v4631 = vunpack.c.h.b16 %v4609
      %v4632 = vunpack.c.l.b16 %v4610
      %v4633 = vunpack.c.h.b16 %v4610
      %v4634 = vunpack.c.l.b16 %v4611
      %v4635 = vunpack.c.h.b16 %v4611
      %v4636 = vpack.c.b16 %v4620, %v4620
      %v4637 = vpack.c.b16 %v4621, %v4621
      %v4638 = vpack.c.b16 %v4622, %v4622
      %v4639 = vpack.c.b16 %v4623, %v4623
      %v4640 = vpack.c.b16 %v4624, %v4624
      %v4641 = vpack.c.b16 %v4625, %v4625
      %v4642 = vpack.c.b16 %v4626, %v4626
      %v4643 = vpack.c.b16 %v4627, %v4627
      %v4644 = vpack.c.b16 %v4628, %v4628
      %v4645 = vpack.c.b16 %v4629, %v4629
      %v4646 = vpack.c.b16 %v4630, %v4630
      %v4647 = vpack.c.b16 %v4631, %v4631
      %v4648 = vpack.c.b16 %v4632, %v4632
      %v4649 = vpack.c.b16 %v4633, %v4633
      %v4650 = vpack.c.b16 %v4634, %v4634
      %v4651 = vpack.c.b16 %v4635, %v4635
      %4668 = vst [vmem:[%s302] sm:$0xf] %v4636
      %4669 = vst [vmem:[%s302 + $0x4] sm:$0xf] %v4637
      %4670 = vst [vmem:[%s302 + $0x8] sm:$0xf] %v4638
      %4671 = vst [vmem:[%s302 + $0xc] sm:$0xf] %v4639
      %4672 = vst [vmem:[%s302 + $0x10] sm:$0xf] %v4640
      %4673 = vst [vmem:[%s302 + $0x14] sm:$0xf] %v4641
      %4674 = vst [vmem:[%s302 + $0x18] sm:$0xf] %v4642
      %4675 = vst [vmem:[%s302 + $0x1c] sm:$0xf] %v4643
      %4676 = vst [vmem:[%s302 + $0x20] sm:$0xf] %v4644
      %4677 = vst [vmem:[%s302 + $0x24] sm:$0xf] %v4645
      %4678 = vst [vmem:[%s302 + $0x28] sm:$0xf] %v4646
      %4679 = vst [vmem:[%s302 + $0x2c] sm:$0xf] %v4647
      %4680 = vst [vmem:[%s302 + $0x30] sm:$0xf] %v4648
      %4681 = vst [vmem:[%s302 + $0x34] sm:$0xf] %v4649
      %4682 = vst [vmem:[%s302 + $0x38] sm:$0xf] %v4650
      %4683 = vst [vmem:[%s302 + $0x3c] sm:$0xf] %v4651
      %s4684 = smul.u32 8, %s23
      %p4685 = scmp.lt.s32.totalorder %s22, 1
      %s4686 = scalar_select %p4685, %s22, 1
      %p4687 = scmp.lt.s32.totalorder %s4684, 15
      %s4688 = scalar_select %p4687, %s4684, 15
      %s4689 = smul.addr %s4688, 2
      %s4690 = smul.addr %s4686, 32
      %s4691 = sadd.s32 %s4689, %s4690
      %s4692 = smul.addr %s4691, 4
      %s4693 = scalar_lea.vmem %s7, %s4692
      // Predicated region
      $region49: #{inconv_forward.1} parent=47 // pred_check
        %p4694 = pneg %p202
      $region50: #{inconv_forward.1} parent=47 // pred_check_branch
        %4696 = sbr.rel (%p4694) target = $region52
      $region51: #{inconv_forward.1} parent=47 // pred_region
        %s4697 = smul.u32 8, %s23
      $region52: #{inconv_forward.1} parent=47 // pred_fallthru
        _
    $region48: #{inconv_forward.1} parent=5 // pred_fallthru
      _
    %p4698 = scmp.le.s32.totalorder 2, %s13
    // Predicated region
    $region53: #{inconv_forward.1} parent=5 // pred_check
      %p4699 = pneg %p4698
    $region54: #{inconv_forward.1} parent=5 // pred_check_branch
      %4701 = sbr.rel (%p4699) target = $region56
    $region55: #{inconv_forward.1} parent=5 // pred_region
      %s4702 = ssub.s32 %s13, 2
      // Predicated region
      $region57: #{inconv_forward.1} parent=55 // pred_check
        %p4703 = pneg %p208
      $region58: #{inconv_forward.1} parent=55 // pred_check_branch
        %4705 = sbr.rel (%p4703) target = $region60
      $region59: #{inconv_forward.1} parent=55 // pred_region
        %s4706 = smul.u32 8, %s25
        %p4707 = scmp.lt.s32.totalorder %s24, 1
        %s4708 = scalar_select %p4707, %s24, 1
        %p4709 = scmp.lt.s32.totalorder %s4706, 15
        %s4710 = scalar_select %p4709, %s4706, 15
        %s4711 = smul.addr %s4710, 2
        %s4712 = smul.addr %s4708, 32
        %s4713 = sadd.s32 %s4711, %s4712
        %s4714 = smul.addr %s4713, 4
        %s4715 = scalar_lea.vmem %s7, %s4714
      $region60: #{inconv_forward.1} parent=55 // pred_fallthru
        _
    $region56: #{inconv_forward.1} parent=5 // pred_fallthru
      _
  $region6: #{inconv_forward.1} parent=0 // loop_footer
    %s17 = sadd.s32 1, %s13
  $region7: #{inconv_forward.1} parent=0 // loop_footer_branch
    %12 = sbr.rel target = $region3
  $region8: #{inconv_forward.1} parent=0 // loop_exit
    _

</llo_original>
